<compile_context>
chip_gen: v7x
topology: tpu7x:2x2x1
jax: 0.10.0
libtpu: 0.0.40
codegen_flags: <defaults>
</compile_context>

<pallas_src>
import functools

import jax
import jax.numpy as jnp
from jax.experimental import pallas as pl
from jax.experimental.pallas import tpu as pltpu


# ----------------------------------------------------------------------------
# In-kernel GAT layer (values already resident in VMEM)
# ----------------------------------------------------------------------------
def _gat_layer(x, w, a_src_blkT, a_dst_blk, bias, adj_mask, *, heads, out_c, apply_relu):
    """Dense multi-head GAT (concat heads): out = softmax_j(leaky_relu(a_d.z_i + a_s.z_j)) @ z."""
    # One wide projection for all heads: (N, in_c) @ (in_c, H*out_c).
    z = jnp.dot(x, w, preferred_element_type=jnp.float32)                    # (N, H*out_c)

    # Attention logits for all heads in two MXU ops (block-diag attention matrices).
    a_dst = jnp.dot(z, a_dst_blk, preferred_element_type=jnp.float32)        # (N, H)
    a_srcT = jax.lax.dot_general(a_src_blkT, z, (((1,), (1,)), ((), ())),
                                 preferred_element_type=jnp.float32)         # (H, N)

    neg_inf = jnp.float32(-1e30)
    outs = []
    for h in range(heads):
        e = a_dst[:, h:h + 1] + a_srcT[h:h + 1, :]                            # (N, N)
        e = jnp.where(e >= 0.0, e, 0.2 * e)                                   # leaky_relu(0.2)
        e = jnp.where(adj_mask, e, neg_inf)                                   # single mask
        m = jnp.max(e, axis=-1, keepdims=True)
        p = jnp.exp(e - m)                                                    # masked entries -> 0
        denom = jnp.sum(p, axis=-1, keepdims=True)                            # > 0 via self-loops
        alpha = p * pl.reciprocal(denom, approx=True)                         # EUP vrcp
        outs.append(jnp.dot(alpha, z[:, h * out_c:(h + 1) * out_c],
                            preferred_element_type=jnp.float32))
    out = jnp.concatenate(outs, axis=-1) + bias                               # lane-dense (N, H*out_c)
    if apply_relu:
        out = jnp.maximum(out, 0.0)
    return out


# ----------------------------------------------------------------------------
# Fused forward kernel: gat1 -> lin1 -> gat2 -> lin5 -> classifier
# ----------------------------------------------------------------------------
def fused_forward_kernel(x_ref, adj_ref, sel_ref, attr_ref,
                         g1w_ref, g1s_ref, g1d_ref, g1b_ref,
                         l1w_ref, l1b_ref,
                         g2w_ref, g2s_ref, g2d_ref, g2b_ref,
                         l5w_ref, l5b_ref,
                         cw_ref, cb_ref,
                         out_ref, *, heads, hidden, n_edges):
    x = x_ref[...]
    adj_mask = adj_ref[...] > 0.0                                             # computed once, reused

    # MyGAT
    x = _gat_layer(x, g1w_ref[...], g1s_ref[...], g1d_ref[...], g1b_ref[...], adj_mask,
                   heads=heads, out_c=hidden, apply_relu=True)
    x = jnp.dot(x, l1w_ref[...], preferred_element_type=jnp.float32) + l1b_ref[...]
    # Dropout(p=0.1): eval-mode identity.
    x = _gat_layer(x, g2w_ref[...], g2s_ref[...], g2d_ref[...], g2b_ref[...], adj_mask,
                   heads=heads, out_c=hidden, apply_relu=True)
    x = jnp.dot(x, l5w_ref[...], preferred_element_type=jnp.float32) + l5b_ref[...]   # (N, edge_dim)

    # Classifier: both gathers in one one-hot matmul so x never leaves VMEM.
    feats = jnp.dot(sel_ref[...], x, preferred_element_type=jnp.float32)      # (2E, edge_dim)
    feat_u = feats[:n_edges, :]                                               # user rows
    feat_m = feats[n_edges:, :]                                               # movie rows
    cat = jnp.concatenate([feat_u, attr_ref[...]], axis=-1)                   # (E, 2*edge_dim)
    proj = jnp.dot(cat, cw_ref[...], preferred_element_type=jnp.float32) + cb_ref[...]
    s = jnp.sum(proj * feat_m, axis=-1, keepdims=True)                        # (E, 1)
    out_ref[...] = (0.5 * (jnp.tanh(0.5 * s) + 1.0)).astype(out_ref.dtype)    # sigmoid via EUP tanh


# ----------------------------------------------------------------------------
# Wrapper: single gridless pallas_call, whole arrays resident in VMEM
# ----------------------------------------------------------------------------
def _vmem_spec():
    return pl.BlockSpec(memory_space=pltpu.MemorySpace.VMEM)


def _block_att_dst(att, heads, out_c):
    """(H, out_c) -> (H*out_c, H) block-diag so z @ blk gives per-head dst logits."""
    eye = jnp.eye(heads, dtype=att.dtype)
    return (att[:, :, None] * eye[:, None, :]).reshape(heads * out_c, heads)


def _block_att_srcT(att, heads, out_c):
    """(H, out_c) -> (H, H*out_c) block-diag so dot_general(blk, z) gives (H, N) src logits."""
    eye = jnp.eye(heads, dtype=att.dtype)
    return (eye[:, :, None] * att[:, None, :]).reshape(heads, heads * out_c)


def fused_forward(x, adj, sel, attr,
                  g1w, g1sT, g1d, g1b, l1w, l1b,
                  g2w, g2sT, g2d, g2b, l5w, l5b,
                  clf_w, clf_b, *, heads, hidden):
    e = attr.shape[0]
    inputs = (x, adj, sel, attr,
              g1w, g1sT, g1d, g1b, l1w, l1b,
              g2w, g2sT, g2d, g2b, l5w, l5b,
              clf_w, clf_b)
    kern = functools.partial(fused_forward_kernel, heads=heads, hidden=hidden, n_edges=e)
    out = pl.pallas_call(
        kern,
        out_shape=jax.ShapeDtypeStruct((e, 1), jnp.float32),
        in_specs=[_vmem_spec() for _ in inputs],
        out_specs=_vmem_spec(),
    )(*inputs)
    return out[:, 0]


# ----------------------------------------------------------------------------
# Model: parameters + forward (gathers / mask build are plain-JAX glue)
# ----------------------------------------------------------------------------
def init_params(key, num_nodes, hidden, edge_dim):
    ks = jax.random.split(key, 12)
    s = 0.1
    H = edge_dim  # heads
    return {
        "emb":        s * jax.random.normal(ks[0], (num_nodes, hidden), jnp.float32),
        # GAT1: in=hidden, out=hidden, heads=H
        "gat1_w":     s * jax.random.normal(ks[1], (hidden, H * hidden), jnp.float32),
        "gat1_asrc":  s * jax.random.normal(ks[2], (H, hidden), jnp.float32),
        "gat1_adst":  s * jax.random.normal(ks[3], (H, hidden), jnp.float32),
        "gat1_b":     jnp.zeros((1, H * hidden), jnp.float32),
        # linear1: (H*hidden) -> hidden   (stored (in, out))
        "lin1_w":     s * jax.random.normal(ks[4], (H * hidden, hidden), jnp.float32),
        "lin1_b":     s * jax.random.normal(ks[5], (1, hidden), jnp.float32),
        # GAT2: in=hidden, out=hidden, heads=H
        "gat2_w":     s * jax.random.normal(ks[6], (hidden, H * hidden), jnp.float32),
        "gat2_asrc":  s * jax.random.normal(ks[7], (H, hidden), jnp.float32),
        "gat2_adst":  s * jax.random.normal(ks[8], (H, hidden), jnp.float32),
        "gat2_b":     jnp.zeros((1, H * hidden), jnp.float32),
        # linear5: (H*hidden) -> edge_dim
        "lin5_w":     s * jax.random.normal(ks[9], (H * hidden, edge_dim), jnp.float32),
        "lin5_b":     s * jax.random.normal(ks[10], (1, edge_dim), jnp.float32),
        # classifier edge_w: (2*edge_dim) -> edge_dim
        "clf_w":      s * jax.random.normal(ks[11], (2 * edge_dim, edge_dim), jnp.float32),
        "clf_b":      jnp.zeros((1, edge_dim), jnp.float32),
    }


def model_forward(params, node_ids, edge_index, edge_attr,
                  edge_label_index, edge_label_attr, *, hidden, edge_dim):
    del edge_attr  # GATConv built without edge_dim kwarg -> edge_attr unused in attention
    num_nodes = params["emb"].shape[0]
    H = edge_dim

    # Embedding lookup (glue gather).
    x = jnp.take(params["emb"], node_ids, axis=0)                       # (N, hidden)

    # Dense adjacency mask adj[dst, src] with self-loops (GATConv default).
    adj = jnp.zeros((num_nodes, num_nodes), jnp.float32)
    adj = adj.at[edge_index[1], edge_index[0]].set(1.0)
    adj = jnp.maximum(adj, jnp.eye(num_nodes, dtype=jnp.float32))

    # One-hot selection matrix for both classifier gathers, stacked: (2E, N).
    sel = jnp.concatenate(
        [jax.nn.one_hot(edge_label_index[0], num_nodes, dtype=jnp.float32),
         jax.nn.one_hot(edge_label_index[1], num_nodes, dtype=jnp.float32)], axis=0)

    # Block-diagonal attention matrices (head-batched logit matmuls inside the kernel).
    g1sT = _block_att_srcT(params["gat1_asrc"], H, hidden)
    g1d = _block_att_dst(params["gat1_adst"], H, hidden)
    g2sT = _block_att_srcT(params["gat2_asrc"], H, hidden)
    g2d = _block_att_dst(params["gat2_adst"], H, hidden)

    return fused_forward(
        x, adj, sel, edge_label_attr,
        params["gat1_w"], g1sT, g1d, params["gat1_b"],
        params["lin1_w"], params["lin1_b"],
        params["gat2_w"], g2sT, g2d, params["gat2_b"],
        params["lin5_w"], params["lin5_b"],
        params["clf_w"], params["clf_b"],
        heads=H, hidden=hidden)


# ----------------------------------------------------------------------------
if __name__ == "__main__":
    NUM_NODES = 16
    HIDDEN = 32
    EDGE_DIM = 8        # num_edge_features (== number of GAT heads here)
    NUM_EDGES = 48
    NUM_LABEL_EDGES = 8

    key = jax.random.PRNGKey(0)
    k_par, k_ei, k_ea, k_eli, k_ela = jax.random.split(key, 5)

    params = init_params(k_par, NUM_NODES, HIDDEN, EDGE_DIM)

    node_ids = jnp.arange(NUM_NODES, dtype=jnp.int32)                    # data.x
    edge_index = jax.random.randint(k_ei, (2, NUM_EDGES), 0, NUM_NODES, jnp.int32)
    edge_attr = 0.1 * jax.random.normal(k_ea, (NUM_EDGES, EDGE_DIM), jnp.float32)
    edge_label_index = jax.random.randint(k_eli, (2, NUM_LABEL_EDGES), 0, NUM_NODES, jnp.int32)
    edge_label_attr = 0.1 * jax.random.normal(k_ela, (NUM_LABEL_EDGES, EDGE_DIM), jnp.float32)

    fwd = jax.jit(functools.partial(model_forward, hidden=HIDDEN, edge_dim=EDGE_DIM))
    pred = fwd(params, node_ids, edge_index, edge_attr, edge_label_index, edge_label_attr)
    pred = jax.block_until_ready(pred)

    assert pred.shape == (NUM_LABEL_EDGES,)
    assert bool(jnp.all(jnp.isfinite(pred)))
    assert bool(jnp.all((pred > 0.0) & (pred < 1.0)))
    print("KERNEL_OK")
</pallas_src>

<mosaic_0001>
module attributes {stable_mosaic.version = 11 : i64} {
  func.func @fused_forward_kernel(%arg0: memref<16x32xf32, #tpu.memory_space<vmem>>, %arg1: memref<16x16xf32, #tpu.memory_space<vmem>>, %arg2: memref<16x16xf32, #tpu.memory_space<vmem>>, %arg3: memref<8x8xf32, #tpu.memory_space<vmem>>, %arg4: memref<32x256xf32, #tpu.memory_space<vmem>>, %arg5: memref<8x256xf32, #tpu.memory_space<vmem>>, %arg6: memref<256x8xf32, #tpu.memory_space<vmem>>, %arg7: memref<1x256xf32, #tpu.memory_space<vmem>>, %arg8: memref<256x32xf32, #tpu.memory_space<vmem>>, %arg9: memref<1x32xf32, #tpu.memory_space<vmem>>, %arg10: memref<32x256xf32, #tpu.memory_space<vmem>>, %arg11: memref<8x256xf32, #tpu.memory_space<vmem>>, %arg12: memref<256x8xf32, #tpu.memory_space<vmem>>, %arg13: memref<1x256xf32, #tpu.memory_space<vmem>>, %arg14: memref<256x8xf32, #tpu.memory_space<vmem>>, %arg15: memref<1x8xf32, #tpu.memory_space<vmem>>, %arg16: memref<16x8xf32, #tpu.memory_space<vmem>>, %arg17: memref<1x8xf32, #tpu.memory_space<vmem>>, %arg18: memref<8x1xf32, #tpu.memory_space<vmem>>) attributes {dimension_semantics = [], scalar_prefetch = 0 : i64, scratch_operands = 0 : i64, tpu.core_type = #tpu.core_type<tc>} {
    %c0 = arith.constant 0 : index
    %c0_0 = arith.constant 0 : index
    %0 = vector.load %arg0[%c0, %c0_0] : memref<16x32xf32, #tpu.memory_space<vmem>>, vector<16x32xf32>
    %c0_1 = arith.constant 0 : index
    %c0_2 = arith.constant 0 : index
    %1 = vector.load %arg1[%c0_1, %c0_2] : memref<16x16xf32, #tpu.memory_space<vmem>>, vector<16x16xf32>
    %cst = arith.constant 0.000000e+00 : f32
    %2 = vector.broadcast %cst : f32 to vector<16x16xf32>
    %3 = arith.cmpf ogt, %1, %2 : vector<16x16xf32>
    %c0_3 = arith.constant 0 : index
    %c0_4 = arith.constant 0 : index
    %4 = vector.load %arg4[%c0_3, %c0_4] : memref<32x256xf32, #tpu.memory_space<vmem>>, vector<32x256xf32>
    %c0_5 = arith.constant 0 : index
    %c0_6 = arith.constant 0 : index
    %5 = vector.load %arg5[%c0_5, %c0_6] : memref<8x256xf32, #tpu.memory_space<vmem>>, vector<8x256xf32>
    %c0_7 = arith.constant 0 : index
    %c0_8 = arith.constant 0 : index
    %6 = vector.load %arg6[%c0_7, %c0_8] : memref<256x8xf32, #tpu.memory_space<vmem>>, vector<256x8xf32>
    %c0_9 = arith.constant 0 : index
    %c0_10 = arith.constant 0 : index
    %7 = vector.load %arg7[%c0_9, %c0_10] : memref<1x256xf32, #tpu.memory_space<vmem>>, vector<1x256xf32>
    %cst_11 = arith.constant dense<0.000000e+00> : vector<16x256xf32>
    %8 = tpu.matmul %0, %4, %cst_11 {dimension_numbers = #tpu.dot_dimension_numbers<[1], [0], [0], [1], [0, 0, 1, 1], [], []>} : vector<16x32xf32>, vector<32x256xf32>, vector<16x256xf32> -> vector<16x256xf32>
    %cst_12 = arith.constant dense<0.000000e+00> : vector<16x8xf32>
    %9 = tpu.matmul %8, %6, %cst_12 {dimension_numbers = #tpu.dot_dimension_numbers<[1], [0], [0], [1], [0, 0, 1, 1], [], []>} : vector<16x256xf32>, vector<256x8xf32>, vector<16x8xf32> -> vector<16x8xf32>
    %cst_13 = arith.constant dense<0.000000e+00> : vector<8x16xf32>
    %10 = tpu.matmul %5, %8, %cst_13 {dimension_numbers = #tpu.dot_dimension_numbers<[1], [1], [0], [0], [0, 0, 1, 0], [], []>} : vector<8x256xf32>, vector<16x256xf32>, vector<8x16xf32> -> vector<8x16xf32>
    %11 = vector.extract_strided_slice %9 {offsets = [0, 0], sizes = [16, 1], strides = [1, 1]} : vector<16x8xf32> to vector<16x1xf32>
    %12 = vector.extract_strided_slice %10 {offsets = [0, 0], sizes = [1, 16], strides = [1, 1]} : vector<8x16xf32> to vector<1x16xf32>
    %13 = vector.broadcast %11 : vector<16x1xf32> to vector<16x16xf32>
    %14 = vector.broadcast %12 : vector<1x16xf32> to vector<16x16xf32>
    %15 = arith.addf %13, %14 : vector<16x16xf32>
    %cst_14 = arith.constant 0.000000e+00 : f32
    %16 = vector.broadcast %cst_14 : f32 to vector<16x16xf32>
    %17 = arith.cmpf oge, %15, %16 : vector<16x16xf32>
    %cst_15 = arith.constant 2.000000e-01 : f32
    %18 = vector.broadcast %cst_15 : f32 to vector<16x16xf32>
    %19 = arith.mulf %18, %15 : vector<16x16xf32>
    %20 = arith.select %17, %15, %19 : vector<16x16xi1>, vector<16x16xf32>
    %cst_16 = arith.constant -1.000000e+30 : f32
    %21 = vector.broadcast %cst_16 : f32 to vector<16x16xf32>
    %22 = arith.select %3, %20, %21 : vector<16x16xi1>, vector<16x16xf32>
    %cst_17 = arith.constant dense<0xFF800000> : vector<16xf32>
    %23 = vector.multi_reduction <maximumf>, %22, %cst_17 [1] : vector<16x16xf32> to vector<16xf32>
    %24 = vector.shape_cast %23 : vector<16xf32> to vector<16x1xf32>
    %25 = vector.broadcast %24 : vector<16x1xf32> to vector<16x16xf32>
    %26 = arith.subf %22, %25 : vector<16x16xf32>
    %27 = math.exp %26 : vector<16x16xf32>
    %cst_18 = arith.constant dense<0.000000e+00> : vector<16xf32>
    %28 = vector.multi_reduction <add>, %27, %cst_18 [1] : vector<16x16xf32> to vector<16xf32>
    %29 = vector.shape_cast %28 : vector<16xf32> to vector<16x1xf32>
    %30 = tpu.reciprocal %29 {approx = true} : vector<16x1xf32> -> vector<16x1xf32>
    %31 = vector.broadcast %30 : vector<16x1xf32> to vector<16x16xf32>
    %32 = arith.mulf %27, %31 : vector<16x16xf32>
    %33 = vector.extract_strided_slice %8 {offsets = [0, 0], sizes = [16, 32], strides = [1, 1]} : vector<16x256xf32> to vector<16x32xf32>
    %cst_19 = arith.constant dense<0.000000e+00> : vector<16x32xf32>
    %34 = tpu.matmul %32, %33, %cst_19 {dimension_numbers = #tpu.dot_dimension_numbers<[1], [0], [0], [1], [0, 0, 1, 1], [], []>} : vector<16x16xf32>, vector<16x32xf32>, vector<16x32xf32> -> vector<16x32xf32>
    %35 = vector.extract_strided_slice %9 {offsets = [0, 1], sizes = [16, 1], strides = [1, 1]} : vector<16x8xf32> to vector<16x1xf32>
    %36 = vector.extract_strided_slice %10 {offsets = [1, 0], sizes = [1, 16], strides = [1, 1]} : vector<8x16xf32> to vector<1x16xf32>
    %37 = vector.broadcast %35 : vector<16x1xf32> to vector<16x16xf32>
    %38 = vector.broadcast %36 : vector<1x16xf32> to vector<16x16xf32>
    %39 = arith.addf %37, %38 : vector<16x16xf32>
    %cst_20 = arith.constant 0.000000e+00 : f32
    %40 = vector.broadcast %cst_20 : f32 to vector<16x16xf32>
    %41 = arith.cmpf oge, %39, %40 : vector<16x16xf32>
    %cst_21 = arith.constant 2.000000e-01 : f32
    %42 = vector.broadcast %cst_21 : f32 to vector<16x16xf32>
    %43 = arith.mulf %42, %39 : vector<16x16xf32>
    %44 = arith.select %41, %39, %43 : vector<16x16xi1>, vector<16x16xf32>
    %cst_22 = arith.constant -1.000000e+30 : f32
    %45 = vector.broadcast %cst_22 : f32 to vector<16x16xf32>
    %46 = arith.select %3, %44, %45 : vector<16x16xi1>, vector<16x16xf32>
    %cst_23 = arith.constant dense<0xFF800000> : vector<16xf32>
    %47 = vector.multi_reduction <maximumf>, %46, %cst_23 [1] : vector<16x16xf32> to vector<16xf32>
    %48 = vector.shape_cast %47 : vector<16xf32> to vector<16x1xf32>
    %49 = vector.broadcast %48 : vector<16x1xf32> to vector<16x16xf32>
    %50 = arith.subf %46, %49 : vector<16x16xf32>
    %51 = math.exp %50 : vector<16x16xf32>
    %cst_24 = arith.constant dense<0.000000e+00> : vector<16xf32>
    %52 = vector.multi_reduction <add>, %51, %cst_24 [1] : vector<16x16xf32> to vector<16xf32>
    %53 = vector.shape_cast %52 : vector<16xf32> to vector<16x1xf32>
    %54 = tpu.reciprocal %53 {approx = true} : vector<16x1xf32> -> vector<16x1xf32>
    %55 = vector.broadcast %54 : vector<16x1xf32> to vector<16x16xf32>
    %56 = arith.mulf %51, %55 : vector<16x16xf32>
    %57 = vector.extract_strided_slice %8 {offsets = [0, 32], sizes = [16, 32], strides = [1, 1]} : vector<16x256xf32> to vector<16x32xf32>
    %cst_25 = arith.constant dense<0.000000e+00> : vector<16x32xf32>
    %58 = tpu.matmul %56, %57, %cst_25 {dimension_numbers = #tpu.dot_dimension_numbers<[1], [0], [0], [1], [0, 0, 1, 1], [], []>} : vector<16x16xf32>, vector<16x32xf32>, vector<16x32xf32> -> vector<16x32xf32>
    %59 = vector.extract_strided_slice %9 {offsets = [0, 2], sizes = [16, 1], strides = [1, 1]} : vector<16x8xf32> to vector<16x1xf32>
    %60 = vector.extract_strided_slice %10 {offsets = [2, 0], sizes = [1, 16], strides = [1, 1]} : vector<8x16xf32> to vector<1x16xf32>
    %61 = vector.broadcast %59 : vector<16x1xf32> to vector<16x16xf32>
    %62 = vector.broadcast %60 : vector<1x16xf32> to vector<16x16xf32>
    %63 = arith.addf %61, %62 : vector<16x16xf32>
    %cst_26 = arith.constant 0.000000e+00 : f32
    %64 = vector.broadcast %cst_26 : f32 to vector<16x16xf32>
    %65 = arith.cmpf oge, %63, %64 : vector<16x16xf32>
    %cst_27 = arith.constant 2.000000e-01 : f32
    %66 = vector.broadcast %cst_27 : f32 to vector<16x16xf32>
    %67 = arith.mulf %66, %63 : vector<16x16xf32>
    %68 = arith.select %65, %63, %67 : vector<16x16xi1>, vector<16x16xf32>
    %cst_28 = arith.constant -1.000000e+30 : f32
    %69 = vector.broadcast %cst_28 : f32 to vector<16x16xf32>
    %70 = arith.select %3, %68, %69 : vector<16x16xi1>, vector<16x16xf32>
    %cst_29 = arith.constant dense<0xFF800000> : vector<16xf32>
    %71 = vector.multi_reduction <maximumf>, %70, %cst_29 [1] : vector<16x16xf32> to vector<16xf32>
    %72 = vector.shape_cast %71 : vector<16xf32> to vector<16x1xf32>
    %73 = vector.broadcast %72 : vector<16x1xf32> to vector<16x16xf32>
    %74 = arith.subf %70, %73 : vector<16x16xf32>
    %75 = math.exp %74 : vector<16x16xf32>
    %cst_30 = arith.constant dense<0.000000e+00> : vector<16xf32>
    %76 = vector.multi_reduction <add>, %75, %cst_30 [1] : vector<16x16xf32> to vector<16xf32>
    %77 = vector.shape_cast %76 : vector<16xf32> to vector<16x1xf32>
    %78 = tpu.reciprocal %77 {approx = true} : vector<16x1xf32> -> vector<16x1xf32>
    %79 = vector.broadcast %78 : vector<16x1xf32> to vector<16x16xf32>
    %80 = arith.mulf %75, %79 : vector<16x16xf32>
    %81 = vector.extract_strided_slice %8 {offsets = [0, 64], sizes = [16, 32], strides = [1, 1]} : vector<16x256xf32> to vector<16x32xf32>
    %cst_31 = arith.constant dense<0.000000e+00> : vector<16x32xf32>
    %82 = tpu.matmul %80, %81, %cst_31 {dimension_numbers = #tpu.dot_dimension_numbers<[1], [0], [0], [1], [0, 0, 1, 1], [], []>} : vector<16x16xf32>, vector<16x32xf32>, vector<16x32xf32> -> vector<16x32xf32>
    %83 = vector.extract_strided_slice %9 {offsets = [0, 3], sizes = [16, 1], strides = [1, 1]} : vector<16x8xf32> to vector<16x1xf32>
    %84 = vector.extract_strided_slice %10 {offsets = [3, 0], sizes = [1, 16], strides = [1, 1]} : vector<8x16xf32> to vector<1x16xf32>
    %85 = vector.broadcast %83 : vector<16x1xf32> to vector<16x16xf32>
    %86 = vector.broadcast %84 : vector<1x16xf32> to vector<16x16xf32>
    %87 = arith.addf %85, %86 : vector<16x16xf32>
    %cst_32 = arith.constant 0.000000e+00 : f32
    %88 = vector.broadcast %cst_32 : f32 to vector<16x16xf32>
    %89 = arith.cmpf oge, %87, %88 : vector<16x16xf32>
    %cst_33 = arith.constant 2.000000e-01 : f32
    %90 = vector.broadcast %cst_33 : f32 to vector<16x16xf32>
    %91 = arith.mulf %90, %87 : vector<16x16xf32>
    %92 = arith.select %89, %87, %91 : vector<16x16xi1>, vector<16x16xf32>
    %cst_34 = arith.constant -1.000000e+30 : f32
    %93 = vector.broadcast %cst_34 : f32 to vector<16x16xf32>
    %94 = arith.select %3, %92, %93 : vector<16x16xi1>, vector<16x16xf32>
    %cst_35 = arith.constant dense<0xFF800000> : vector<16xf32>
    %95 = vector.multi_reduction <maximumf>, %94, %cst_35 [1] : vector<16x16xf32> to vector<16xf32>
    %96 = vector.shape_cast %95 : vector<16xf32> to vector<16x1xf32>
    %97 = vector.broadcast %96 : vector<16x1xf32> to vector<16x16xf32>
    %98 = arith.subf %94, %97 : vector<16x16xf32>
    %99 = math.exp %98 : vector<16x16xf32>
    %cst_36 = arith.constant dense<0.000000e+00> : vector<16xf32>
    %100 = vector.multi_reduction <add>, %99, %cst_36 [1] : vector<16x16xf32> to vector<16xf32>
    %101 = vector.shape_cast %100 : vector<16xf32> to vector<16x1xf32>
    %102 = tpu.reciprocal %101 {approx = true} : vector<16x1xf32> -> vector<16x1xf32>
    %103 = vector.broadcast %102 : vector<16x1xf32> to vector<16x16xf32>
    %104 = arith.mulf %99, %103 : vector<16x16xf32>
    %105 = vector.extract_strided_slice %8 {offsets = [0, 96], sizes = [16, 32], strides = [1, 1]} : vector<16x256xf32> to vector<16x32xf32>
    %cst_37 = arith.constant dense<0.000000e+00> : vector<16x32xf32>
    %106 = tpu.matmul %104, %105, %cst_37 {dimension_numbers = #tpu.dot_dimension_numbers<[1], [0], [0], [1], [0, 0, 1, 1], [], []>} : vector<16x16xf32>, vector<16x32xf32>, vector<16x32xf32> -> vector<16x32xf32>
    %107 = vector.extract_strided_slice %9 {offsets = [0, 4], sizes = [16, 1], strides = [1, 1]} : vector<16x8xf32> to vector<16x1xf32>
    %108 = vector.extract_strided_slice %10 {offsets = [4, 0], sizes = [1, 16], strides = [1, 1]} : vector<8x16xf32> to vector<1x16xf32>
    %109 = vector.broadcast %107 : vector<16x1xf32> to vector<16x16xf32>
    %110 = vector.broadcast %108 : vector<1x16xf32> to vector<16x16xf32>
    %111 = arith.addf %109, %110 : vector<16x16xf32>
    %cst_38 = arith.constant 0.000000e+00 : f32
    %112 = vector.broadcast %cst_38 : f32 to vector<16x16xf32>
    %113 = arith.cmpf oge, %111, %112 : vector<16x16xf32>
    %cst_39 = arith.constant 2.000000e-01 : f32
    %114 = vector.broadcast %cst_39 : f32 to vector<16x16xf32>
    %115 = arith.mulf %114, %111 : vector<16x16xf32>
    %116 = arith.select %113, %111, %115 : vector<16x16xi1>, vector<16x16xf32>
    %cst_40 = arith.constant -1.000000e+30 : f32
    %117 = vector.broadcast %cst_40 : f32 to vector<16x16xf32>
    %118 = arith.select %3, %116, %117 : vector<16x16xi1>, vector<16x16xf32>
    %cst_41 = arith.constant dense<0xFF800000> : vector<16xf32>
    %119 = vector.multi_reduction <maximumf>, %118, %cst_41 [1] : vector<16x16xf32> to vector<16xf32>
    %120 = vector.shape_cast %119 : vector<16xf32> to vector<16x1xf32>
    %121 = vector.broadcast %120 : vector<16x1xf32> to vector<16x16xf32>
    %122 = arith.subf %118, %121 : vector<16x16xf32>
    %123 = math.exp %122 : vector<16x16xf32>
    %cst_42 = arith.constant dense<0.000000e+00> : vector<16xf32>
    %124 = vector.multi_reduction <add>, %123, %cst_42 [1] : vector<16x16xf32> to vector<16xf32>
    %125 = vector.shape_cast %124 : vector<16xf32> to vector<16x1xf32>
    %126 = tpu.reciprocal %125 {approx = true} : vector<16x1xf32> -> vector<16x1xf32>
    %127 = vector.broadcast %126 : vector<16x1xf32> to vector<16x16xf32>
    %128 = arith.mulf %123, %127 : vector<16x16xf32>
    %129 = vector.extract_strided_slice %8 {offsets = [0, 128], sizes = [16, 32], strides = [1, 1]} : vector<16x256xf32> to vector<16x32xf32>
    %cst_43 = arith.constant dense<0.000000e+00> : vector<16x32xf32>
    %130 = tpu.matmul %128, %129, %cst_43 {dimension_numbers = #tpu.dot_dimension_numbers<[1], [0], [0], [1], [0, 0, 1, 1], [], []>} : vector<16x16xf32>, vector<16x32xf32>, vector<16x32xf32> -> vector<16x32xf32>
    %131 = vector.extract_strided_slice %9 {offsets = [0, 5], sizes = [16, 1], strides = [1, 1]} : vector<16x8xf32> to vector<16x1xf32>
    %132 = vector.extract_strided_slice %10 {offsets = [5, 0], sizes = [1, 16], strides = [1, 1]} : vector<8x16xf32> to vector<1x16xf32>
    %133 = vector.broadcast %131 : vector<16x1xf32> to vector<16x16xf32>
    %134 = vector.broadcast %132 : vector<1x16xf32> to vector<16x16xf32>
    %135 = arith.addf %133, %134 : vector<16x16xf32>
    %cst_44 = arith.constant 0.000000e+00 : f32
    %136 = vector.broadcast %cst_44 : f32 to vector<16x16xf32>
    %137 = arith.cmpf oge, %135, %136 : vector<16x16xf32>
    %cst_45 = arith.constant 2.000000e-01 : f32
    %138 = vector.broadcast %cst_45 : f32 to vector<16x16xf32>
    %139 = arith.mulf %138, %135 : vector<16x16xf32>
    %140 = arith.select %137, %135, %139 : vector<16x16xi1>, vector<16x16xf32>
    %cst_46 = arith.constant -1.000000e+30 : f32
    %141 = vector.broadcast %cst_46 : f32 to vector<16x16xf32>
    %142 = arith.select %3, %140, %141 : vector<16x16xi1>, vector<16x16xf32>
    %cst_47 = arith.constant dense<0xFF800000> : vector<16xf32>
    %143 = vector.multi_reduction <maximumf>, %142, %cst_47 [1] : vector<16x16xf32> to vector<16xf32>
    %144 = vector.shape_cast %143 : vector<16xf32> to vector<16x1xf32>
    %145 = vector.broadcast %144 : vector<16x1xf32> to vector<16x16xf32>
    %146 = arith.subf %142, %145 : vector<16x16xf32>
    %147 = math.exp %146 : vector<16x16xf32>
    %cst_48 = arith.constant dense<0.000000e+00> : vector<16xf32>
    %148 = vector.multi_reduction <add>, %147, %cst_48 [1] : vector<16x16xf32> to vector<16xf32>
    %149 = vector.shape_cast %148 : vector<16xf32> to vector<16x1xf32>
    %150 = tpu.reciprocal %149 {approx = true} : vector<16x1xf32> -> vector<16x1xf32>
    %151 = vector.broadcast %150 : vector<16x1xf32> to vector<16x16xf32>
    %152 = arith.mulf %147, %151 : vector<16x16xf32>
    %153 = vector.extract_strided_slice %8 {offsets = [0, 160], sizes = [16, 32], strides = [1, 1]} : vector<16x256xf32> to vector<16x32xf32>
    %cst_49 = arith.constant dense<0.000000e+00> : vector<16x32xf32>
    %154 = tpu.matmul %152, %153, %cst_49 {dimension_numbers = #tpu.dot_dimension_numbers<[1], [0], [0], [1], [0, 0, 1, 1], [], []>} : vector<16x16xf32>, vector<16x32xf32>, vector<16x32xf32> -> vector<16x32xf32>
    %155 = vector.extract_strided_slice %9 {offsets = [0, 6], sizes = [16, 1], strides = [1, 1]} : vector<16x8xf32> to vector<16x1xf32>
    %156 = vector.extract_strided_slice %10 {offsets = [6, 0], sizes = [1, 16], strides = [1, 1]} : vector<8x16xf32> to vector<1x16xf32>
    %157 = vector.broadcast %155 : vector<16x1xf32> to vector<16x16xf32>
    %158 = vector.broadcast %156 : vector<1x16xf32> to vector<16x16xf32>
    %159 = arith.addf %157, %158 : vector<16x16xf32>
    %cst_50 = arith.constant 0.000000e+00 : f32
    %160 = vector.broadcast %cst_50 : f32 to vector<16x16xf32>
    %161 = arith.cmpf oge, %159, %160 : vector<16x16xf32>
    %cst_51 = arith.constant 2.000000e-01 : f32
    %162 = vector.broadcast %cst_51 : f32 to vector<16x16xf32>
    %163 = arith.mulf %162, %159 : vector<16x16xf32>
    %164 = arith.select %161, %159, %163 : vector<16x16xi1>, vector<16x16xf32>
    %cst_52 = arith.constant -1.000000e+30 : f32
    %165 = vector.broadcast %cst_52 : f32 to vector<16x16xf32>
    %166 = arith.select %3, %164, %165 : vector<16x16xi1>, vector<16x16xf32>
    %cst_53 = arith.constant dense<0xFF800000> : vector<16xf32>
    %167 = vector.multi_reduction <maximumf>, %166, %cst_53 [1] : vector<16x16xf32> to vector<16xf32>
    %168 = vector.shape_cast %167 : vector<16xf32> to vector<16x1xf32>
    %169 = vector.broadcast %168 : vector<16x1xf32> to vector<16x16xf32>
    %170 = arith.subf %166, %169 : vector<16x16xf32>
    %171 = math.exp %170 : vector<16x16xf32>
    %cst_54 = arith.constant dense<0.000000e+00> : vector<16xf32>
    %172 = vector.multi_reduction <add>, %171, %cst_54 [1] : vector<16x16xf32> to vector<16xf32>
    %173 = vector.shape_cast %172 : vector<16xf32> to vector<16x1xf32>
    %174 = tpu.reciprocal %173 {approx = true} : vector<16x1xf32> -> vector<16x1xf32>
    %175 = vector.broadcast %174 : vector<16x1xf32> to vector<16x16xf32>
    %176 = arith.mulf %171, %175 : vector<16x16xf32>
    %177 = vector.extract_strided_slice %8 {offsets = [0, 192], sizes = [16, 32], strides = [1, 1]} : vector<16x256xf32> to vector<16x32xf32>
    %cst_55 = arith.constant dense<0.000000e+00> : vector<16x32xf32>
    %178 = tpu.matmul %176, %177, %cst_55 {dimension_numbers = #tpu.dot_dimension_numbers<[1], [0], [0], [1], [0, 0, 1, 1], [], []>} : vector<16x16xf32>, vector<16x32xf32>, vector<16x32xf32> -> vector<16x32xf32>
    %179 = vector.extract_strided_slice %9 {offsets = [0, 7], sizes = [16, 1], strides = [1, 1]} : vector<16x8xf32> to vector<16x1xf32>
    %180 = vector.extract_strided_slice %10 {offsets = [7, 0], sizes = [1, 16], strides = [1, 1]} : vector<8x16xf32> to vector<1x16xf32>
    %181 = vector.broadcast %179 : vector<16x1xf32> to vector<16x16xf32>
    %182 = vector.broadcast %180 : vector<1x16xf32> to vector<16x16xf32>
    %183 = arith.addf %181, %182 : vector<16x16xf32>
    %cst_56 = arith.constant 0.000000e+00 : f32
    %184 = vector.broadcast %cst_56 : f32 to vector<16x16xf32>
    %185 = arith.cmpf oge, %183, %184 : vector<16x16xf32>
    %cst_57 = arith.constant 2.000000e-01 : f32
    %186 = vector.broadcast %cst_57 : f32 to vector<16x16xf32>
    %187 = arith.mulf %186, %183 : vector<16x16xf32>
    %188 = arith.select %185, %183, %187 : vector<16x16xi1>, vector<16x16xf32>
    %cst_58 = arith.constant -1.000000e+30 : f32
    %189 = vector.broadcast %cst_58 : f32 to vector<16x16xf32>
    %190 = arith.select %3, %188, %189 : vector<16x16xi1>, vector<16x16xf32>
    %cst_59 = arith.constant dense<0xFF800000> : vector<16xf32>
    %191 = vector.multi_reduction <maximumf>, %190, %cst_59 [1] : vector<16x16xf32> to vector<16xf32>
    %192 = vector.shape_cast %191 : vector<16xf32> to vector<16x1xf32>
    %193 = vector.broadcast %192 : vector<16x1xf32> to vector<16x16xf32>
    %194 = arith.subf %190, %193 : vector<16x16xf32>
    %195 = math.exp %194 : vector<16x16xf32>
    %cst_60 = arith.constant dense<0.000000e+00> : vector<16xf32>
    %196 = vector.multi_reduction <add>, %195, %cst_60 [1] : vector<16x16xf32> to vector<16xf32>
    %197 = vector.shape_cast %196 : vector<16xf32> to vector<16x1xf32>
    %198 = tpu.reciprocal %197 {approx = true} : vector<16x1xf32> -> vector<16x1xf32>
    %199 = vector.broadcast %198 : vector<16x1xf32> to vector<16x16xf32>
    %200 = arith.mulf %195, %199 : vector<16x16xf32>
    %201 = vector.extract_strided_slice %8 {offsets = [0, 224], sizes = [16, 32], strides = [1, 1]} : vector<16x256xf32> to vector<16x32xf32>
    %cst_61 = arith.constant dense<0.000000e+00> : vector<16x32xf32>
    %202 = tpu.matmul %200, %201, %cst_61 {dimension_numbers = #tpu.dot_dimension_numbers<[1], [0], [0], [1], [0, 0, 1, 1], [], []>} : vector<16x16xf32>, vector<16x32xf32>, vector<16x32xf32> -> vector<16x32xf32>
    %203 = tpu.concatenate %34, %58, %82, %106, %130, %154, %178, %202 in 1 : vector<16x32xf32>, vector<16x32xf32>, vector<16x32xf32>, vector<16x32xf32>, vector<16x32xf32>, vector<16x32xf32>, vector<16x32xf32>, vector<16x32xf32> -> vector<16x256xf32>
    %204 = vector.broadcast %7 : vector<1x256xf32> to vector<16x256xf32>
    %205 = arith.addf %203, %204 : vector<16x256xf32>
    %cst_62 = arith.constant 0.000000e+00 : f32
    %206 = vector.broadcast %cst_62 : f32 to vector<16x256xf32>
    %207 = arith.maximumf %205, %206 : vector<16x256xf32>
    %c0_63 = arith.constant 0 : index
    %c0_64 = arith.constant 0 : index
    %208 = vector.load %arg8[%c0_63, %c0_64] : memref<256x32xf32, #tpu.memory_space<vmem>>, vector<256x32xf32>
    %cst_65 = arith.constant dense<0.000000e+00> : vector<16x32xf32>
    %209 = tpu.matmul %207, %208, %cst_65 {dimension_numbers = #tpu.dot_dimension_numbers<[1], [0], [0], [1], [0, 0, 1, 1], [], []>} : vector<16x256xf32>, vector<256x32xf32>, vector<16x32xf32> -> vector<16x32xf32>
    %c0_66 = arith.constant 0 : index
    %c0_67 = arith.constant 0 : index
    %210 = vector.load %arg9[%c0_66, %c0_67] : memref<1x32xf32, #tpu.memory_space<vmem>>, vector<1x32xf32>
    %211 = vector.broadcast %210 : vector<1x32xf32> to vector<16x32xf32>
    %212 = arith.addf %209, %211 : vector<16x32xf32>
    %c0_68 = arith.constant 0 : index
    %c0_69 = arith.constant 0 : index
    %213 = vector.load %arg10[%c0_68, %c0_69] : memref<32x256xf32, #tpu.memory_space<vmem>>, vector<32x256xf32>
    %c0_70 = arith.constant 0 : index
    %c0_71 = arith.constant 0 : index
    %214 = vector.load %arg11[%c0_70, %c0_71] : memref<8x256xf32, #tpu.memory_space<vmem>>, vector<8x256xf32>
    %c0_72 = arith.constant 0 : index
    %c0_73 = arith.constant 0 : index
    %215 = vector.load %arg12[%c0_72, %c0_73] : memref<256x8xf32, #tpu.memory_space<vmem>>, vector<256x8xf32>
    %c0_74 = arith.constant 0 : index
    %c0_75 = arith.constant 0 : index
    %216 = vector.load %arg13[%c0_74, %c0_75] : memref<1x256xf32, #tpu.memory_space<vmem>>, vector<1x256xf32>
    %cst_76 = arith.constant dense<0.000000e+00> : vector<16x256xf32>
    %217 = tpu.matmul %212, %213, %cst_76 {dimension_numbers = #tpu.dot_dimension_numbers<[1], [0], [0], [1], [0, 0, 1, 1], [], []>} : vector<16x32xf32>, vector<32x256xf32>, vector<16x256xf32> -> vector<16x256xf32>
    %cst_77 = arith.constant dense<0.000000e+00> : vector<16x8xf32>
    %218 = tpu.matmul %217, %215, %cst_77 {dimension_numbers = #tpu.dot_dimension_numbers<[1], [0], [0], [1], [0, 0, 1, 1], [], []>} : vector<16x256xf32>, vector<256x8xf32>, vector<16x8xf32> -> vector<16x8xf32>
    %cst_78 = arith.constant dense<0.000000e+00> : vector<8x16xf32>
    %219 = tpu.matmul %214, %217, %cst_78 {dimension_numbers = #tpu.dot_dimension_numbers<[1], [1], [0], [0], [0, 0, 1, 0], [], []>} : vector<8x256xf32>, vector<16x256xf32>, vector<8x16xf32> -> vector<8x16xf32>
    %220 = vector.extract_strided_slice %218 {offsets = [0, 0], sizes = [16, 1], strides = [1, 1]} : vector<16x8xf32> to vector<16x1xf32>
    %221 = vector.extract_strided_slice %219 {offsets = [0, 0], sizes = [1, 16], strides = [1, 1]} : vector<8x16xf32> to vector<1x16xf32>
    %222 = vector.broadcast %220 : vector<16x1xf32> to vector<16x16xf32>
    %223 = vector.broadcast %221 : vector<1x16xf32> to vector<16x16xf32>
    %224 = arith.addf %222, %223 : vector<16x16xf32>
    %cst_79 = arith.constant 0.000000e+00 : f32
    %225 = vector.broadcast %cst_79 : f32 to vector<16x16xf32>
    %226 = arith.cmpf oge, %224, %225 : vector<16x16xf32>
    %cst_80 = arith.constant 2.000000e-01 : f32
    %227 = vector.broadcast %cst_80 : f32 to vector<16x16xf32>
    %228 = arith.mulf %227, %224 : vector<16x16xf32>
    %229 = arith.select %226, %224, %228 : vector<16x16xi1>, vector<16x16xf32>
    %cst_81 = arith.constant -1.000000e+30 : f32
    %230 = vector.broadcast %cst_81 : f32 to vector<16x16xf32>
    %231 = arith.select %3, %229, %230 : vector<16x16xi1>, vector<16x16xf32>
    %cst_82 = arith.constant dense<0xFF800000> : vector<16xf32>
    %232 = vector.multi_reduction <maximumf>, %231, %cst_82 [1] : vector<16x16xf32> to vector<16xf32>
    %233 = vector.shape_cast %232 : vector<16xf32> to vector<16x1xf32>
    %234 = vector.broadcast %233 : vector<16x1xf32> to vector<16x16xf32>
    %235 = arith.subf %231, %234 : vector<16x16xf32>
    %236 = math.exp %235 : vector<16x16xf32>
    %cst_83 = arith.constant dense<0.000000e+00> : vector<16xf32>
    %237 = vector.multi_reduction <add>, %236, %cst_83 [1] : vector<16x16xf32> to vector<16xf32>
    %238 = vector.shape_cast %237 : vector<16xf32> to vector<16x1xf32>
    %239 = tpu.reciprocal %238 {approx = true} : vector<16x1xf32> -> vector<16x1xf32>
    %240 = vector.broadcast %239 : vector<16x1xf32> to vector<16x16xf32>
    %241 = arith.mulf %236, %240 : vector<16x16xf32>
    %242 = vector.extract_strided_slice %217 {offsets = [0, 0], sizes = [16, 32], strides = [1, 1]} : vector<16x256xf32> to vector<16x32xf32>
    %cst_84 = arith.constant dense<0.000000e+00> : vector<16x32xf32>
    %243 = tpu.matmul %241, %242, %cst_84 {dimension_numbers = #tpu.dot_dimension_numbers<[1], [0], [0], [1], [0, 0, 1, 1], [], []>} : vector<16x16xf32>, vector<16x32xf32>, vector<16x32xf32> -> vector<16x32xf32>
    %244 = vector.extract_strided_slice %218 {offsets = [0, 1], sizes = [16, 1], strides = [1, 1]} : vector<16x8xf32> to vector<16x1xf32>
    %245 = vector.extract_strided_slice %219 {offsets = [1, 0], sizes = [1, 16], strides = [1, 1]} : vector<8x16xf32> to vector<1x16xf32>
    %246 = vector.broadcast %244 : vector<16x1xf32> to vector<16x16xf32>
    %247 = vector.broadcast %245 : vector<1x16xf32> to vector<16x16xf32>
    %248 = arith.addf %246, %247 : vector<16x16xf32>
    %cst_85 = arith.constant 0.000000e+00 : f32
    %249 = vector.broadcast %cst_85 : f32 to vector<16x16xf32>
    %250 = arith.cmpf oge, %248, %249 : vector<16x16xf32>
    %cst_86 = arith.constant 2.000000e-01 : f32
    %251 = vector.broadcast %cst_86 : f32 to vector<16x16xf32>
    %252 = arith.mulf %251, %248 : vector<16x16xf32>
    %253 = arith.select %250, %248, %252 : vector<16x16xi1>, vector<16x16xf32>
    %cst_87 = arith.constant -1.000000e+30 : f32
    %254 = vector.broadcast %cst_87 : f32 to vector<16x16xf32>
    %255 = arith.select %3, %253, %254 : vector<16x16xi1>, vector<16x16xf32>
    %cst_88 = arith.constant dense<0xFF800000> : vector<16xf32>
    %256 = vector.multi_reduction <maximumf>, %255, %cst_88 [1] : vector<16x16xf32> to vector<16xf32>
    %257 = vector.shape_cast %256 : vector<16xf32> to vector<16x1xf32>
    %258 = vector.broadcast %257 : vector<16x1xf32> to vector<16x16xf32>
    %259 = arith.subf %255, %258 : vector<16x16xf32>
    %260 = math.exp %259 : vector<16x16xf32>
    %cst_89 = arith.constant dense<0.000000e+00> : vector<16xf32>
    %261 = vector.multi_reduction <add>, %260, %cst_89 [1] : vector<16x16xf32> to vector<16xf32>
    %262 = vector.shape_cast %261 : vector<16xf32> to vector<16x1xf32>
    %263 = tpu.reciprocal %262 {approx = true} : vector<16x1xf32> -> vector<16x1xf32>
    %264 = vector.broadcast %263 : vector<16x1xf32> to vector<16x16xf32>
    %265 = arith.mulf %260, %264 : vector<16x16xf32>
    %266 = vector.extract_strided_slice %217 {offsets = [0, 32], sizes = [16, 32], strides = [1, 1]} : vector<16x256xf32> to vector<16x32xf32>
    %cst_90 = arith.constant dense<0.000000e+00> : vector<16x32xf32>
    %267 = tpu.matmul %265, %266, %cst_90 {dimension_numbers = #tpu.dot_dimension_numbers<[1], [0], [0], [1], [0, 0, 1, 1], [], []>} : vector<16x16xf32>, vector<16x32xf32>, vector<16x32xf32> -> vector<16x32xf32>
    %268 = vector.extract_strided_slice %218 {offsets = [0, 2], sizes = [16, 1], strides = [1, 1]} : vector<16x8xf32> to vector<16x1xf32>
    %269 = vector.extract_strided_slice %219 {offsets = [2, 0], sizes = [1, 16], strides = [1, 1]} : vector<8x16xf32> to vector<1x16xf32>
    %270 = vector.broadcast %268 : vector<16x1xf32> to vector<16x16xf32>
    %271 = vector.broadcast %269 : vector<1x16xf32> to vector<16x16xf32>
    %272 = arith.addf %270, %271 : vector<16x16xf32>
    %cst_91 = arith.constant 0.000000e+00 : f32
    %273 = vector.broadcast %cst_91 : f32 to vector<16x16xf32>
    %274 = arith.cmpf oge, %272, %273 : vector<16x16xf32>
    %cst_92 = arith.constant 2.000000e-01 : f32
    %275 = vector.broadcast %cst_92 : f32 to vector<16x16xf32>
    %276 = arith.mulf %275, %272 : vector<16x16xf32>
    %277 = arith.select %274, %272, %276 : vector<16x16xi1>, vector<16x16xf32>
    %cst_93 = arith.constant -1.000000e+30 : f32
    %278 = vector.broadcast %cst_93 : f32 to vector<16x16xf32>
    %279 = arith.select %3, %277, %278 : vector<16x16xi1>, vector<16x16xf32>
    %cst_94 = arith.constant dense<0xFF800000> : vector<16xf32>
    %280 = vector.multi_reduction <maximumf>, %279, %cst_94 [1] : vector<16x16xf32> to vector<16xf32>
    %281 = vector.shape_cast %280 : vector<16xf32> to vector<16x1xf32>
    %282 = vector.broadcast %281 : vector<16x1xf32> to vector<16x16xf32>
    %283 = arith.subf %279, %282 : vector<16x16xf32>
    %284 = math.exp %283 : vector<16x16xf32>
    %cst_95 = arith.constant dense<0.000000e+00> : vector<16xf32>
    %285 = vector.multi_reduction <add>, %284, %cst_95 [1] : vector<16x16xf32> to vector<16xf32>
    %286 = vector.shape_cast %285 : vector<16xf32> to vector<16x1xf32>
    %287 = tpu.reciprocal %286 {approx = true} : vector<16x1xf32> -> vector<16x1xf32>
    %288 = vector.broadcast %287 : vector<16x1xf32> to vector<16x16xf32>
    %289 = arith.mulf %284, %288 : vector<16x16xf32>
    %290 = vector.extract_strided_slice %217 {offsets = [0, 64], sizes = [16, 32], strides = [1, 1]} : vector<16x256xf32> to vector<16x32xf32>
    %cst_96 = arith.constant dense<0.000000e+00> : vector<16x32xf32>
    %291 = tpu.matmul %289, %290, %cst_96 {dimension_numbers = #tpu.dot_dimension_numbers<[1], [0], [0], [1], [0, 0, 1, 1], [], []>} : vector<16x16xf32>, vector<16x32xf32>, vector<16x32xf32> -> vector<16x32xf32>
    %292 = vector.extract_strided_slice %218 {offsets = [0, 3], sizes = [16, 1], strides = [1, 1]} : vector<16x8xf32> to vector<16x1xf32>
    %293 = vector.extract_strided_slice %219 {offsets = [3, 0], sizes = [1, 16], strides = [1, 1]} : vector<8x16xf32> to vector<1x16xf32>
    %294 = vector.broadcast %292 : vector<16x1xf32> to vector<16x16xf32>
    %295 = vector.broadcast %293 : vector<1x16xf32> to vector<16x16xf32>
    %296 = arith.addf %294, %295 : vector<16x16xf32>
    %cst_97 = arith.constant 0.000000e+00 : f32
    %297 = vector.broadcast %cst_97 : f32 to vector<16x16xf32>
    %298 = arith.cmpf oge, %296, %297 : vector<16x16xf32>
    %cst_98 = arith.constant 2.000000e-01 : f32
    %299 = vector.broadcast %cst_98 : f32 to vector<16x16xf32>
    %300 = arith.mulf %299, %296 : vector<16x16xf32>
    %301 = arith.select %298, %296, %300 : vector<16x16xi1>, vector<16x16xf32>
    %cst_99 = arith.constant -1.000000e+30 : f32
    %302 = vector.broadcast %cst_99 : f32 to vector<16x16xf32>
    %303 = arith.select %3, %301, %302 : vector<16x16xi1>, vector<16x16xf32>
    %cst_100 = arith.constant dense<0xFF800000> : vector<16xf32>
    %304 = vector.multi_reduction <maximumf>, %303, %cst_100 [1] : vector<16x16xf32> to vector<16xf32>
    %305 = vector.shape_cast %304 : vector<16xf32> to vector<16x1xf32>
    %306 = vector.broadcast %305 : vector<16x1xf32> to vector<16x16xf32>
    %307 = arith.subf %303, %306 : vector<16x16xf32>
    %308 = math.exp %307 : vector<16x16xf32>
    %cst_101 = arith.constant dense<0.000000e+00> : vector<16xf32>
    %309 = vector.multi_reduction <add>, %308, %cst_101 [1] : vector<16x16xf32> to vector<16xf32>
    %310 = vector.shape_cast %309 : vector<16xf32> to vector<16x1xf32>
    %311 = tpu.reciprocal %310 {approx = true} : vector<16x1xf32> -> vector<16x1xf32>
    %312 = vector.broadcast %311 : vector<16x1xf32> to vector<16x16xf32>
    %313 = arith.mulf %308, %312 : vector<16x16xf32>
    %314 = vector.extract_strided_slice %217 {offsets = [0, 96], sizes = [16, 32], strides = [1, 1]} : vector<16x256xf32> to vector<16x32xf32>
    %cst_102 = arith.constant dense<0.000000e+00> : vector<16x32xf32>
    %315 = tpu.matmul %313, %314, %cst_102 {dimension_numbers = #tpu.dot_dimension_numbers<[1], [0], [0], [1], [0, 0, 1, 1], [], []>} : vector<16x16xf32>, vector<16x32xf32>, vector<16x32xf32> -> vector<16x32xf32>
    %316 = vector.extract_strided_slice %218 {offsets = [0, 4], sizes = [16, 1], strides = [1, 1]} : vector<16x8xf32> to vector<16x1xf32>
    %317 = vector.extract_strided_slice %219 {offsets = [4, 0], sizes = [1, 16], strides = [1, 1]} : vector<8x16xf32> to vector<1x16xf32>
    %318 = vector.broadcast %316 : vector<16x1xf32> to vector<16x16xf32>
    %319 = vector.broadcast %317 : vector<1x16xf32> to vector<16x16xf32>
    %320 = arith.addf %318, %319 : vector<16x16xf32>
    %cst_103 = arith.constant 0.000000e+00 : f32
    %321 = vector.broadcast %cst_103 : f32 to vector<16x16xf32>
    %322 = arith.cmpf oge, %320, %321 : vector<16x16xf32>
    %cst_104 = arith.constant 2.000000e-01 : f32
    %323 = vector.broadcast %cst_104 : f32 to vector<16x16xf32>
    %324 = arith.mulf %323, %320 : vector<16x16xf32>
    %325 = arith.select %322, %320, %324 : vector<16x16xi1>, vector<16x16xf32>
    %cst_105 = arith.constant -1.000000e+30 : f32
    %326 = vector.broadcast %cst_105 : f32 to vector<16x16xf32>
    %327 = arith.select %3, %325, %326 : vector<16x16xi1>, vector<16x16xf32>
    %cst_106 = arith.constant dense<0xFF800000> : vector<16xf32>
    %328 = vector.multi_reduction <maximumf>, %327, %cst_106 [1] : vector<16x16xf32> to vector<16xf32>
    %329 = vector.shape_cast %328 : vector<16xf32> to vector<16x1xf32>
    %330 = vector.broadcast %329 : vector<16x1xf32> to vector<16x16xf32>
    %331 = arith.subf %327, %330 : vector<16x16xf32>
    %332 = math.exp %331 : vector<16x16xf32>
    %cst_107 = arith.constant dense<0.000000e+00> : vector<16xf32>
    %333 = vector.multi_reduction <add>, %332, %cst_107 [1] : vector<16x16xf32> to vector<16xf32>
    %334 = vector.shape_cast %333 : vector<16xf32> to vector<16x1xf32>
    %335 = tpu.reciprocal %334 {approx = true} : vector<16x1xf32> -> vector<16x1xf32>
    %336 = vector.broadcast %335 : vector<16x1xf32> to vector<16x16xf32>
    %337 = arith.mulf %332, %336 : vector<16x16xf32>
    %338 = vector.extract_strided_slice %217 {offsets = [0, 128], sizes = [16, 32], strides = [1, 1]} : vector<16x256xf32> to vector<16x32xf32>
    %cst_108 = arith.constant dense<0.000000e+00> : vector<16x32xf32>
    %339 = tpu.matmul %337, %338, %cst_108 {dimension_numbers = #tpu.dot_dimension_numbers<[1], [0], [0], [1], [0, 0, 1, 1], [], []>} : vector<16x16xf32>, vector<16x32xf32>, vector<16x32xf32> -> vector<16x32xf32>
    %340 = vector.extract_strided_slice %218 {offsets = [0, 5], sizes = [16, 1], strides = [1, 1]} : vector<16x8xf32> to vector<16x1xf32>
    %341 = vector.extract_strided_slice %219 {offsets = [5, 0], sizes = [1, 16], strides = [1, 1]} : vector<8x16xf32> to vector<1x16xf32>
    %342 = vector.broadcast %340 : vector<16x1xf32> to vector<16x16xf32>
    %343 = vector.broadcast %341 : vector<1x16xf32> to vector<16x16xf32>
    %344 = arith.addf %342, %343 : vector<16x16xf32>
    %cst_109 = arith.constant 0.000000e+00 : f32
    %345 = vector.broadcast %cst_109 : f32 to vector<16x16xf32>
    %346 = arith.cmpf oge, %344, %345 : vector<16x16xf32>
    %cst_110 = arith.constant 2.000000e-01 : f32
    %347 = vector.broadcast %cst_110 : f32 to vector<16x16xf32>
    %348 = arith.mulf %347, %344 : vector<16x16xf32>
    %349 = arith.select %346, %344, %348 : vector<16x16xi1>, vector<16x16xf32>
    %cst_111 = arith.constant -1.000000e+30 : f32
    %350 = vector.broadcast %cst_111 : f32 to vector<16x16xf32>
    %351 = arith.select %3, %349, %350 : vector<16x16xi1>, vector<16x16xf32>
    %cst_112 = arith.constant dense<0xFF800000> : vector<16xf32>
    %352 = vector.multi_reduction <maximumf>, %351, %cst_112 [1] : vector<16x16xf32> to vector<16xf32>
    %353 = vector.shape_cast %352 : vector<16xf32> to vector<16x1xf32>
    %354 = vector.broadcast %353 : vector<16x1xf32> to vector<16x16xf32>
    %355 = arith.subf %351, %354 : vector<16x16xf32>
    %356 = math.exp %355 : vector<16x16xf32>
    %cst_113 = arith.constant dense<0.000000e+00> : vector<16xf32>
    %357 = vector.multi_reduction <add>, %356, %cst_113 [1] : vector<16x16xf32> to vector<16xf32>
    %358 = vector.shape_cast %357 : vector<16xf32> to vector<16x1xf32>
    %359 = tpu.reciprocal %358 {approx = true} : vector<16x1xf32> -> vector<16x1xf32>
    %360 = vector.broadcast %359 : vector<16x1xf32> to vector<16x16xf32>
    %361 = arith.mulf %356, %360 : vector<16x16xf32>
    %362 = vector.extract_strided_slice %217 {offsets = [0, 160], sizes = [16, 32], strides = [1, 1]} : vector<16x256xf32> to vector<16x32xf32>
    %cst_114 = arith.constant dense<0.000000e+00> : vector<16x32xf32>
    %363 = tpu.matmul %361, %362, %cst_114 {dimension_numbers = #tpu.dot_dimension_numbers<[1], [0], [0], [1], [0, 0, 1, 1], [], []>} : vector<16x16xf32>, vector<16x32xf32>, vector<16x32xf32> -> vector<16x32xf32>
    %364 = vector.extract_strided_slice %218 {offsets = [0, 6], sizes = [16, 1], strides = [1, 1]} : vector<16x8xf32> to vector<16x1xf32>
    %365 = vector.extract_strided_slice %219 {offsets = [6, 0], sizes = [1, 16], strides = [1, 1]} : vector<8x16xf32> to vector<1x16xf32>
    %366 = vector.broadcast %364 : vector<16x1xf32> to vector<16x16xf32>
    %367 = vector.broadcast %365 : vector<1x16xf32> to vector<16x16xf32>
    %368 = arith.addf %366, %367 : vector<16x16xf32>
    %cst_115 = arith.constant 0.000000e+00 : f32
    %369 = vector.broadcast %cst_115 : f32 to vector<16x16xf32>
    %370 = arith.cmpf oge, %368, %369 : vector<16x16xf32>
    %cst_116 = arith.constant 2.000000e-01 : f32
    %371 = vector.broadcast %cst_116 : f32 to vector<16x16xf32>
    %372 = arith.mulf %371, %368 : vector<16x16xf32>
    %373 = arith.select %370, %368, %372 : vector<16x16xi1>, vector<16x16xf32>
    %cst_117 = arith.constant -1.000000e+30 : f32
    %374 = vector.broadcast %cst_117 : f32 to vector<16x16xf32>
    %375 = arith.select %3, %373, %374 : vector<16x16xi1>, vector<16x16xf32>
    %cst_118 = arith.constant dense<0xFF800000> : vector<16xf32>
    %376 = vector.multi_reduction <maximumf>, %375, %cst_118 [1] : vector<16x16xf32> to vector<16xf32>
    %377 = vector.shape_cast %376 : vector<16xf32> to vector<16x1xf32>
    %378 = vector.broadcast %377 : vector<16x1xf32> to vector<16x16xf32>
    %379 = arith.subf %375, %378 : vector<16x16xf32>
    %380 = math.exp %379 : vector<16x16xf32>
    %cst_119 = arith.constant dense<0.000000e+00> : vector<16xf32>
    %381 = vector.multi_reduction <add>, %380, %cst_119 [1] : vector<16x16xf32> to vector<16xf32>
    %382 = vector.shape_cast %381 : vector<16xf32> to vector<16x1xf32>
    %383 = tpu.reciprocal %382 {approx = true} : vector<16x1xf32> -> vector<16x1xf32>
    %384 = vector.broadcast %383 : vector<16x1xf32> to vector<16x16xf32>
    %385 = arith.mulf %380, %384 : vector<16x16xf32>
    %386 = vector.extract_strided_slice %217 {offsets = [0, 192], sizes = [16, 32], strides = [1, 1]} : vector<16x256xf32> to vector<16x32xf32>
    %cst_120 = arith.constant dense<0.000000e+00> : vector<16x32xf32>
    %387 = tpu.matmul %385, %386, %cst_120 {dimension_numbers = #tpu.dot_dimension_numbers<[1], [0], [0], [1], [0, 0, 1, 1], [], []>} : vector<16x16xf32>, vector<16x32xf32>, vector<16x32xf32> -> vector<16x32xf32>
    %388 = vector.extract_strided_slice %218 {offsets = [0, 7], sizes = [16, 1], strides = [1, 1]} : vector<16x8xf32> to vector<16x1xf32>
    %389 = vector.extract_strided_slice %219 {offsets = [7, 0], sizes = [1, 16], strides = [1, 1]} : vector<8x16xf32> to vector<1x16xf32>
    %390 = vector.broadcast %388 : vector<16x1xf32> to vector<16x16xf32>
    %391 = vector.broadcast %389 : vector<1x16xf32> to vector<16x16xf32>
    %392 = arith.addf %390, %391 : vector<16x16xf32>
    %cst_121 = arith.constant 0.000000e+00 : f32
    %393 = vector.broadcast %cst_121 : f32 to vector<16x16xf32>
    %394 = arith.cmpf oge, %392, %393 : vector<16x16xf32>
    %cst_122 = arith.constant 2.000000e-01 : f32
    %395 = vector.broadcast %cst_122 : f32 to vector<16x16xf32>
    %396 = arith.mulf %395, %392 : vector<16x16xf32>
    %397 = arith.select %394, %392, %396 : vector<16x16xi1>, vector<16x16xf32>
    %cst_123 = arith.constant -1.000000e+30 : f32
    %398 = vector.broadcast %cst_123 : f32 to vector<16x16xf32>
    %399 = arith.select %3, %397, %398 : vector<16x16xi1>, vector<16x16xf32>
    %cst_124 = arith.constant dense<0xFF800000> : vector<16xf32>
    %400 = vector.multi_reduction <maximumf>, %399, %cst_124 [1] : vector<16x16xf32> to vector<16xf32>
    %401 = vector.shape_cast %400 : vector<16xf32> to vector<16x1xf32>
    %402 = vector.broadcast %401 : vector<16x1xf32> to vector<16x16xf32>
    %403 = arith.subf %399, %402 : vector<16x16xf32>
    %404 = math.exp %403 : vector<16x16xf32>
    %cst_125 = arith.constant dense<0.000000e+00> : vector<16xf32>
    %405 = vector.multi_reduction <add>, %404, %cst_125 [1] : vector<16x16xf32> to vector<16xf32>
    %406 = vector.shape_cast %405 : vector<16xf32> to vector<16x1xf32>
    %407 = tpu.reciprocal %406 {approx = true} : vector<16x1xf32> -> vector<16x1xf32>
    %408 = vector.broadcast %407 : vector<16x1xf32> to vector<16x16xf32>
    %409 = arith.mulf %404, %408 : vector<16x16xf32>
    %410 = vector.extract_strided_slice %217 {offsets = [0, 224], sizes = [16, 32], strides = [1, 1]} : vector<16x256xf32> to vector<16x32xf32>
    %cst_126 = arith.constant dense<0.000000e+00> : vector<16x32xf32>
    %411 = tpu.matmul %409, %410, %cst_126 {dimension_numbers = #tpu.dot_dimension_numbers<[1], [0], [0], [1], [0, 0, 1, 1], [], []>} : vector<16x16xf32>, vector<16x32xf32>, vector<16x32xf32> -> vector<16x32xf32>
    %412 = tpu.concatenate %243, %267, %291, %315, %339, %363, %387, %411 in 1 : vector<16x32xf32>, vector<16x32xf32>, vector<16x32xf32>, vector<16x32xf32>, vector<16x32xf32>, vector<16x32xf32>, vector<16x32xf32>, vector<16x32xf32> -> vector<16x256xf32>
    %413 = vector.broadcast %216 : vector<1x256xf32> to vector<16x256xf32>
    %414 = arith.addf %412, %413 : vector<16x256xf32>
    %cst_127 = arith.constant 0.000000e+00 : f32
    %415 = vector.broadcast %cst_127 : f32 to vector<16x256xf32>
    %416 = arith.maximumf %414, %415 : vector<16x256xf32>
    %c0_128 = arith.constant 0 : index
    %c0_129 = arith.constant 0 : index
    %417 = vector.load %arg14[%c0_128, %c0_129] : memref<256x8xf32, #tpu.memory_space<vmem>>, vector<256x8xf32>
    %cst_130 = arith.constant dense<0.000000e+00> : vector<16x8xf32>
    %418 = tpu.matmul %416, %417, %cst_130 {dimension_numbers = #tpu.dot_dimension_numbers<[1], [0], [0], [1], [0, 0, 1, 1], [], []>} : vector<16x256xf32>, vector<256x8xf32>, vector<16x8xf32> -> vector<16x8xf32>
    %c0_131 = arith.constant 0 : index
    %c0_132 = arith.constant 0 : index
    %419 = vector.load %arg15[%c0_131, %c0_132] : memref<1x8xf32, #tpu.memory_space<vmem>>, vector<1x8xf32>
    %420 = vector.broadcast %419 : vector<1x8xf32> to vector<16x8xf32>
    %421 = arith.addf %418, %420 : vector<16x8xf32>
    %c0_133 = arith.constant 0 : index
    %c0_134 = arith.constant 0 : index
    %422 = vector.load %arg2[%c0_133, %c0_134] : memref<16x16xf32, #tpu.memory_space<vmem>>, vector<16x16xf32>
    %cst_135 = arith.constant dense<0.000000e+00> : vector<16x8xf32>
    %423 = tpu.matmul %422, %421, %cst_135 {dimension_numbers = #tpu.dot_dimension_numbers<[1], [0], [0], [1], [0, 0, 1, 1], [], []>} : vector<16x16xf32>, vector<16x8xf32>, vector<16x8xf32> -> vector<16x8xf32>
    %424 = vector.extract_strided_slice %423 {offsets = [0, 0], sizes = [8, 8], strides = [1, 1]} : vector<16x8xf32> to vector<8x8xf32>
    %425 = vector.extract_strided_slice %423 {offsets = [8, 0], sizes = [8, 8], strides = [1, 1]} : vector<16x8xf32> to vector<8x8xf32>
    %c0_136 = arith.constant 0 : index
    %c0_137 = arith.constant 0 : index
    %426 = vector.load %arg3[%c0_136, %c0_137] : memref<8x8xf32, #tpu.memory_space<vmem>>, vector<8x8xf32>
    %427 = tpu.concatenate %424, %426 in 1 : vector<8x8xf32>, vector<8x8xf32> -> vector<8x16xf32>
    %c0_138 = arith.constant 0 : index
    %c0_139 = arith.constant 0 : index
    %428 = vector.load %arg16[%c0_138, %c0_139] : memref<16x8xf32, #tpu.memory_space<vmem>>, vector<16x8xf32>
    %cst_140 = arith.constant dense<0.000000e+00> : vector<8x8xf32>
    %429 = tpu.matmul %427, %428, %cst_140 {dimension_numbers = #tpu.dot_dimension_numbers<[1], [0], [0], [1], [0, 0, 1, 1], [], []>} : vector<8x16xf32>, vector<16x8xf32>, vector<8x8xf32> -> vector<8x8xf32>
    %c0_141 = arith.constant 0 : index
    %c0_142 = arith.constant 0 : index
    %430 = vector.load %arg17[%c0_141, %c0_142] : memref<1x8xf32, #tpu.memory_space<vmem>>, vector<1x8xf32>
    %431 = vector.broadcast %430 : vector<1x8xf32> to vector<8x8xf32>
    %432 = arith.addf %429, %431 : vector<8x8xf32>
    %433 = arith.mulf %432, %425 : vector<8x8xf32>
    %cst_143 = arith.constant dense<0.000000e+00> : vector<8xf32>
    %434 = vector.multi_reduction <add>, %433, %cst_143 [1] : vector<8x8xf32> to vector<8xf32>
    %435 = vector.shape_cast %434 : vector<8xf32> to vector<8x1xf32>
    %cst_144 = arith.constant 5.000000e-01 : f32
    %436 = vector.broadcast %cst_144 : f32 to vector<8x1xf32>
    %437 = arith.mulf %436, %435 : vector<8x1xf32>
    %438 = math.tanh %437 : vector<8x1xf32>
    %cst_145 = arith.constant 1.000000e+00 : f32
    %439 = vector.broadcast %cst_145 : f32 to vector<8x1xf32>
    %440 = arith.addf %438, %439 : vector<8x1xf32>
    %cst_146 = arith.constant 5.000000e-01 : f32
    %441 = vector.broadcast %cst_146 : f32 to vector<8x1xf32>
    %442 = arith.mulf %441, %440 : vector<8x1xf32>
    %c0_147 = arith.constant 0 : index
    %c0_148 = arith.constant 0 : index
    %443 = vector.load %arg18[%c0_147, %c0_148] : memref<8x1xf32, #tpu.memory_space<vmem>>, vector<8x1xf32>
    tpu.vector_store %arg18[%c0_147, %c0_148], %442 {strides = array<i32>} : memref<8x1xf32, #tpu.memory_space<vmem>>, vector<8x1xf32>,
    return
  }
}

</mosaic_0001>

<llo_original>
// kernel: model_forward.1
$region0: #{model_forward.1}
  #allocation0 [shape = 'u32[]', space=smem, size = 0x4, offset = 0x4, fixed_abs, tag = 'smem constant byte address 0x4 - core index']
  #allocation1 [shape = 'u32[144,128]{1,0:T(1,128)}', space=vmem, size = 0x12000, scoped, tag = 'internal scratch']
  %s0 = inlined_call_operand.vmem [shape: f32[16,32], index: 0, kind: input, shape index: {}]
  %s1 = inlined_call_operand.vmem [shape: f32[16,16], index: 1, kind: input, shape index: {}]
  %s2 = inlined_call_operand.vmem [shape: f32[16,16], index: 2, kind: input, shape index: {}]
  %s3 = inlined_call_operand.vmem [shape: f32[8,8], index: 3, kind: input, shape index: {}]
  %s4 = inlined_call_operand.vmem [shape: f32[32,256], index: 4, kind: input, shape index: {}]
  %s5 = inlined_call_operand.vmem [shape: f32[8,256], index: 5, kind: input, shape index: {}]
  %s6 = inlined_call_operand.vmem [shape: f32[256,8], index: 6, kind: input, shape index: {}]
  %s7 = inlined_call_operand.vmem [shape: f32[1,256], index: 7, kind: input, shape index: {}]
  %s8 = inlined_call_operand.vmem [shape: f32[256,32], index: 8, kind: input, shape index: {}]
  %s9 = inlined_call_operand.vmem [shape: f32[1,32], index: 9, kind: input, shape index: {}]
  %s10 = inlined_call_operand.vmem [shape: f32[32,256], index: 10, kind: input, shape index: {}]
  %s11 = inlined_call_operand.vmem [shape: f32[8,256], index: 11, kind: input, shape index: {}]
  %s12 = inlined_call_operand.vmem [shape: f32[256,8], index: 12, kind: input, shape index: {}]
  %s13 = inlined_call_operand.vmem [shape: f32[1,256], index: 13, kind: input, shape index: {}]
  %s14 = inlined_call_operand.vmem [shape: f32[256,8], index: 14, kind: input, shape index: {}]
  %s15 = inlined_call_operand.vmem [shape: f32[1,8], index: 15, kind: input, shape index: {}]
  %s16 = inlined_call_operand.vmem [shape: f32[16,8], index: 16, kind: input, shape index: {}]
  %s17 = inlined_call_operand.vmem [shape: f32[1,8], index: 17, kind: input, shape index: {}]
  %s18 = inlined_call_operand.vmem [shape: f32[8,1], index: 18, kind: output, shape index: {}]
  %s19 = sld [smem:[#allocation0]]
  $region82: #{model_forward.1} parent=0
    _
  %s21 = ssub.s32 1, %s19
  %s22 = scalar_select 0, %s21, %s19
  // Predicated region
  $region2: #{model_forward.1} parent=0 // pred_check
    _
  $region3: #{model_forward.1} parent=0 // pred_check_branch
    %24 = sbr.rel (0) target = $region5
  $region4: #{model_forward.1} parent=0 // pred_region
    _
  $region5: #{model_forward.1} parent=0 // pred_fallthru
    _
  // Predicated region
  $region6: #{model_forward.1} parent=0 // pred_check
    _
  $region7: #{model_forward.1} parent=0 // pred_check_branch
    %26 = sbr.rel (0) target = $region9
  $region8: #{model_forward.1} parent=0 // pred_region
    _
  $region9: #{model_forward.1} parent=0 // pred_fallthru
    _
  // Predicated region
  $region10: #{model_forward.1} parent=0 // pred_check
    _
  $region11: #{model_forward.1} parent=0 // pred_check_branch
    %28 = sbr.rel (0) target = $region13
  $region12: #{model_forward.1} parent=0 // pred_region
    _
  $region13: #{model_forward.1} parent=0 // pred_fallthru
    _
  // Predicated region
  $region14: #{model_forward.1} parent=0 // pred_check
    _
  $region15: #{model_forward.1} parent=0 // pred_check_branch
    %30 = sbr.rel (0) target = $region17
  $region16: #{model_forward.1} parent=0 // pred_region
    _
  $region17: #{model_forward.1} parent=0 // pred_fallthru
    _
  // Predicated region
  $region18: #{model_forward.1} parent=0 // pred_check
    _
  $region19: #{model_forward.1} parent=0 // pred_check_branch
    %32 = sbr.rel (0) target = $region21
  $region20: #{model_forward.1} parent=0 // pred_region
    _
  $region21: #{model_forward.1} parent=0 // pred_fallthru
    _
  // Predicated region
  $region22: #{model_forward.1} parent=0 // pred_check
    _
  $region23: #{model_forward.1} parent=0 // pred_check_branch
    %34 = sbr.rel (0) target = $region25
  $region24: #{model_forward.1} parent=0 // pred_region
    _
  $region25: #{model_forward.1} parent=0 // pred_fallthru
    _
  // Predicated region
  $region26: #{model_forward.1} parent=0 // pred_check
    _
  $region27: #{model_forward.1} parent=0 // pred_check_branch
    %36 = sbr.rel (0) target = $region29
  $region28: #{model_forward.1} parent=0 // pred_region
    _
  $region29: #{model_forward.1} parent=0 // pred_fallthru
    _
  // Predicated region
  $region30: #{model_forward.1} parent=0 // pred_check
    _
  $region31: #{model_forward.1} parent=0 // pred_check_branch
    %38 = sbr.rel (0) target = $region33
  $region32: #{model_forward.1} parent=0 // pred_region
    _
  $region33: #{model_forward.1} parent=0 // pred_fallthru
    _
  // Predicated region
  $region34: #{model_forward.1} parent=0 // pred_check
    _
  $region35: #{model_forward.1} parent=0 // pred_check_branch
    %40 = sbr.rel (0) target = $region37
  $region36: #{model_forward.1} parent=0 // pred_region
    _
  $region37: #{model_forward.1} parent=0 // pred_fallthru
    _
  // Predicated region
  $region38: #{model_forward.1} parent=0 // pred_check
    _
  $region39: #{model_forward.1} parent=0 // pred_check_branch
    %42 = sbr.rel (0) target = $region41
  $region40: #{model_forward.1} parent=0 // pred_region
    _
  $region41: #{model_forward.1} parent=0 // pred_fallthru
    _
  // Predicated region
  $region42: #{model_forward.1} parent=0 // pred_check
    _
  $region43: #{model_forward.1} parent=0 // pred_check_branch
    %44 = sbr.rel (0) target = $region45
  $region44: #{model_forward.1} parent=0 // pred_region
    _
  $region45: #{model_forward.1} parent=0 // pred_fallthru
    _
  // Predicated region
  $region46: #{model_forward.1} parent=0 // pred_check
    _
  $region47: #{model_forward.1} parent=0 // pred_check_branch
    %46 = sbr.rel (0) target = $region49
  $region48: #{model_forward.1} parent=0 // pred_region
    _
  $region49: #{model_forward.1} parent=0 // pred_fallthru
    _
  // Predicated region
  $region50: #{model_forward.1} parent=0 // pred_check
    _
  $region51: #{model_forward.1} parent=0 // pred_check_branch
    %48 = sbr.rel (0) target = $region53
  $region52: #{model_forward.1} parent=0 // pred_region
    _
  $region53: #{model_forward.1} parent=0 // pred_fallthru
    _
  // Predicated region
  $region54: #{model_forward.1} parent=0 // pred_check
    _
  $region55: #{model_forward.1} parent=0 // pred_check_branch
    %50 = sbr.rel (0) target = $region57
  $region56: #{model_forward.1} parent=0 // pred_region
    _
  $region57: #{model_forward.1} parent=0 // pred_fallthru
    _
  // Predicated region
  $region58: #{model_forward.1} parent=0 // pred_check
    _
  $region59: #{model_forward.1} parent=0 // pred_check_branch
    %52 = sbr.rel (0) target = $region61
  $region60: #{model_forward.1} parent=0 // pred_region
    _
  $region61: #{model_forward.1} parent=0 // pred_fallthru
    _
  // Predicated region
  $region62: #{model_forward.1} parent=0 // pred_check
    _
  $region63: #{model_forward.1} parent=0 // pred_check_branch
    %54 = sbr.rel (0) target = $region65
  $region64: #{model_forward.1} parent=0 // pred_region
    _
  $region65: #{model_forward.1} parent=0 // pred_fallthru
    _
  // Predicated region
  $region66: #{model_forward.1} parent=0 // pred_check
    _
  $region67: #{model_forward.1} parent=0 // pred_check_branch
    %56 = sbr.rel (0) target = $region69
  $region68: #{model_forward.1} parent=0 // pred_region
    _
  $region69: #{model_forward.1} parent=0 // pred_fallthru
    _
  // Predicated region
  $region70: #{model_forward.1} parent=0 // pred_check
    _
  $region71: #{model_forward.1} parent=0 // pred_check_branch
    %58 = sbr.rel (0) target = $region73
  $region72: #{model_forward.1} parent=0 // pred_region
    _
  $region73: #{model_forward.1} parent=0 // pred_fallthru
    _
  %v59 = vld [vmem:[%s0] sm:$0xff]
  %v60 = vld [vmem:[%s0 + $0x8] sm:$0xff]
  %v61 = vld [vmem:[%s1] sm:$0xff]
  %v62 = vld [vmem:[%s1 + $0x8] sm:$0xff]
  %vm63 = vcmp.gt.f32.partialorder %v61, 0.0
  %vm64 = vcmp.gt.f32.partialorder %v62, 0.0
  %v65 = vld [vmem:[%s4] sm:$0xff]
  %v66 = vld [vmem:[%s4 + $0x8] sm:$0xff]
  %v67 = vld [vmem:[%s4 + $0x10] sm:$0xff]
  %v68 = vld [vmem:[%s4 + $0x18] sm:$0xff]
  %v69 = vld [vmem:[%s4 + $0x20] sm:$0xff]
  %v70 = vld [vmem:[%s4 + $0x28] sm:$0xff]
  %v71 = vld [vmem:[%s4 + $0x30] sm:$0xff]
  %v72 = vld [vmem:[%s4 + $0x38] sm:$0xff]
  %v73 = vld [vmem:[%s5] sm:$0xff]
  %v74 = vld [vmem:[%s5 + $0x8] sm:$0xff]
  %v75 = vld [vmem:[%s6] sm:$0xff]
  %v76 = vld [vmem:[%s6 + $0x8] sm:$0xff]
  %v77 = vld [vmem:[%s6 + $0x10] sm:$0xff]
  %v78 = vld [vmem:[%s6 + $0x18] sm:$0xff]
  %v79 = vld [vmem:[%s6 + $0x20] sm:$0xff]
  %v80 = vld [vmem:[%s6 + $0x28] sm:$0xff]
  %v81 = vld [vmem:[%s6 + $0x30] sm:$0xff]
  %v82 = vld [vmem:[%s6 + $0x38] sm:$0xff]
  %v83 = vld [vmem:[%s6 + $0x40] sm:$0xff]
  %v84 = vld [vmem:[%s6 + $0x48] sm:$0xff]
  %v85 = vld [vmem:[%s6 + $0x50] sm:$0xff]
  %v86 = vld [vmem:[%s6 + $0x58] sm:$0xff]
  %v87 = vld [vmem:[%s6 + $0x60] sm:$0xff]
  %v88 = vld [vmem:[%s6 + $0x68] sm:$0xff]
  %v89 = vld [vmem:[%s6 + $0x70] sm:$0xff]
  %v90 = vld [vmem:[%s6 + $0x78] sm:$0xff]
  %v91 = vld [vmem:[%s6 + $0x80] sm:$0xff]
  %v92 = vld [vmem:[%s6 + $0x88] sm:$0xff]
  %v93 = vld [vmem:[%s6 + $0x90] sm:$0xff]
  %v94 = vld [vmem:[%s6 + $0x98] sm:$0xff]
  %v95 = vld [vmem:[%s6 + $0xa0] sm:$0xff]
  %v96 = vld [vmem:[%s6 + $0xa8] sm:$0xff]
  %v97 = vld [vmem:[%s6 + $0xb0] sm:$0xff]
  %v98 = vld [vmem:[%s6 + $0xb8] sm:$0xff]
  %v99 = vld [vmem:[%s6 + $0xc0] sm:$0xff]
  %v100 = vld [vmem:[%s6 + $0xc8] sm:$0xff]
  %v101 = vld [vmem:[%s6 + $0xd0] sm:$0xff]
  %v102 = vld [vmem:[%s6 + $0xd8] sm:$0xff]
  %v103 = vld [vmem:[%s6 + $0xe0] sm:$0xff]
  %v104 = vld [vmem:[%s6 + $0xe8] sm:$0xff]
  %v105 = vld [vmem:[%s6 + $0xf0] sm:$0xff]
  %v106 = vld [vmem:[%s6 + $0xf8] sm:$0xff]
  %v107 = vld [vmem:[%s7] sm:$0x3]
  %vm108 = vcmask 261120
  %v110 = vsel %vm108, %v59, 0
  %v113 = vsel %vm108, %v60, 0
  %115 = vmatprep.subr.mxu0 %v66
  %116 = vmatpush1.msra.mxu0 %v65
  %117 = vmatprep.subr.mxu0 %v68
  %118 = vmatpush1.msra.mxu0 %v67
  %119 = vmatprep.subr.mxu0 %v70
  %120 = vmatpush1.msra.mxu0 %v69
  %121 = vmatprep.subr.mxu0 %v72
  %122 = vmatpush1.msra.mxu0 %v71
  %123 = vmatprep.subr.mxu0 0.0
  %124 = vmatpush1.msra.mxu0 0.0
  %125 = vmatprep.subr.mxu0 0.0
  %126 = vmatpush1.msra.mxu0 0.0
  %127 = vmatprep.subr.mxu0 0.0
  %128 = vmatpush1.msra.mxu0 0.0
  %129 = vmatprep.subr.mxu0 0.0
  %130 = vmatpush1.msra.mxu0 0.0
  %131 = vmatprep.subr.mxu0 0.0
  %132 = vmatpush1.msra.mxu0 0.0
  %133 = vmatprep.subr.mxu0 0.0
  %134 = vmatpush1.msra.mxu0 0.0
  %135 = vmatprep.subr.mxu0 0.0
  %136 = vmatpush1.msra.mxu0 0.0
  %137 = vmatprep.subr.mxu0 0.0
  %138 = vmatpush1.msra.mxu0 0.0
  %139 = vmatprep.subr.mxu0 0.0
  %140 = vmatpush1.msra.mxu0 0.0
  %141 = vmatprep.subr.mxu0 0.0
  %142 = vmatpush1.msra.mxu0 0.0
  %143 = vmatprep.subr.mxu0 0.0
  %144 = vmatpush1.msra.mxu0 0.0
  %145 = vmatprep.subr.mxu0 0.0
  %146 = vmatpush1.msra.mxu0 0.0
  %147 = vmatprep.subr.mxu0 0.0
  %148 = vmatpush1.msra.mxu0 0.0
  %149 = vmatprep.subr.mxu0 0.0
  %150 = vmatpush1.msra.mxu0 0.0
  %151 = vmatprep.subr.mxu0 0.0
  %152 = vmatpush1.msra.mxu0 0.0
  %153 = vmatprep.subr.mxu0 0.0
  %154 = vmatpush1.msra.mxu0 0.0
  %155 = vmatprep.subr.mxu0 0.0
  %156 = vmatpush1.msra.mxu0 0.0
  %157 = vmatprep.subr.mxu0 0.0
  %158 = vmatpush1.msra.mxu0 0.0
  %159 = vmatprep.subr.mxu0 0.0
  %160 = vmatpush1.msra.mxu0 0.0
  %161 = vmatprep.subr.mxu0 0.0
  %162 = vmatpush1.msra.mxu0 0.0
  %163 = vmatprep.subr.mxu0 0.0
  %164 = vmatpush1.msra.mxu0 0.0
  %165 = vmatprep.subr.mxu0 0.0
  %166 = vmatpush1.msra.mxu0 0.0
  %167 = vmatprep.subr.mxu0 0.0
  %168 = vmatpush1.msra.mxu0 0.0
  %169 = vmatprep.subr.mxu0 0.0
  %170 = vmatpush1.msra.mxu0 0.0
  %171 = vmatprep.subr.mxu0 0.0
  %172 = vmatpush1.msra.mxu0 0.0
  %173 = vmatprep.subr.mxu0 0.0
  %174 = vmatpush1.msra.mxu0 0.0
  %175 = vmatprep.subr.mxu0 0.0
  %176 = vmatpush1.msra.mxu0 0.0
  %177 = vmatprep.subr.mxu0 0.0
  %178 = vmatpush1.msra.mxu0 0.0
  %179 = vmatprep.mubr.f32.mxu0 0.0
  %180 = vmatmul.mubr.f32.gmra.mrb[0].mxu0 %v110
  %v181 = vpop.f32.mrb[0].mxu0
  %v182 = vadd.f32 0.0, %v181
  %v183 = vpop.f32.mrb[0].mxu0
  %v184 = vadd.f32 0.0, %v183
  %185 = vmatprep.mubr.f32.mxu0 0.0
  %186 = vmatmul.mubr.f32.gmra.mrb[0].mxu0 %v113
  %v187 = vpop.f32.mrb[0].mxu0
  %v188 = vadd.f32 0.0, %v187
  %v189 = vpop.f32.mrb[0].mxu0
  %v190 = vadd.f32 0.0, %v189
  %191 = vdwg.mxu0
  %192 = vmatprep.subr.mxu0 0.0
  %193 = vmatpush1.msra.mxu0 %v75
  %194 = vmatprep.subr.mxu0 0.0
  %195 = vmatpush1.msra.mxu0 %v76
  %196 = vmatprep.subr.mxu0 0.0
  %197 = vmatpush1.msra.mxu0 %v77
  %198 = vmatprep.subr.mxu0 0.0
  %199 = vmatpush1.msra.mxu0 %v78
  %200 = vmatprep.subr.mxu0 0.0
  %201 = vmatpush1.msra.mxu0 %v79
  %202 = vmatprep.subr.mxu0 0.0
  %203 = vmatpush1.msra.mxu0 %v80
  %204 = vmatprep.subr.mxu0 0.0
  %205 = vmatpush1.msra.mxu0 %v81
  %206 = vmatprep.subr.mxu0 0.0
  %207 = vmatpush1.msra.mxu0 %v82
  %208 = vmatprep.subr.mxu0 0.0
  %209 = vmatpush1.msra.mxu0 %v83
  %210 = vmatprep.subr.mxu0 0.0
  %211 = vmatpush1.msra.mxu0 %v84
  %212 = vmatprep.subr.mxu0 0.0
  %213 = vmatpush1.msra.mxu0 %v85
  %214 = vmatprep.subr.mxu0 0.0
  %215 = vmatpush1.msra.mxu0 %v86
  %216 = vmatprep.subr.mxu0 0.0
  %217 = vmatpush1.msra.mxu0 %v87
  %218 = vmatprep.subr.mxu0 0.0
  %219 = vmatpush1.msra.mxu0 %v88
  %220 = vmatprep.subr.mxu0 0.0
  %221 = vmatpush1.msra.mxu0 %v89
  %222 = vmatprep.subr.mxu0 0.0
  %223 = vmatpush1.msra.mxu0 %v90
  %224 = vmatprep.subr.mxu0 0.0
  %225 = vmatpush1.msra.mxu0 %v91
  %226 = vmatprep.subr.mxu0 0.0
  %227 = vmatpush1.msra.mxu0 %v92
  %228 = vmatprep.subr.mxu0 0.0
  %229 = vmatpush1.msra.mxu0 %v93
  %230 = vmatprep.subr.mxu0 0.0
  %231 = vmatpush1.msra.mxu0 %v94
  %232 = vmatprep.subr.mxu0 0.0
  %233 = vmatpush1.msra.mxu0 %v95
  %234 = vmatprep.subr.mxu0 0.0
  %235 = vmatpush1.msra.mxu0 %v96
  %236 = vmatprep.subr.mxu0 0.0
  %237 = vmatpush1.msra.mxu0 %v97
  %238 = vmatprep.subr.mxu0 0.0
  %239 = vmatpush1.msra.mxu0 %v98
  %240 = vmatprep.subr.mxu0 0.0
  %241 = vmatpush1.msra.mxu0 %v99
  %242 = vmatprep.subr.mxu0 0.0
  %243 = vmatpush1.msra.mxu0 %v100
  %244 = vmatprep.subr.mxu0 0.0
  %245 = vmatpush1.msra.mxu0 %v101
  %246 = vmatprep.subr.mxu0 0.0
  %247 = vmatpush1.msra.mxu0 %v102
  %248 = vmatprep.subr.mxu0 0.0
  %249 = vmatpush1.msra.mxu0 %v103
  %250 = vmatprep.subr.mxu0 0.0
  %251 = vmatpush1.msra.mxu0 %v104
  %252 = vmatprep.subr.mxu0 0.0
  %253 = vmatpush1.msra.mxu0 %v105
  %254 = vmatprep.subr.mxu0 0.0
  %255 = vmatpush1.msra.mxu0 %v106
  %256 = vmatprep.mubr.f32.mxu0 %v184
  %257 = vmatmul.mubr.f32.gmra.mrb[0].mxu0 %v182
  %v258 = vpop.f32.mrb[0].mxu0
  %v259 = vadd.f32 0.0, %v258
  %v260 = vpop.f32.mrb[0].mxu0
  %261 = vmatprep.mubr.f32.mxu0 %v190
  %262 = vmatmul.mubr.f32.gmra.mrb[0].mxu0 %v188
  %v263 = vpop.f32.mrb[0].mxu0
  %v264 = vadd.f32 0.0, %v263
  %v265 = vpop.f32.mrb[0].mxu0
  %266 = vdwg.mxu0
  %267 = vmatprep.subr.mxu0 %v184
  %268 = vmatpush1.xpose.msra.mxu0 %v182
  %269 = vmatprep.subr.mxu0 %v190
  %270 = vmatpush1.xpose.msra.mxu0 %v188
  %271 = vmatprep.subr.mxu0 0.0
  %272 = vmatpush1.xpose.msra.mxu0 0.0
  %273 = vmatprep.subr.mxu0 0.0
  %274 = vmatpush1.xpose.msra.mxu0 0.0
  %275 = vmatprep.subr.mxu0 0.0
  %276 = vmatpush1.xpose.msra.mxu0 0.0
  %277 = vmatprep.subr.mxu0 0.0
  %278 = vmatpush1.xpose.msra.mxu0 0.0
  %279 = vmatprep.subr.mxu0 0.0
  %280 = vmatpush1.xpose.msra.mxu0 0.0
  %281 = vmatprep.subr.mxu0 0.0
  %282 = vmatpush1.xpose.msra.mxu0 0.0
  %283 = vmatprep.subr.mxu0 0.0
  %284 = vmatpush1.xpose.msra.mxu0 0.0
  %285 = vmatprep.subr.mxu0 0.0
  %286 = vmatpush1.xpose.msra.mxu0 0.0
  %287 = vmatprep.subr.mxu0 0.0
  %288 = vmatpush1.xpose.msra.mxu0 0.0
  %289 = vmatprep.subr.mxu0 0.0
  %290 = vmatpush1.xpose.msra.mxu0 0.0
  %291 = vmatprep.subr.mxu0 0.0
  %292 = vmatpush1.xpose.msra.mxu0 0.0
  %293 = vmatprep.subr.mxu0 0.0
  %294 = vmatpush1.xpose.msra.mxu0 0.0
  %295 = vmatprep.subr.mxu0 0.0
  %296 = vmatpush1.xpose.msra.mxu0 0.0
  %297 = vmatprep.subr.mxu0 0.0
  %298 = vmatpush1.xpose.msra.mxu0 0.0
  %299 = vmatprep.subr.mxu0 0.0
  %300 = vmatpush1.xpose.msra.mxu0 0.0
  %301 = vmatprep.subr.mxu0 0.0
  %302 = vmatpush1.xpose.msra.mxu0 0.0
  %303 = vmatprep.subr.mxu0 0.0
  %304 = vmatpush1.xpose.msra.mxu0 0.0
  %305 = vmatprep.subr.mxu0 0.0
  %306 = vmatpush1.xpose.msra.mxu0 0.0
  %307 = vmatprep.subr.mxu0 0.0
  %308 = vmatpush1.xpose.msra.mxu0 0.0
  %309 = vmatprep.subr.mxu0 0.0
  %310 = vmatpush1.xpose.msra.mxu0 0.0
  %311 = vmatprep.subr.mxu0 0.0
  %312 = vmatpush1.xpose.msra.mxu0 0.0
  %313 = vmatprep.subr.mxu0 0.0
  %314 = vmatpush1.xpose.msra.mxu0 0.0
  %315 = vmatprep.subr.mxu0 0.0
  %316 = vmatpush1.xpose.msra.mxu0 0.0
  %317 = vmatprep.subr.mxu0 0.0
  %318 = vmatpush1.xpose.msra.mxu0 0.0
  %319 = vmatprep.subr.mxu0 0.0
  %320 = vmatpush1.xpose.msra.mxu0 0.0
  %321 = vmatprep.subr.mxu0 0.0
  %322 = vmatpush1.xpose.msra.mxu0 0.0
  %323 = vmatprep.subr.mxu0 0.0
  %324 = vmatpush1.xpose.msra.mxu0 0.0
  %325 = vmatprep.subr.mxu0 0.0
  %326 = vmatpush1.xpose.msra.mxu0 0.0
  %327 = vmatprep.subr.mxu0 0.0
  %328 = vmatpush1.xpose.msra.mxu0 0.0
  %329 = vmatprep.subr.mxu0 0.0
  %330 = vmatpush1.xpose.msra.mxu0 0.0
  %331 = vmatprep.mubr.f32.mxu0 %v74
  %332 = vmatmul.mubr.f32.gmra.mrb[0].mxu0 %v73
  %v333 = vpop.f32.mrb[0].mxu0
  %v334 = vadd.f32 0.0, %v333
  %v335 = vpop.f32.mrb[0].mxu0
  %336 = vdwg.mxu0
  %338 = vset.pattern.permute.xlu0 0
  %339 = vperm.xlu0 %338, %v259
  %v340 = vpop.permute.xlu0 %339
  %343 = vset.pattern.permute.xlu0 0
  %344 = vperm.xlu0 %343, %v264
  %v345 = vpop.permute.xlu0 %344
  %v347 = vlaneseq
  %v348 = vshrl.u32 %v347, 7
  %v349 = vsub.s32 0, %v348
  %v350 = vrot.slane %v334, %v349
  %v351 = vadd.f32 %v340, %v350
  %v352 = vadd.f32 %v345, %v350
  %vm353 = vcmp.ge.f32.partialorder %v351, 0.0
  %vm354 = vcmp.ge.f32.partialorder %v352, 0.0
  %v355 = vmul.f32 %v351, 0.2
  %v356 = vmul.f32 %v352, 0.2
  %v357 = vsel %vm353, %v351, %v355
  %v358 = vsel %vm354, %v352, %v356
  %v359 = vsel %vm63, %v357, -1e+30
  %v360 = vsel %vm64, %v358, -1e+30
  %vm361 = vcmask 130048
  %v362 = vsel %vm361, %v359, -inf
  %363 = vmax.xlane.f32.xlu0 %v362
  %v364 = vpop.xlane.xlu0 %363
  %v365 = vsel %vm361, %v360, -inf
  %366 = vmax.xlane.f32.xlu0 %v365
  %v367 = vpop.xlane.xlu0 %366
  %v368 = vsub.f32 %v359, %v364
  %v369 = vsub.f32 %v360, %v367
  %v370 = vmul.f32 %v368, 1.442695
  %v371 = vpow.pop %v370
  %v372 = vmul.f32 %v369, 1.442695
  %v373 = vpow.pop %v372
  %v374 = vsel %vm361, %v371, 0.0
  %375 = vadd.xlane.f32.xlu0 %v374
  %v376 = vpop.xlane.xlu0 %375
  %v377 = vsel %vm361, %v373, 0.0
  %378 = vadd.xlane.f32.xlu0 %v377
  %v379 = vpop.xlane.xlu0 %378
  %v380 = vrcp.pop %v376
  %v381 = vrcp.pop %v379
  %v382 = vmul.f32 %v371, %v380
  %v383 = vmul.f32 %v373, %v381
  %v385 = vsel %vm361, %v382, 0
  %v388 = vsel %vm361, %v383, 0
  %390 = vmatprep.subr.mxu0 0.0
  %391 = vmatpush1.msra.mxu0 %v182
  %392 = vmatprep.subr.mxu0 0.0
  %393 = vmatpush1.msra.mxu0 %v188
  %394 = vmatprep.subr.mxu0 0.0
  %395 = vmatpush1.msra.mxu0 0.0
  %396 = vmatprep.subr.mxu0 0.0
  %397 = vmatpush1.msra.mxu0 0.0
  %398 = vmatprep.subr.mxu0 0.0
  %399 = vmatpush1.msra.mxu0 0.0
  %400 = vmatprep.subr.mxu0 0.0
  %401 = vmatpush1.msra.mxu0 0.0
  %402 = vmatprep.subr.mxu0 0.0
  %403 = vmatpush1.msra.mxu0 0.0
  %404 = vmatprep.subr.mxu0 0.0
  %405 = vmatpush1.msra.mxu0 0.0
  %406 = vmatprep.subr.mxu0 0.0
  %407 = vmatpush1.msra.mxu0 0.0
  %408 = vmatprep.subr.mxu0 0.0
  %409 = vmatpush1.msra.mxu0 0.0
  %410 = vmatprep.subr.mxu0 0.0
  %411 = vmatpush1.msra.mxu0 0.0
  %412 = vmatprep.subr.mxu0 0.0
  %413 = vmatpush1.msra.mxu0 0.0
  %414 = vmatprep.subr.mxu0 0.0
  %415 = vmatpush1.msra.mxu0 0.0
  %416 = vmatprep.subr.mxu0 0.0
  %417 = vmatpush1.msra.mxu0 0.0
  %418 = vmatprep.subr.mxu0 0.0
  %419 = vmatpush1.msra.mxu0 0.0
  %420 = vmatprep.subr.mxu0 0.0
  %421 = vmatpush1.msra.mxu0 0.0
  %422 = vmatprep.subr.mxu0 0.0
  %423 = vmatpush1.msra.mxu0 0.0
  %424 = vmatprep.subr.mxu0 0.0
  %425 = vmatpush1.msra.mxu0 0.0
  %426 = vmatprep.subr.mxu0 0.0
  %427 = vmatpush1.msra.mxu0 0.0
  %428 = vmatprep.subr.mxu0 0.0
  %429 = vmatpush1.msra.mxu0 0.0
  %430 = vmatprep.subr.mxu0 0.0
  %431 = vmatpush1.msra.mxu0 0.0
  %432 = vmatprep.subr.mxu0 0.0
  %433 = vmatpush1.msra.mxu0 0.0
  %434 = vmatprep.subr.mxu0 0.0
  %435 = vmatpush1.msra.mxu0 0.0
  %436 = vmatprep.subr.mxu0 0.0
  %437 = vmatpush1.msra.mxu0 0.0
  %438 = vmatprep.subr.mxu0 0.0
  %439 = vmatpush1.msra.mxu0 0.0
  %440 = vmatprep.subr.mxu0 0.0
  %441 = vmatpush1.msra.mxu0 0.0
  %442 = vmatprep.subr.mxu0 0.0
  %443 = vmatpush1.msra.mxu0 0.0
  %444 = vmatprep.subr.mxu0 0.0
  %445 = vmatpush1.msra.mxu0 0.0
  %446 = vmatprep.subr.mxu0 0.0
  %447 = vmatpush1.msra.mxu0 0.0
  %448 = vmatprep.subr.mxu0 0.0
  %449 = vmatpush1.msra.mxu0 0.0
  %450 = vmatprep.subr.mxu0 0.0
  %451 = vmatpush1.msra.mxu0 0.0
  %452 = vmatprep.subr.mxu0 0.0
  %453 = vmatpush1.msra.mxu0 0.0
  %454 = vmatprep.mubr.f32.mxu0 0.0
  %455 = vmatmul.mubr.f32.gmra.mrb[0].mxu0 %v385
  %v456 = vpop.f32.mrb[0].mxu0
  %v457 = vadd.f32 0.0, %v456
  %v458 = vpop.f32.mrb[0].mxu0
  %459 = vmatprep.mubr.f32.mxu0 0.0
  %460 = vmatmul.mubr.f32.gmra.mrb[0].mxu0 %v388
  %v461 = vpop.f32.mrb[0].mxu0
  %v462 = vadd.f32 0.0, %v461
  %v463 = vpop.f32.mrb[0].mxu0
  %464 = vdwg.mxu0
  %465 = vset.pattern.permute.xlu0 1
  %466 = vperm.xlu0 %465, %v259
  %v467 = vpop.permute.xlu0 %466
  %469 = vset.pattern.permute.xlu0 1
  %470 = vperm.xlu0 %469, %v264
  %v471 = vpop.permute.xlu0 %470
  %v473 = vlaneseq
  %v474 = vshrl.u32 %v473, 7
  %v475 = vsub.s32 1, %v474
  %v476 = vrot.slane %v334, %v475
  %v477 = vadd.f32 %v467, %v476
  %v478 = vadd.f32 %v471, %v476
  %vm479 = vcmp.ge.f32.partialorder %v477, 0.0
  %vm480 = vcmp.ge.f32.partialorder %v478, 0.0
  %v481 = vmul.f32 %v477, 0.2
  %v482 = vmul.f32 %v478, 0.2
  %v483 = vsel %vm479, %v477, %v481
  %v484 = vsel %vm480, %v478, %v482
  %v485 = vsel %vm63, %v483, -1e+30
  %v486 = vsel %vm64, %v484, -1e+30
  %v487 = vsel %vm361, %v485, -inf
  %488 = vmax.xlane.f32.xlu0 %v487
  %v489 = vpop.xlane.xlu0 %488
  %v490 = vsel %vm361, %v486, -inf
  %491 = vmax.xlane.f32.xlu0 %v490
  %v492 = vpop.xlane.xlu0 %491
  %v493 = vsub.f32 %v485, %v489
  %v494 = vsub.f32 %v486, %v492
  %v495 = vmul.f32 %v493, 1.442695
  %v496 = vpow.pop %v495
  %v497 = vmul.f32 %v494, 1.442695
  %v498 = vpow.pop %v497
  %v499 = vsel %vm361, %v496, 0.0
  %500 = vadd.xlane.f32.xlu0 %v499
  %v501 = vpop.xlane.xlu0 %500
  %v502 = vsel %vm361, %v498, 0.0
  %503 = vadd.xlane.f32.xlu0 %v502
  %v504 = vpop.xlane.xlu0 %503
  %v505 = vrcp.pop %v501
  %v506 = vrcp.pop %v504
  %v507 = vmul.f32 %v496, %v505
  %v508 = vmul.f32 %v498, %v506
  %511 = vrot.lane.b32.xlu0 %v182, 96
  %v512 = vpop.permute.xlu0 %511
  %513 = vrot.lane.b32.xlu0 %v188, 96
  %v514 = vpop.permute.xlu0 %513
  %v518 = vsel %vm361, %v507, 0
  %v521 = vsel %vm361, %v508, 0
  %523 = vmatprep.subr.mxu0 0.0
  %524 = vmatpush1.msra.mxu0 %v512
  %525 = vmatprep.subr.mxu0 0.0
  %526 = vmatpush1.msra.mxu0 %v514
  %527 = vmatprep.subr.mxu0 0.0
  %528 = vmatpush1.msra.mxu0 0.0
  %529 = vmatprep.subr.mxu0 0.0
  %530 = vmatpush1.msra.mxu0 0.0
  %531 = vmatprep.subr.mxu0 0.0
  %532 = vmatpush1.msra.mxu0 0.0
  %533 = vmatprep.subr.mxu0 0.0
  %534 = vmatpush1.msra.mxu0 0.0
  %535 = vmatprep.subr.mxu0 0.0
  %536 = vmatpush1.msra.mxu0 0.0
  %537 = vmatprep.subr.mxu0 0.0
  %538 = vmatpush1.msra.mxu0 0.0
  %539 = vmatprep.subr.mxu0 0.0
  %540 = vmatpush1.msra.mxu0 0.0
  %541 = vmatprep.subr.mxu0 0.0
  %542 = vmatpush1.msra.mxu0 0.0
  %543 = vmatprep.subr.mxu0 0.0
  %544 = vmatpush1.msra.mxu0 0.0
  %545 = vmatprep.subr.mxu0 0.0
  %546 = vmatpush1.msra.mxu0 0.0
  %547 = vmatprep.subr.mxu0 0.0
  %548 = vmatpush1.msra.mxu0 0.0
  %549 = vmatprep.subr.mxu0 0.0
  %550 = vmatpush1.msra.mxu0 0.0
  %551 = vmatprep.subr.mxu0 0.0
  %552 = vmatpush1.msra.mxu0 0.0
  %553 = vmatprep.subr.mxu0 0.0
  %554 = vmatpush1.msra.mxu0 0.0
  %555 = vmatprep.subr.mxu0 0.0
  %556 = vmatpush1.msra.mxu0 0.0
  %557 = vmatprep.subr.mxu0 0.0
  %558 = vmatpush1.msra.mxu0 0.0
  %559 = vmatprep.subr.mxu0 0.0
  %560 = vmatpush1.msra.mxu0 0.0
  %561 = vmatprep.subr.mxu0 0.0
  %562 = vmatpush1.msra.mxu0 0.0
  %563 = vmatprep.subr.mxu0 0.0
  %564 = vmatpush1.msra.mxu0 0.0
  %565 = vmatprep.subr.mxu0 0.0
  %566 = vmatpush1.msra.mxu0 0.0
  %567 = vmatprep.subr.mxu0 0.0
  %568 = vmatpush1.msra.mxu0 0.0
  %569 = vmatprep.subr.mxu0 0.0
  %570 = vmatpush1.msra.mxu0 0.0
  %571 = vmatprep.subr.mxu0 0.0
  %572 = vmatpush1.msra.mxu0 0.0
  %573 = vmatprep.subr.mxu0 0.0
  %574 = vmatpush1.msra.mxu0 0.0
  %575 = vmatprep.subr.mxu0 0.0
  %576 = vmatpush1.msra.mxu0 0.0
  %577 = vmatprep.subr.mxu0 0.0
  %578 = vmatpush1.msra.mxu0 0.0
  %579 = vmatprep.subr.mxu0 0.0
  %580 = vmatpush1.msra.mxu0 0.0
  %581 = vmatprep.subr.mxu0 0.0
  %582 = vmatpush1.msra.mxu0 0.0
  %583 = vmatprep.subr.mxu0 0.0
  %584 = vmatpush1.msra.mxu0 0.0
  %585 = vmatprep.subr.mxu0 0.0
  %586 = vmatpush1.msra.mxu0 0.0
  %587 = vmatprep.mubr.f32.mxu0 0.0
  %588 = vmatmul.mubr.f32.gmra.mrb[0].mxu0 %v518
  %v589 = vpop.f32.mrb[0].mxu0
  %v590 = vadd.f32 0.0, %v589
  %v591 = vpop.f32.mrb[0].mxu0
  %592 = vmatprep.mubr.f32.mxu0 0.0
  %593 = vmatmul.mubr.f32.gmra.mrb[0].mxu0 %v521
  %v594 = vpop.f32.mrb[0].mxu0
  %v595 = vadd.f32 0.0, %v594
  %v596 = vpop.f32.mrb[0].mxu0
  %597 = vdwg.mxu0
  %598 = vset.pattern.permute.xlu0 2
  %599 = vperm.xlu0 %598, %v259
  %v600 = vpop.permute.xlu0 %599
  %602 = vset.pattern.permute.xlu0 2
  %603 = vperm.xlu0 %602, %v264
  %v604 = vpop.permute.xlu0 %603
  %v606 = vlaneseq
  %v607 = vshrl.u32 %v606, 7
  %v608 = vsub.s32 2, %v607
  %v609 = vrot.slane %v334, %v608
  %v610 = vadd.f32 %v600, %v609
  %v611 = vadd.f32 %v604, %v609
  %vm612 = vcmp.ge.f32.partialorder %v610, 0.0
  %vm613 = vcmp.ge.f32.partialorder %v611, 0.0
  %v614 = vmul.f32 %v610, 0.2
  %v615 = vmul.f32 %v611, 0.2
  %v616 = vsel %vm612, %v610, %v614
  %v617 = vsel %vm613, %v611, %v615
  %v618 = vsel %vm63, %v616, -1e+30
  %v619 = vsel %vm64, %v617, -1e+30
  %v620 = vsel %vm361, %v618, -inf
  %621 = vmax.xlane.f32.xlu0 %v620
  %v622 = vpop.xlane.xlu0 %621
  %v623 = vsel %vm361, %v619, -inf
  %624 = vmax.xlane.f32.xlu0 %v623
  %v625 = vpop.xlane.xlu0 %624
  %v626 = vsub.f32 %v618, %v622
  %v627 = vsub.f32 %v619, %v625
  %v628 = vmul.f32 %v626, 1.442695
  %v629 = vpow.pop %v628
  %v630 = vmul.f32 %v627, 1.442695
  %v631 = vpow.pop %v630
  %v632 = vsel %vm361, %v629, 0.0
  %633 = vadd.xlane.f32.xlu0 %v632
  %v634 = vpop.xlane.xlu0 %633
  %v635 = vsel %vm361, %v631, 0.0
  %636 = vadd.xlane.f32.xlu0 %v635
  %v637 = vpop.xlane.xlu0 %636
  %v638 = vrcp.pop %v634
  %v639 = vrcp.pop %v637
  %v640 = vmul.f32 %v629, %v638
  %v641 = vmul.f32 %v631, %v639
  %642 = vrot.lane.b32.xlu0 %v182, 64
  %v643 = vpop.permute.xlu0 %642
  %644 = vrot.lane.b32.xlu0 %v188, 64
  %v645 = vpop.permute.xlu0 %644
  %v649 = vsel %vm361, %v640, 0
  %v652 = vsel %vm361, %v641, 0
  %654 = vmatprep.subr.mxu0 0.0
  %655 = vmatpush1.msra.mxu0 %v643
  %656 = vmatprep.subr.mxu0 0.0
  %657 = vmatpush1.msra.mxu0 %v645
  %658 = vmatprep.subr.mxu0 0.0
  %659 = vmatpush1.msra.mxu0 0.0
  %660 = vmatprep.subr.mxu0 0.0
  %661 = vmatpush1.msra.mxu0 0.0
  %662 = vmatprep.subr.mxu0 0.0
  %663 = vmatpush1.msra.mxu0 0.0
  %664 = vmatprep.subr.mxu0 0.0
  %665 = vmatpush1.msra.mxu0 0.0
  %666 = vmatprep.subr.mxu0 0.0
  %667 = vmatpush1.msra.mxu0 0.0
  %668 = vmatprep.subr.mxu0 0.0
  %669 = vmatpush1.msra.mxu0 0.0
  %670 = vmatprep.subr.mxu0 0.0
  %671 = vmatpush1.msra.mxu0 0.0
  %672 = vmatprep.subr.mxu0 0.0
  %673 = vmatpush1.msra.mxu0 0.0
  %674 = vmatprep.subr.mxu0 0.0
  %675 = vmatpush1.msra.mxu0 0.0
  %676 = vmatprep.subr.mxu0 0.0
  %677 = vmatpush1.msra.mxu0 0.0
  %678 = vmatprep.subr.mxu0 0.0
  %679 = vmatpush1.msra.mxu0 0.0
  %680 = vmatprep.subr.mxu0 0.0
  %681 = vmatpush1.msra.mxu0 0.0
  %682 = vmatprep.subr.mxu0 0.0
  %683 = vmatpush1.msra.mxu0 0.0
  %684 = vmatprep.subr.mxu0 0.0
  %685 = vmatpush1.msra.mxu0 0.0
  %686 = vmatprep.subr.mxu0 0.0
  %687 = vmatpush1.msra.mxu0 0.0
  %688 = vmatprep.subr.mxu0 0.0
  %689 = vmatpush1.msra.mxu0 0.0
  %690 = vmatprep.subr.mxu0 0.0
  %691 = vmatpush1.msra.mxu0 0.0
  %692 = vmatprep.subr.mxu0 0.0
  %693 = vmatpush1.msra.mxu0 0.0
  %694 = vmatprep.subr.mxu0 0.0
  %695 = vmatpush1.msra.mxu0 0.0
  %696 = vmatprep.subr.mxu0 0.0
  %697 = vmatpush1.msra.mxu0 0.0
  %698 = vmatprep.subr.mxu0 0.0
  %699 = vmatpush1.msra.mxu0 0.0
  %700 = vmatprep.subr.mxu0 0.0
  %701 = vmatpush1.msra.mxu0 0.0
  %702 = vmatprep.subr.mxu0 0.0
  %703 = vmatpush1.msra.mxu0 0.0
  %704 = vmatprep.subr.mxu0 0.0
  %705 = vmatpush1.msra.mxu0 0.0
  %706 = vmatprep.subr.mxu0 0.0
  %707 = vmatpush1.msra.mxu0 0.0
  %708 = vmatprep.subr.mxu0 0.0
  %709 = vmatpush1.msra.mxu0 0.0
  %710 = vmatprep.subr.mxu0 0.0
  %711 = vmatpush1.msra.mxu0 0.0
  %712 = vmatprep.subr.mxu0 0.0
  %713 = vmatpush1.msra.mxu0 0.0
  %714 = vmatprep.subr.mxu0 0.0
  %715 = vmatpush1.msra.mxu0 0.0
  %716 = vmatprep.subr.mxu0 0.0
  %717 = vmatpush1.msra.mxu0 0.0
  %718 = vmatprep.mubr.f32.mxu0 0.0
  %719 = vmatmul.mubr.f32.gmra.mrb[0].mxu0 %v649
  %v720 = vpop.f32.mrb[0].mxu0
  %v721 = vadd.f32 0.0, %v720
  %v722 = vpop.f32.mrb[0].mxu0
  %723 = vmatprep.mubr.f32.mxu0 0.0
  %724 = vmatmul.mubr.f32.gmra.mrb[0].mxu0 %v652
  %v725 = vpop.f32.mrb[0].mxu0
  %v726 = vadd.f32 0.0, %v725
  %v727 = vpop.f32.mrb[0].mxu0
  %728 = vdwg.mxu0
  %729 = vset.pattern.permute.xlu0 3
  %730 = vperm.xlu0 %729, %v259
  %v731 = vpop.permute.xlu0 %730
  %733 = vset.pattern.permute.xlu0 3
  %734 = vperm.xlu0 %733, %v264
  %v735 = vpop.permute.xlu0 %734
  %v737 = vlaneseq
  %v738 = vshrl.u32 %v737, 7
  %v739 = vsub.s32 3, %v738
  %v740 = vrot.slane %v334, %v739
  %v741 = vadd.f32 %v731, %v740
  %v742 = vadd.f32 %v735, %v740
  %vm743 = vcmp.ge.f32.partialorder %v741, 0.0
  %vm744 = vcmp.ge.f32.partialorder %v742, 0.0
  %v745 = vmul.f32 %v741, 0.2
  %v746 = vmul.f32 %v742, 0.2
  %v747 = vsel %vm743, %v741, %v745
  %v748 = vsel %vm744, %v742, %v746
  %v749 = vsel %vm63, %v747, -1e+30
  %v750 = vsel %vm64, %v748, -1e+30
  %v751 = vsel %vm361, %v749, -inf
  %752 = vmax.xlane.f32.xlu0 %v751
  %v753 = vpop.xlane.xlu0 %752
  %v754 = vsel %vm361, %v750, -inf
  %755 = vmax.xlane.f32.xlu0 %v754
  %v756 = vpop.xlane.xlu0 %755
  %v757 = vsub.f32 %v749, %v753
  %v758 = vsub.f32 %v750, %v756
  %v759 = vmul.f32 %v757, 1.442695
  %v760 = vpow.pop %v759
  %v761 = vmul.f32 %v758, 1.442695
  %v762 = vpow.pop %v761
  %v763 = vsel %vm361, %v760, 0.0
  %764 = vadd.xlane.f32.xlu0 %v763
  %v765 = vpop.xlane.xlu0 %764
  %v766 = vsel %vm361, %v762, 0.0
  %767 = vadd.xlane.f32.xlu0 %v766
  %v768 = vpop.xlane.xlu0 %767
  %v769 = vrcp.pop %v765
  %v770 = vrcp.pop %v768
  %v771 = vmul.f32 %v760, %v769
  %v772 = vmul.f32 %v762, %v770
  %773 = vrot.lane.b32.xlu0 %v182, 32
  %v774 = vpop.permute.xlu0 %773
  %775 = vrot.lane.b32.xlu0 %v188, 32
  %v776 = vpop.permute.xlu0 %775
  %v780 = vsel %vm361, %v771, 0
  %v783 = vsel %vm361, %v772, 0
  %785 = vmatprep.subr.mxu0 0.0
  %786 = vmatpush1.msra.mxu0 %v774
  %787 = vmatprep.subr.mxu0 0.0
  %788 = vmatpush1.msra.mxu0 %v776
  %789 = vmatprep.subr.mxu0 0.0
  %790 = vmatpush1.msra.mxu0 0.0
  %791 = vmatprep.subr.mxu0 0.0
  %792 = vmatpush1.msra.mxu0 0.0
  %793 = vmatprep.subr.mxu0 0.0
  %794 = vmatpush1.msra.mxu0 0.0
  %795 = vmatprep.subr.mxu0 0.0
  %796 = vmatpush1.msra.mxu0 0.0
  %797 = vmatprep.subr.mxu0 0.0
  %798 = vmatpush1.msra.mxu0 0.0
  %799 = vmatprep.subr.mxu0 0.0
  %800 = vmatpush1.msra.mxu0 0.0
  %801 = vmatprep.subr.mxu0 0.0
  %802 = vmatpush1.msra.mxu0 0.0
  %803 = vmatprep.subr.mxu0 0.0
  %804 = vmatpush1.msra.mxu0 0.0
  %805 = vmatprep.subr.mxu0 0.0
  %806 = vmatpush1.msra.mxu0 0.0
  %807 = vmatprep.subr.mxu0 0.0
  %808 = vmatpush1.msra.mxu0 0.0
  %809 = vmatprep.subr.mxu0 0.0
  %810 = vmatpush1.msra.mxu0 0.0
  %811 = vmatprep.subr.mxu0 0.0
  %812 = vmatpush1.msra.mxu0 0.0
  %813 = vmatprep.subr.mxu0 0.0
  %814 = vmatpush1.msra.mxu0 0.0
  %815 = vmatprep.subr.mxu0 0.0
  %816 = vmatpush1.msra.mxu0 0.0
  %817 = vmatprep.subr.mxu0 0.0
  %818 = vmatpush1.msra.mxu0 0.0
  %819 = vmatprep.subr.mxu0 0.0
  %820 = vmatpush1.msra.mxu0 0.0
  %821 = vmatprep.subr.mxu0 0.0
  %822 = vmatpush1.msra.mxu0 0.0
  %823 = vmatprep.subr.mxu0 0.0
  %824 = vmatpush1.msra.mxu0 0.0
  %825 = vmatprep.subr.mxu0 0.0
  %826 = vmatpush1.msra.mxu0 0.0
  %827 = vmatprep.subr.mxu0 0.0
  %828 = vmatpush1.msra.mxu0 0.0
  %829 = vmatprep.subr.mxu0 0.0
  %830 = vmatpush1.msra.mxu0 0.0
  %831 = vmatprep.subr.mxu0 0.0
  %832 = vmatpush1.msra.mxu0 0.0
  %833 = vmatprep.subr.mxu0 0.0
  %834 = vmatpush1.msra.mxu0 0.0
  %835 = vmatprep.subr.mxu0 0.0
  %836 = vmatpush1.msra.mxu0 0.0
  %837 = vmatprep.subr.mxu0 0.0
  %838 = vmatpush1.msra.mxu0 0.0
  %839 = vmatprep.subr.mxu0 0.0
  %840 = vmatpush1.msra.mxu0 0.0
  %841 = vmatprep.subr.mxu0 0.0
  %842 = vmatpush1.msra.mxu0 0.0
  %843 = vmatprep.subr.mxu0 0.0
  %844 = vmatpush1.msra.mxu0 0.0
  %845 = vmatprep.subr.mxu0 0.0
  %846 = vmatpush1.msra.mxu0 0.0
  %847 = vmatprep.subr.mxu0 0.0
  %848 = vmatpush1.msra.mxu0 0.0
  %849 = vmatprep.mubr.f32.mxu0 0.0
  %850 = vmatmul.mubr.f32.gmra.mrb[0].mxu0 %v780
  %v851 = vpop.f32.mrb[0].mxu0
  %v852 = vadd.f32 0.0, %v851
  %v853 = vpop.f32.mrb[0].mxu0
  %854 = vmatprep.mubr.f32.mxu0 0.0
  %855 = vmatmul.mubr.f32.gmra.mrb[0].mxu0 %v783
  %v856 = vpop.f32.mrb[0].mxu0
  %v857 = vadd.f32 0.0, %v856
  %v858 = vpop.f32.mrb[0].mxu0
  %859 = vdwg.mxu0
  %860 = vset.pattern.permute.xlu0 4
  %861 = vperm.xlu0 %860, %v259
  %v862 = vpop.permute.xlu0 %861
  %864 = vset.pattern.permute.xlu0 4
  %865 = vperm.xlu0 %864, %v264
  %v866 = vpop.permute.xlu0 %865
  %v868 = vlaneseq
  %v869 = vshrl.u32 %v868, 7
  %v870 = vsub.s32 4, %v869
  %v871 = vrot.slane %v334, %v870
  %v872 = vadd.f32 %v862, %v871
  %v873 = vadd.f32 %v866, %v871
  %vm874 = vcmp.ge.f32.partialorder %v872, 0.0
  %vm875 = vcmp.ge.f32.partialorder %v873, 0.0
  %v876 = vmul.f32 %v872, 0.2
  %v877 = vmul.f32 %v873, 0.2
  %v878 = vsel %vm874, %v872, %v876
  %v879 = vsel %vm875, %v873, %v877
  %v880 = vsel %vm63, %v878, -1e+30
  %v881 = vsel %vm64, %v879, -1e+30
  %v882 = vsel %vm361, %v880, -inf
  %883 = vmax.xlane.f32.xlu0 %v882
  %v884 = vpop.xlane.xlu0 %883
  %v885 = vsel %vm361, %v881, -inf
  %886 = vmax.xlane.f32.xlu0 %v885
  %v887 = vpop.xlane.xlu0 %886
  %v888 = vsub.f32 %v880, %v884
  %v889 = vsub.f32 %v881, %v887
  %v890 = vmul.f32 %v888, 1.442695
  %v891 = vpow.pop %v890
  %v892 = vmul.f32 %v889, 1.442695
  %v893 = vpow.pop %v892
  %v894 = vsel %vm361, %v891, 0.0
  %895 = vadd.xlane.f32.xlu0 %v894
  %v896 = vpop.xlane.xlu0 %895
  %v897 = vsel %vm361, %v893, 0.0
  %898 = vadd.xlane.f32.xlu0 %v897
  %v899 = vpop.xlane.xlu0 %898
  %v900 = vrcp.pop %v896
  %v901 = vrcp.pop %v899
  %v902 = vmul.f32 %v891, %v900
  %v903 = vmul.f32 %v893, %v901
  %v905 = vsel %vm361, %v902, 0
  %v908 = vsel %vm361, %v903, 0
  %910 = vmatprep.subr.mxu0 0.0
  %911 = vmatpush1.msra.mxu0 %v184
  %912 = vmatprep.subr.mxu0 0.0
  %913 = vmatpush1.msra.mxu0 %v190
  %914 = vmatprep.subr.mxu0 0.0
  %915 = vmatpush1.msra.mxu0 0.0
  %916 = vmatprep.subr.mxu0 0.0
  %917 = vmatpush1.msra.mxu0 0.0
  %918 = vmatprep.subr.mxu0 0.0
  %919 = vmatpush1.msra.mxu0 0.0
  %920 = vmatprep.subr.mxu0 0.0
  %921 = vmatpush1.msra.mxu0 0.0
  %922 = vmatprep.subr.mxu0 0.0
  %923 = vmatpush1.msra.mxu0 0.0
  %924 = vmatprep.subr.mxu0 0.0
  %925 = vmatpush1.msra.mxu0 0.0
  %926 = vmatprep.subr.mxu0 0.0
  %927 = vmatpush1.msra.mxu0 0.0
  %928 = vmatprep.subr.mxu0 0.0
  %929 = vmatpush1.msra.mxu0 0.0
  %930 = vmatprep.subr.mxu0 0.0
  %931 = vmatpush1.msra.mxu0 0.0
  %932 = vmatprep.subr.mxu0 0.0
  %933 = vmatpush1.msra.mxu0 0.0
  %934 = vmatprep.subr.mxu0 0.0
  %935 = vmatpush1.msra.mxu0 0.0
  %936 = vmatprep.subr.mxu0 0.0
  %937 = vmatpush1.msra.mxu0 0.0
  %938 = vmatprep.subr.mxu0 0.0
  %939 = vmatpush1.msra.mxu0 0.0
  %940 = vmatprep.subr.mxu0 0.0
  %941 = vmatpush1.msra.mxu0 0.0
  %942 = vmatprep.subr.mxu0 0.0
  %943 = vmatpush1.msra.mxu0 0.0
  %944 = vmatprep.subr.mxu0 0.0
  %945 = vmatpush1.msra.mxu0 0.0
  %946 = vmatprep.subr.mxu0 0.0
  %947 = vmatpush1.msra.mxu0 0.0
  %948 = vmatprep.subr.mxu0 0.0
  %949 = vmatpush1.msra.mxu0 0.0
  %950 = vmatprep.subr.mxu0 0.0
  %951 = vmatpush1.msra.mxu0 0.0
  %952 = vmatprep.subr.mxu0 0.0
  %953 = vmatpush1.msra.mxu0 0.0
  %954 = vmatprep.subr.mxu0 0.0
  %955 = vmatpush1.msra.mxu0 0.0
  %956 = vmatprep.subr.mxu0 0.0
  %957 = vmatpush1.msra.mxu0 0.0
  %958 = vmatprep.subr.mxu0 0.0
  %959 = vmatpush1.msra.mxu0 0.0
  %960 = vmatprep.subr.mxu0 0.0
  %961 = vmatpush1.msra.mxu0 0.0
  %962 = vmatprep.subr.mxu0 0.0
  %963 = vmatpush1.msra.mxu0 0.0
  %964 = vmatprep.subr.mxu0 0.0
  %965 = vmatpush1.msra.mxu0 0.0
  %966 = vmatprep.subr.mxu0 0.0
  %967 = vmatpush1.msra.mxu0 0.0
  %968 = vmatprep.subr.mxu0 0.0
  %969 = vmatpush1.msra.mxu0 0.0
  %970 = vmatprep.subr.mxu0 0.0
  %971 = vmatpush1.msra.mxu0 0.0
  %972 = vmatprep.subr.mxu0 0.0
  %973 = vmatpush1.msra.mxu0 0.0
  %974 = vmatprep.mubr.f32.mxu0 0.0
  %975 = vmatmul.mubr.f32.gmra.mrb[0].mxu0 %v905
  %v976 = vpop.f32.mrb[0].mxu0
  %v977 = vadd.f32 0.0, %v976
  %v978 = vpop.f32.mrb[0].mxu0
  %979 = vmatprep.mubr.f32.mxu0 0.0
  %980 = vmatmul.mubr.f32.gmra.mrb[0].mxu0 %v908
  %v981 = vpop.f32.mrb[0].mxu0
  %v982 = vadd.f32 0.0, %v981
  %v983 = vpop.f32.mrb[0].mxu0
  %984 = vdwg.mxu0
  %985 = vset.pattern.permute.xlu0 5
  %986 = vperm.xlu0 %985, %v259
  %v987 = vpop.permute.xlu0 %986
  %989 = vset.pattern.permute.xlu0 5
  %990 = vperm.xlu0 %989, %v264
  %v991 = vpop.permute.xlu0 %990
  %v993 = vlaneseq
  %v994 = vshrl.u32 %v993, 7
  %v995 = vsub.s32 5, %v994
  %v996 = vrot.slane %v334, %v995
  %v997 = vadd.f32 %v987, %v996
  %v998 = vadd.f32 %v991, %v996
  %vm999 = vcmp.ge.f32.partialorder %v997, 0.0
  %vm1000 = vcmp.ge.f32.partialorder %v998, 0.0
  %v1001 = vmul.f32 %v997, 0.2
  %v1002 = vmul.f32 %v998, 0.2
  %v1003 = vsel %vm999, %v997, %v1001
  %v1004 = vsel %vm1000, %v998, %v1002
  %v1005 = vsel %vm63, %v1003, -1e+30
  %v1006 = vsel %vm64, %v1004, -1e+30
  %v1007 = vsel %vm361, %v1005, -inf
  %1008 = vmax.xlane.f32.xlu0 %v1007
  %v1009 = vpop.xlane.xlu0 %1008
  %v1010 = vsel %vm361, %v1006, -inf
  %1011 = vmax.xlane.f32.xlu0 %v1010
  %v1012 = vpop.xlane.xlu0 %1011
  %v1013 = vsub.f32 %v1005, %v1009
  %v1014 = vsub.f32 %v1006, %v1012
  %v1015 = vmul.f32 %v1013, 1.442695
  %v1016 = vpow.pop %v1015
  %v1017 = vmul.f32 %v1014, 1.442695
  %v1018 = vpow.pop %v1017
  %v1019 = vsel %vm361, %v1016, 0.0
  %1020 = vadd.xlane.f32.xlu0 %v1019
  %v1021 = vpop.xlane.xlu0 %1020
  %v1022 = vsel %vm361, %v1018, 0.0
  %1023 = vadd.xlane.f32.xlu0 %v1022
  %v1024 = vpop.xlane.xlu0 %1023
  %v1025 = vrcp.pop %v1021
  %v1026 = vrcp.pop %v1024
  %v1027 = vmul.f32 %v1016, %v1025
  %v1028 = vmul.f32 %v1018, %v1026
  %1031 = vrot.lane.b32.xlu0 %v184, 96
  %v1032 = vpop.permute.xlu0 %1031
  %1033 = vrot.lane.b32.xlu0 %v190, 96
  %v1034 = vpop.permute.xlu0 %1033
  %v1038 = vsel %vm361, %v1027, 0
  %v1041 = vsel %vm361, %v1028, 0
  %1043 = vmatprep.subr.mxu0 0.0
  %1044 = vmatpush1.msra.mxu0 %v1032
  %1045 = vmatprep.subr.mxu0 0.0
  %1046 = vmatpush1.msra.mxu0 %v1034
  %1047 = vmatprep.subr.mxu0 0.0
  %1048 = vmatpush1.msra.mxu0 0.0
  %1049 = vmatprep.subr.mxu0 0.0
  %1050 = vmatpush1.msra.mxu0 0.0
  %1051 = vmatprep.subr.mxu0 0.0
  %1052 = vmatpush1.msra.mxu0 0.0
  %1053 = vmatprep.subr.mxu0 0.0
  %1054 = vmatpush1.msra.mxu0 0.0
  %1055 = vmatprep.subr.mxu0 0.0
  %1056 = vmatpush1.msra.mxu0 0.0
  %1057 = vmatprep.subr.mxu0 0.0
  %1058 = vmatpush1.msra.mxu0 0.0
  %1059 = vmatprep.subr.mxu0 0.0
  %1060 = vmatpush1.msra.mxu0 0.0
  %1061 = vmatprep.subr.mxu0 0.0
  %1062 = vmatpush1.msra.mxu0 0.0
  %1063 = vmatprep.subr.mxu0 0.0
  %1064 = vmatpush1.msra.mxu0 0.0
  %1065 = vmatprep.subr.mxu0 0.0
  %1066 = vmatpush1.msra.mxu0 0.0
  %1067 = vmatprep.subr.mxu0 0.0
  %1068 = vmatpush1.msra.mxu0 0.0
  %1069 = vmatprep.subr.mxu0 0.0
  %1070 = vmatpush1.msra.mxu0 0.0
  %1071 = vmatprep.subr.mxu0 0.0
  %1072 = vmatpush1.msra.mxu0 0.0
  %1073 = vmatprep.subr.mxu0 0.0
  %1074 = vmatpush1.msra.mxu0 0.0
  %1075 = vmatprep.subr.mxu0 0.0
  %1076 = vmatpush1.msra.mxu0 0.0
  %1077 = vmatprep.subr.mxu0 0.0
  %1078 = vmatpush1.msra.mxu0 0.0
  %1079 = vmatprep.subr.mxu0 0.0
  %1080 = vmatpush1.msra.mxu0 0.0
  %1081 = vmatprep.subr.mxu0 0.0
  %1082 = vmatpush1.msra.mxu0 0.0
  %1083 = vmatprep.subr.mxu0 0.0
  %1084 = vmatpush1.msra.mxu0 0.0
  %1085 = vmatprep.subr.mxu0 0.0
  %1086 = vmatpush1.msra.mxu0 0.0
  %1087 = vmatprep.subr.mxu0 0.0
  %1088 = vmatpush1.msra.mxu0 0.0
  %1089 = vmatprep.subr.mxu0 0.0
  %1090 = vmatpush1.msra.mxu0 0.0
  %1091 = vmatprep.subr.mxu0 0.0
  %1092 = vmatpush1.msra.mxu0 0.0
  %1093 = vmatprep.subr.mxu0 0.0
  %1094 = vmatpush1.msra.mxu0 0.0
  %1095 = vmatprep.subr.mxu0 0.0
  %1096 = vmatpush1.msra.mxu0 0.0
  %1097 = vmatprep.subr.mxu0 0.0
  %1098 = vmatpush1.msra.mxu0 0.0
  %1099 = vmatprep.subr.mxu0 0.0
  %1100 = vmatpush1.msra.mxu0 0.0
  %1101 = vmatprep.subr.mxu0 0.0
  %1102 = vmatpush1.msra.mxu0 0.0
  %1103 = vmatprep.subr.mxu0 0.0
  %1104 = vmatpush1.msra.mxu0 0.0
  %1105 = vmatprep.subr.mxu0 0.0
  %1106 = vmatpush1.msra.mxu0 0.0
  %1107 = vmatprep.mubr.f32.mxu0 0.0
  %1108 = vmatmul.mubr.f32.gmra.mrb[0].mxu0 %v1038
  %v1109 = vpop.f32.mrb[0].mxu0
  %v1110 = vadd.f32 0.0, %v1109
  %v1111 = vpop.f32.mrb[0].mxu0
  %1112 = vmatprep.mubr.f32.mxu0 0.0
  %1113 = vmatmul.mubr.f32.gmra.mrb[0].mxu0 %v1041
  %v1114 = vpop.f32.mrb[0].mxu0
  %v1115 = vadd.f32 0.0, %v1114
  %v1116 = vpop.f32.mrb[0].mxu0
  %1117 = vdwg.mxu0
  %1118 = vset.pattern.permute.xlu0 6
  %1119 = vperm.xlu0 %1118, %v259
  %v1120 = vpop.permute.xlu0 %1119
  %1122 = vset.pattern.permute.xlu0 6
  %1123 = vperm.xlu0 %1122, %v264
  %v1124 = vpop.permute.xlu0 %1123
  %v1126 = vlaneseq
  %v1127 = vshrl.u32 %v1126, 7
  %v1128 = vsub.s32 6, %v1127
  %v1129 = vrot.slane %v334, %v1128
  %v1130 = vadd.f32 %v1120, %v1129
  %v1131 = vadd.f32 %v1124, %v1129
  %vm1132 = vcmp.ge.f32.partialorder %v1130, 0.0
  %vm1133 = vcmp.ge.f32.partialorder %v1131, 0.0
  %v1134 = vmul.f32 %v1130, 0.2
  %v1135 = vmul.f32 %v1131, 0.2
  %v1136 = vsel %vm1132, %v1130, %v1134
  %v1137 = vsel %vm1133, %v1131, %v1135
  %v1138 = vsel %vm63, %v1136, -1e+30
  %v1139 = vsel %vm64, %v1137, -1e+30
  %v1140 = vsel %vm361, %v1138, -inf
  %1141 = vmax.xlane.f32.xlu0 %v1140
  %v1142 = vpop.xlane.xlu0 %1141
  %v1143 = vsel %vm361, %v1139, -inf
  %1144 = vmax.xlane.f32.xlu0 %v1143
  %v1145 = vpop.xlane.xlu0 %1144
  %v1146 = vsub.f32 %v1138, %v1142
  %v1147 = vsub.f32 %v1139, %v1145
  %v1148 = vmul.f32 %v1146, 1.442695
  %v1149 = vpow.pop %v1148
  %v1150 = vmul.f32 %v1147, 1.442695
  %v1151 = vpow.pop %v1150
  %v1152 = vsel %vm361, %v1149, 0.0
  %1153 = vadd.xlane.f32.xlu0 %v1152
  %v1154 = vpop.xlane.xlu0 %1153
  %v1155 = vsel %vm361, %v1151, 0.0
  %1156 = vadd.xlane.f32.xlu0 %v1155
  %v1157 = vpop.xlane.xlu0 %1156
  %v1158 = vrcp.pop %v1154
  %v1159 = vrcp.pop %v1157
  %v1160 = vmul.f32 %v1149, %v1158
  %v1161 = vmul.f32 %v1151, %v1159
  %1162 = vrot.lane.b32.xlu0 %v184, 64
  %v1163 = vpop.permute.xlu0 %1162
  %1164 = vrot.lane.b32.xlu0 %v190, 64
  %v1165 = vpop.permute.xlu0 %1164
  %v1169 = vsel %vm361, %v1160, 0
  %v1172 = vsel %vm361, %v1161, 0
  %1174 = vmatprep.subr.mxu0 0.0
  %1175 = vmatpush1.msra.mxu0 %v1163
  %1176 = vmatprep.subr.mxu0 0.0
  %1177 = vmatpush1.msra.mxu0 %v1165
  %1178 = vmatprep.subr.mxu0 0.0
  %1179 = vmatpush1.msra.mxu0 0.0
  %1180 = vmatprep.subr.mxu0 0.0
  %1181 = vmatpush1.msra.mxu0 0.0
  %1182 = vmatprep.subr.mxu0 0.0
  %1183 = vmatpush1.msra.mxu0 0.0
  %1184 = vmatprep.subr.mxu0 0.0
  %1185 = vmatpush1.msra.mxu0 0.0
  %1186 = vmatprep.subr.mxu0 0.0
  %1187 = vmatpush1.msra.mxu0 0.0
  %1188 = vmatprep.subr.mxu0 0.0
  %1189 = vmatpush1.msra.mxu0 0.0
  %1190 = vmatprep.subr.mxu0 0.0
  %1191 = vmatpush1.msra.mxu0 0.0
  %1192 = vmatprep.subr.mxu0 0.0
  %1193 = vmatpush1.msra.mxu0 0.0
  %1194 = vmatprep.subr.mxu0 0.0
  %1195 = vmatpush1.msra.mxu0 0.0
  %1196 = vmatprep.subr.mxu0 0.0
  %1197 = vmatpush1.msra.mxu0 0.0
  %1198 = vmatprep.subr.mxu0 0.0
  %1199 = vmatpush1.msra.mxu0 0.0
  %1200 = vmatprep.subr.mxu0 0.0
  %1201 = vmatpush1.msra.mxu0 0.0
  %1202 = vmatprep.subr.mxu0 0.0
  %1203 = vmatpush1.msra.mxu0 0.0
  %1204 = vmatprep.subr.mxu0 0.0
  %1205 = vmatpush1.msra.mxu0 0.0
  %1206 = vmatprep.subr.mxu0 0.0
  %1207 = vmatpush1.msra.mxu0 0.0
  %1208 = vmatprep.subr.mxu0 0.0
  %1209 = vmatpush1.msra.mxu0 0.0
  %1210 = vmatprep.subr.mxu0 0.0
  %1211 = vmatpush1.msra.mxu0 0.0
  %1212 = vmatprep.subr.mxu0 0.0
  %1213 = vmatpush1.msra.mxu0 0.0
  %1214 = vmatprep.subr.mxu0 0.0
  %1215 = vmatpush1.msra.mxu0 0.0
  %1216 = vmatprep.subr.mxu0 0.0
  %1217 = vmatpush1.msra.mxu0 0.0
  %1218 = vmatprep.subr.mxu0 0.0
  %1219 = vmatpush1.msra.mxu0 0.0
  %1220 = vmatprep.subr.mxu0 0.0
  %1221 = vmatpush1.msra.mxu0 0.0
  %1222 = vmatprep.subr.mxu0 0.0
  %1223 = vmatpush1.msra.mxu0 0.0
  %1224 = vmatprep.subr.mxu0 0.0
  %1225 = vmatpush1.msra.mxu0 0.0
  %1226 = vmatprep.subr.mxu0 0.0
  %1227 = vmatpush1.msra.mxu0 0.0
  %1228 = vmatprep.subr.mxu0 0.0
  %1229 = vmatpush1.msra.mxu0 0.0
  %1230 = vmatprep.subr.mxu0 0.0
  %1231 = vmatpush1.msra.mxu0 0.0
  %1232 = vmatprep.subr.mxu0 0.0
  %1233 = vmatpush1.msra.mxu0 0.0
  %1234 = vmatprep.subr.mxu0 0.0
  %1235 = vmatpush1.msra.mxu0 0.0
  %1236 = vmatprep.subr.mxu0 0.0
  %1237 = vmatpush1.msra.mxu0 0.0
  %1238 = vmatprep.mubr.f32.mxu0 0.0
  %1239 = vmatmul.mubr.f32.gmra.mrb[0].mxu0 %v1169
  %v1240 = vpop.f32.mrb[0].mxu0
  %v1241 = vadd.f32 0.0, %v1240
  %v1242 = vpop.f32.mrb[0].mxu0
  %1243 = vmatprep.mubr.f32.mxu0 0.0
  %1244 = vmatmul.mubr.f32.gmra.mrb[0].mxu0 %v1172
  %v1245 = vpop.f32.mrb[0].mxu0
  %v1246 = vadd.f32 0.0, %v1245
  %v1247 = vpop.f32.mrb[0].mxu0
  %1248 = vdwg.mxu0
  %1249 = vset.pattern.permute.xlu0 7
  %1250 = vperm.xlu0 %1249, %v259
  %v1251 = vpop.permute.xlu0 %1250
  %1253 = vset.pattern.permute.xlu0 7
  %1254 = vperm.xlu0 %1253, %v264
  %v1255 = vpop.permute.xlu0 %1254
  %v1257 = vlaneseq
  %v1258 = vshrl.u32 %v1257, 7
  %v1259 = vsub.s32 7, %v1258
  %v1260 = vrot.slane %v334, %v1259
  %v1261 = vadd.f32 %v1251, %v1260
  %v1262 = vadd.f32 %v1255, %v1260
  %vm1263 = vcmp.ge.f32.partialorder %v1261, 0.0
  %vm1264 = vcmp.ge.f32.partialorder %v1262, 0.0
  %v1265 = vmul.f32 %v1261, 0.2
  %v1266 = vmul.f32 %v1262, 0.2
  %v1267 = vsel %vm1263, %v1261, %v1265
  %v1268 = vsel %vm1264, %v1262, %v1266
  %v1269 = vsel %vm63, %v1267, -1e+30
  %v1270 = vsel %vm64, %v1268, -1e+30
  %v1271 = vsel %vm361, %v1269, -inf
  %1272 = vmax.xlane.f32.xlu0 %v1271
  %v1273 = vpop.xlane.xlu0 %1272
  %v1274 = vsel %vm361, %v1270, -inf
  %1275 = vmax.xlane.f32.xlu0 %v1274
  %v1276 = vpop.xlane.xlu0 %1275
  %v1277 = vsub.f32 %v1269, %v1273
  %v1278 = vsub.f32 %v1270, %v1276
  %v1279 = vmul.f32 %v1277, 1.442695
  %v1280 = vpow.pop %v1279
  %v1281 = vmul.f32 %v1278, 1.442695
  %v1282 = vpow.pop %v1281
  %v1283 = vsel %vm361, %v1280, 0.0
  %1284 = vadd.xlane.f32.xlu0 %v1283
  %v1285 = vpop.xlane.xlu0 %1284
  %v1286 = vsel %vm361, %v1282, 0.0
  %1287 = vadd.xlane.f32.xlu0 %v1286
  %v1288 = vpop.xlane.xlu0 %1287
  %v1289 = vrcp.pop %v1285
  %v1290 = vrcp.pop %v1288
  %v1291 = vmul.f32 %v1280, %v1289
  %v1292 = vmul.f32 %v1282, %v1290
  %1293 = vrot.lane.b32.xlu0 %v184, 32
  %v1294 = vpop.permute.xlu0 %1293
  %1295 = vrot.lane.b32.xlu0 %v190, 32
  %v1296 = vpop.permute.xlu0 %1295
  %v1300 = vsel %vm361, %v1291, 0
  %v1303 = vsel %vm361, %v1292, 0
  %1305 = vmatprep.subr.mxu0 0.0
  %1306 = vmatpush1.msra.mxu0 %v1294
  %1307 = vmatprep.subr.mxu0 0.0
  %1308 = vmatpush1.msra.mxu0 %v1296
  %1309 = vmatprep.subr.mxu0 0.0
  %1310 = vmatpush1.msra.mxu0 0.0
  %1311 = vmatprep.subr.mxu0 0.0
  %1312 = vmatpush1.msra.mxu0 0.0
  %1313 = vmatprep.subr.mxu0 0.0
  %1314 = vmatpush1.msra.mxu0 0.0
  %1315 = vmatprep.subr.mxu0 0.0
  %1316 = vmatpush1.msra.mxu0 0.0
  %1317 = vmatprep.subr.mxu0 0.0
  %1318 = vmatpush1.msra.mxu0 0.0
  %1319 = vmatprep.subr.mxu0 0.0
  %1320 = vmatpush1.msra.mxu0 0.0
  %1321 = vmatprep.subr.mxu0 0.0
  %1322 = vmatpush1.msra.mxu0 0.0
  %1323 = vmatprep.subr.mxu0 0.0
  %1324 = vmatpush1.msra.mxu0 0.0
  %1325 = vmatprep.subr.mxu0 0.0
  %1326 = vmatpush1.msra.mxu0 0.0
  %1327 = vmatprep.subr.mxu0 0.0
  %1328 = vmatpush1.msra.mxu0 0.0
  %1329 = vmatprep.subr.mxu0 0.0
  %1330 = vmatpush1.msra.mxu0 0.0
  %1331 = vmatprep.subr.mxu0 0.0
  %1332 = vmatpush1.msra.mxu0 0.0
  %1333 = vmatprep.subr.mxu0 0.0
  %1334 = vmatpush1.msra.mxu0 0.0
  %1335 = vmatprep.subr.mxu0 0.0
  %1336 = vmatpush1.msra.mxu0 0.0
  %1337 = vmatprep.subr.mxu0 0.0
  %1338 = vmatpush1.msra.mxu0 0.0
  %1339 = vmatprep.subr.mxu0 0.0
  %1340 = vmatpush1.msra.mxu0 0.0
  %1341 = vmatprep.subr.mxu0 0.0
  %1342 = vmatpush1.msra.mxu0 0.0
  %1343 = vmatprep.subr.mxu0 0.0
  %1344 = vmatpush1.msra.mxu0 0.0
  %1345 = vmatprep.subr.mxu0 0.0
  %1346 = vmatpush1.msra.mxu0 0.0
  %1347 = vmatprep.subr.mxu0 0.0
  %1348 = vmatpush1.msra.mxu0 0.0
  %1349 = vmatprep.subr.mxu0 0.0
  %1350 = vmatpush1.msra.mxu0 0.0
  %1351 = vmatprep.subr.mxu0 0.0
  %1352 = vmatpush1.msra.mxu0 0.0
  %1353 = vmatprep.subr.mxu0 0.0
  %1354 = vmatpush1.msra.mxu0 0.0
  %1355 = vmatprep.subr.mxu0 0.0
  %1356 = vmatpush1.msra.mxu0 0.0
  %1357 = vmatprep.subr.mxu0 0.0
  %1358 = vmatpush1.msra.mxu0 0.0
  %1359 = vmatprep.subr.mxu0 0.0
  %1360 = vmatpush1.msra.mxu0 0.0
  %1361 = vmatprep.subr.mxu0 0.0
  %1362 = vmatpush1.msra.mxu0 0.0
  %1363 = vmatprep.subr.mxu0 0.0
  %1364 = vmatpush1.msra.mxu0 0.0
  %1365 = vmatprep.subr.mxu0 0.0
  %1366 = vmatpush1.msra.mxu0 0.0
  %1367 = vmatprep.subr.mxu0 0.0
  %1368 = vmatpush1.msra.mxu0 0.0
  %1369 = vmatprep.mubr.f32.mxu0 0.0
  %1370 = vmatmul.mubr.f32.gmra.mrb[0].mxu0 %v1300
  %v1371 = vpop.f32.mrb[0].mxu0
  %v1372 = vadd.f32 0.0, %v1371
  %v1373 = vpop.f32.mrb[0].mxu0
  %1374 = vmatprep.mubr.f32.mxu0 0.0
  %1375 = vmatmul.mubr.f32.gmra.mrb[0].mxu0 %v1303
  %v1376 = vpop.f32.mrb[0].mxu0
  %v1377 = vadd.f32 0.0, %v1376
  %v1378 = vpop.f32.mrb[0].mxu0
  %1379 = vdwg.mxu0
  %1382 = vrot.lane.b32.xlu0 %v590, 32
  %v1383 = vpop.permute.xlu0 %1382
  %1384 = vrot.lane.b32.xlu0 %v595, 32
  %v1385 = vpop.permute.xlu0 %1384
  %1390 = vrot.lane.b32.xlu0 %v721, 64
  %v1391 = vpop.permute.xlu0 %1390
  %1392 = vrot.lane.b32.xlu0 %v726, 64
  %v1393 = vpop.permute.xlu0 %1392
  %1398 = vrot.lane.b32.xlu0 %v852, 96
  %v1399 = vpop.permute.xlu0 %1398
  %1400 = vrot.lane.b32.xlu0 %v857, 96
  %v1401 = vpop.permute.xlu0 %1400
  %1406 = vrot.lane.b32.xlu0 %v1110, 32
  %v1407 = vpop.permute.xlu0 %1406
  %1408 = vrot.lane.b32.xlu0 %v1115, 32
  %v1409 = vpop.permute.xlu0 %1408
  %1414 = vrot.lane.b32.xlu0 %v1241, 64
  %v1415 = vpop.permute.xlu0 %1414
  %1416 = vrot.lane.b32.xlu0 %v1246, 64
  %v1417 = vpop.permute.xlu0 %1416
  %1422 = vrot.lane.b32.xlu0 %v1372, 96
  %v1423 = vpop.permute.xlu0 %1422
  %1424 = vrot.lane.b32.xlu0 %v1377, 96
  %v1425 = vpop.permute.xlu0 %1424
  %v1428 = vsel %vm108, %v457, %v1383
  %v1429 = vsel %vm108, %v462, %v1385
  %vm1430 = vcmask 523264
  %v1431 = vsel %vm1430, %v1428, %v1391
  %v1432 = vsel %vm1430, %v1429, %v1393
  %vm1433 = vcmask 785408
  %v1434 = vsel %vm1433, %v1431, %v1399
  %v1435 = vsel %vm1433, %v1432, %v1401
  %v1436 = vsel %vm108, %v977, %v1407
  %v1437 = vsel %vm108, %v982, %v1409
  %v1438 = vsel %vm1430, %v1436, %v1415
  %v1439 = vsel %vm1430, %v1437, %v1417
  %v1440 = vsel %vm1433, %v1438, %v1423
  %v1441 = vsel %vm1433, %v1439, %v1425
  %v1443 = vlaneseq
  %v1444 = vshrl.u32 %v1443, 7
  %v1445 = vsub.s32 0, %v1444
  %v1446 = vrot.slane %v107, %v1445
  %v1447 = vlaneseq
  %v1448 = vshrl.u32 %v1447, 7
  %v1449 = vsub.s32 1, %v1448
  %v1450 = vrot.slane %v107, %v1449
  %v1453 = vadd.f32 %v1434, %v1446
  %v1454 = vadd.f32 %v1440, %v1450
  %v1455 = vadd.f32 %v1435, %v1446
  %v1456 = vadd.f32 %v1441, %v1450
  %v1457 = vmax.f32 %v1453, 0.0
  %v1458 = vmax.f32 %v1454, 0.0
  %v1459 = vmax.f32 %v1455, 0.0
  %v1460 = vmax.f32 %v1456, 0.0
  %v1461 = vld [vmem:[%s8] sm:$0xff]
  %v1462 = vld [vmem:[%s8 + $0x8] sm:$0xff]
  %v1463 = vld [vmem:[%s8 + $0x10] sm:$0xff]
  %v1464 = vld [vmem:[%s8 + $0x18] sm:$0xff]
  %v1465 = vld [vmem:[%s8 + $0x20] sm:$0xff]
  %v1466 = vld [vmem:[%s8 + $0x28] sm:$0xff]
  %v1467 = vld [vmem:[%s8 + $0x30] sm:$0xff]
  %v1468 = vld [vmem:[%s8 + $0x38] sm:$0xff]
  %v1469 = vld [vmem:[%s8 + $0x40] sm:$0xff]
  %v1470 = vld [vmem:[%s8 + $0x48] sm:$0xff]
  %v1471 = vld [vmem:[%s8 + $0x50] sm:$0xff]
  %v1472 = vld [vmem:[%s8 + $0x58] sm:$0xff]
  %v1473 = vld [vmem:[%s8 + $0x60] sm:$0xff]
  %v1474 = vld [vmem:[%s8 + $0x68] sm:$0xff]
  %v1475 = vld [vmem:[%s8 + $0x70] sm:$0xff]
  %v1476 = vld [vmem:[%s8 + $0x78] sm:$0xff]
  %v1477 = vld [vmem:[%s8 + $0x80] sm:$0xff]
  %v1478 = vld [vmem:[%s8 + $0x88] sm:$0xff]
  %v1479 = vld [vmem:[%s8 + $0x90] sm:$0xff]
  %v1480 = vld [vmem:[%s8 + $0x98] sm:$0xff]
  %v1481 = vld [vmem:[%s8 + $0xa0] sm:$0xff]
  %v1482 = vld [vmem:[%s8 + $0xa8] sm:$0xff]
  %v1483 = vld [vmem:[%s8 + $0xb0] sm:$0xff]
  %v1484 = vld [vmem:[%s8 + $0xb8] sm:$0xff]
  %v1485 = vld [vmem:[%s8 + $0xc0] sm:$0xff]
  %v1486 = vld [vmem:[%s8 + $0xc8] sm:$0xff]
  %v1487 = vld [vmem:[%s8 + $0xd0] sm:$0xff]
  %v1488 = vld [vmem:[%s8 + $0xd8] sm:$0xff]
  %v1489 = vld [vmem:[%s8 + $0xe0] sm:$0xff]
  %v1490 = vld [vmem:[%s8 + $0xe8] sm:$0xff]
  %v1491 = vld [vmem:[%s8 + $0xf0] sm:$0xff]
  %v1492 = vld [vmem:[%s8 + $0xf8] sm:$0xff]
  %v1493 = vld [vmem:[%s9] sm:$0x1]
  %v1495 = vlaneseq
  %v1496 = vshrl.u32 %v1495, 7
  %v1497 = vsub.s32 0, %v1496
  %v1498 = vrot.slane %v1493, %v1497
  %1500 = vmatprep.subr.mxu0 0.0
  %1501 = vmatpush1.msra.mxu0 %v1461
  %1502 = vmatprep.subr.mxu0 0.0
  %1503 = vmatpush1.msra.mxu0 %v1462
  %1504 = vmatprep.subr.mxu0 0.0
  %1505 = vmatpush1.msra.mxu0 %v1463
  %1506 = vmatprep.subr.mxu0 0.0
  %1507 = vmatpush1.msra.mxu0 %v1464
  %1508 = vmatprep.subr.mxu0 0.0
  %1509 = vmatpush1.msra.mxu0 %v1465
  %1510 = vmatprep.subr.mxu0 0.0
  %1511 = vmatpush1.msra.mxu0 %v1466
  %1512 = vmatprep.subr.mxu0 0.0
  %1513 = vmatpush1.msra.mxu0 %v1467
  %1514 = vmatprep.subr.mxu0 0.0
  %1515 = vmatpush1.msra.mxu0 %v1468
  %1516 = vmatprep.subr.mxu0 0.0
  %1517 = vmatpush1.msra.mxu0 %v1469
  %1518 = vmatprep.subr.mxu0 0.0
  %1519 = vmatpush1.msra.mxu0 %v1470
  %1520 = vmatprep.subr.mxu0 0.0
  %1521 = vmatpush1.msra.mxu0 %v1471
  %1522 = vmatprep.subr.mxu0 0.0
  %1523 = vmatpush1.msra.mxu0 %v1472
  %1524 = vmatprep.subr.mxu0 0.0
  %1525 = vmatpush1.msra.mxu0 %v1473
  %1526 = vmatprep.subr.mxu0 0.0
  %1527 = vmatpush1.msra.mxu0 %v1474
  %1528 = vmatprep.subr.mxu0 0.0
  %1529 = vmatpush1.msra.mxu0 %v1475
  %1530 = vmatprep.subr.mxu0 0.0
  %1531 = vmatpush1.msra.mxu0 %v1476
  %1532 = vmatprep.subr.mxu0 0.0
  %1533 = vmatpush1.msra.mxu0 %v1477
  %1534 = vmatprep.subr.mxu0 0.0
  %1535 = vmatpush1.msra.mxu0 %v1478
  %1536 = vmatprep.subr.mxu0 0.0
  %1537 = vmatpush1.msra.mxu0 %v1479
  %1538 = vmatprep.subr.mxu0 0.0
  %1539 = vmatpush1.msra.mxu0 %v1480
  %1540 = vmatprep.subr.mxu0 0.0
  %1541 = vmatpush1.msra.mxu0 %v1481
  %1542 = vmatprep.subr.mxu0 0.0
  %1543 = vmatpush1.msra.mxu0 %v1482
  %1544 = vmatprep.subr.mxu0 0.0
  %1545 = vmatpush1.msra.mxu0 %v1483
  %1546 = vmatprep.subr.mxu0 0.0
  %1547 = vmatpush1.msra.mxu0 %v1484
  %1548 = vmatprep.subr.mxu0 0.0
  %1549 = vmatpush1.msra.mxu0 %v1485
  %1550 = vmatprep.subr.mxu0 0.0
  %1551 = vmatpush1.msra.mxu0 %v1486
  %1552 = vmatprep.subr.mxu0 0.0
  %1553 = vmatpush1.msra.mxu0 %v1487
  %1554 = vmatprep.subr.mxu0 0.0
  %1555 = vmatpush1.msra.mxu0 %v1488
  %1556 = vmatprep.subr.mxu0 0.0
  %1557 = vmatpush1.msra.mxu0 %v1489
  %1558 = vmatprep.subr.mxu0 0.0
  %1559 = vmatpush1.msra.mxu0 %v1490
  %1560 = vmatprep.subr.mxu0 0.0
  %1561 = vmatpush1.msra.mxu0 %v1491
  %1562 = vmatprep.subr.mxu0 0.0
  %1563 = vmatpush1.msra.mxu0 %v1492
  %1564 = vmatprep.mubr.f32.mxu0 %v1458
  %1565 = vmatmul.mubr.f32.gmra.mrb[0].mxu0 %v1457
  %v1566 = vpop.f32.mrb[0].mxu0
  %v1567 = vadd.f32 %v1498, %v1566
  %v1568 = vpop.f32.mrb[0].mxu0
  %1569 = vmatprep.mubr.f32.mxu0 %v1460
  %1570 = vmatmul.mubr.f32.gmra.mrb[0].mxu0 %v1459
  %v1571 = vpop.f32.mrb[0].mxu0
  %v1572 = vadd.f32 %v1498, %v1571
  %v1573 = vpop.f32.mrb[0].mxu0
  %1574 = vdwg.mxu0
  %v1575 = vld [vmem:[%s10] sm:$0xff]
  %v1576 = vld [vmem:[%s10 + $0x8] sm:$0xff]
  %v1577 = vld [vmem:[%s10 + $0x10] sm:$0xff]
  %v1578 = vld [vmem:[%s10 + $0x18] sm:$0xff]
  %v1579 = vld [vmem:[%s10 + $0x20] sm:$0xff]
  %v1580 = vld [vmem:[%s10 + $0x28] sm:$0xff]
  %v1581 = vld [vmem:[%s10 + $0x30] sm:$0xff]
  %v1582 = vld [vmem:[%s10 + $0x38] sm:$0xff]
  %v1583 = vld [vmem:[%s11] sm:$0xff]
  %v1584 = vld [vmem:[%s11 + $0x8] sm:$0xff]
  %v1585 = vld [vmem:[%s12] sm:$0xff]
  %v1586 = vld [vmem:[%s12 + $0x8] sm:$0xff]
  %v1587 = vld [vmem:[%s12 + $0x10] sm:$0xff]
  %v1588 = vld [vmem:[%s12 + $0x18] sm:$0xff]
  %v1589 = vld [vmem:[%s12 + $0x20] sm:$0xff]
  %v1590 = vld [vmem:[%s12 + $0x28] sm:$0xff]
  %v1591 = vld [vmem:[%s12 + $0x30] sm:$0xff]
  %v1592 = vld [vmem:[%s12 + $0x38] sm:$0xff]
  %v1593 = vld [vmem:[%s12 + $0x40] sm:$0xff]
  %v1594 = vld [vmem:[%s12 + $0x48] sm:$0xff]
  %v1595 = vld [vmem:[%s12 + $0x50] sm:$0xff]
  %v1596 = vld [vmem:[%s12 + $0x58] sm:$0xff]
  %v1597 = vld [vmem:[%s12 + $0x60] sm:$0xff]
  %v1598 = vld [vmem:[%s12 + $0x68] sm:$0xff]
  %v1599 = vld [vmem:[%s12 + $0x70] sm:$0xff]
  %v1600 = vld [vmem:[%s12 + $0x78] sm:$0xff]
  %v1601 = vld [vmem:[%s12 + $0x80] sm:$0xff]
  %v1602 = vld [vmem:[%s12 + $0x88] sm:$0xff]
  %v1603 = vld [vmem:[%s12 + $0x90] sm:$0xff]
  %v1604 = vld [vmem:[%s12 + $0x98] sm:$0xff]
  %v1605 = vld [vmem:[%s12 + $0xa0] sm:$0xff]
  %v1606 = vld [vmem:[%s12 + $0xa8] sm:$0xff]
  %v1607 = vld [vmem:[%s12 + $0xb0] sm:$0xff]
  %v1608 = vld [vmem:[%s12 + $0xb8] sm:$0xff]
  %v1609 = vld [vmem:[%s12 + $0xc0] sm:$0xff]
  %v1610 = vld [vmem:[%s12 + $0xc8] sm:$0xff]
  %v1611 = vld [vmem:[%s12 + $0xd0] sm:$0xff]
  %v1612 = vld [vmem:[%s12 + $0xd8] sm:$0xff]
  %v1613 = vld [vmem:[%s12 + $0xe0] sm:$0xff]
  %v1614 = vld [vmem:[%s12 + $0xe8] sm:$0xff]
  %v1615 = vld [vmem:[%s12 + $0xf0] sm:$0xff]
  %v1616 = vld [vmem:[%s12 + $0xf8] sm:$0xff]
  %v1617 = vld [vmem:[%s13] sm:$0x3]
  %v1619 = vsel %vm108, %v1567, 0
  %v1622 = vsel %vm108, %v1572, 0
  %1624 = vmatprep.subr.mxu0 %v1576
  %1625 = vmatpush1.msra.mxu0 %v1575
  %1626 = vmatprep.subr.mxu0 %v1578
  %1627 = vmatpush1.msra.mxu0 %v1577
  %1628 = vmatprep.subr.mxu0 %v1580
  %1629 = vmatpush1.msra.mxu0 %v1579
  %1630 = vmatprep.subr.mxu0 %v1582
  %1631 = vmatpush1.msra.mxu0 %v1581
  %1632 = vmatprep.subr.mxu0 0.0
  %1633 = vmatpush1.msra.mxu0 0.0
  %1634 = vmatprep.subr.mxu0 0.0
  %1635 = vmatpush1.msra.mxu0 0.0
  %1636 = vmatprep.subr.mxu0 0.0
  %1637 = vmatpush1.msra.mxu0 0.0
  %1638 = vmatprep.subr.mxu0 0.0
  %1639 = vmatpush1.msra.mxu0 0.0
  %1640 = vmatprep.subr.mxu0 0.0
  %1641 = vmatpush1.msra.mxu0 0.0
  %1642 = vmatprep.subr.mxu0 0.0
  %1643 = vmatpush1.msra.mxu0 0.0
  %1644 = vmatprep.subr.mxu0 0.0
  %1645 = vmatpush1.msra.mxu0 0.0
  %1646 = vmatprep.subr.mxu0 0.0
  %1647 = vmatpush1.msra.mxu0 0.0
  %1648 = vmatprep.subr.mxu0 0.0
  %1649 = vmatpush1.msra.mxu0 0.0
  %1650 = vmatprep.subr.mxu0 0.0
  %1651 = vmatpush1.msra.mxu0 0.0
  %1652 = vmatprep.subr.mxu0 0.0
  %1653 = vmatpush1.msra.mxu0 0.0
  %1654 = vmatprep.subr.mxu0 0.0
  %1655 = vmatpush1.msra.mxu0 0.0
  %1656 = vmatprep.subr.mxu0 0.0
  %1657 = vmatpush1.msra.mxu0 0.0
  %1658 = vmatprep.subr.mxu0 0.0
  %1659 = vmatpush1.msra.mxu0 0.0
  %1660 = vmatprep.subr.mxu0 0.0
  %1661 = vmatpush1.msra.mxu0 0.0
  %1662 = vmatprep.subr.mxu0 0.0
  %1663 = vmatpush1.msra.mxu0 0.0
  %1664 = vmatprep.subr.mxu0 0.0
  %1665 = vmatpush1.msra.mxu0 0.0
  %1666 = vmatprep.subr.mxu0 0.0
  %1667 = vmatpush1.msra.mxu0 0.0
  %1668 = vmatprep.subr.mxu0 0.0
  %1669 = vmatpush1.msra.mxu0 0.0
  %1670 = vmatprep.subr.mxu0 0.0
  %1671 = vmatpush1.msra.mxu0 0.0
  %1672 = vmatprep.subr.mxu0 0.0
  %1673 = vmatpush1.msra.mxu0 0.0
  %1674 = vmatprep.subr.mxu0 0.0
  %1675 = vmatpush1.msra.mxu0 0.0
  %1676 = vmatprep.subr.mxu0 0.0
  %1677 = vmatpush1.msra.mxu0 0.0
  %1678 = vmatprep.subr.mxu0 0.0
  %1679 = vmatpush1.msra.mxu0 0.0
  %1680 = vmatprep.subr.mxu0 0.0
  %1681 = vmatpush1.msra.mxu0 0.0
  %1682 = vmatprep.subr.mxu0 0.0
  %1683 = vmatpush1.msra.mxu0 0.0
  %1684 = vmatprep.subr.mxu0 0.0
  %1685 = vmatpush1.msra.mxu0 0.0
  %1686 = vmatprep.subr.mxu0 0.0
  %1687 = vmatpush1.msra.mxu0 0.0
  %1688 = vmatprep.mubr.f32.mxu0 0.0
  %1689 = vmatmul.mubr.f32.gmra.mrb[0].mxu0 %v1619
  %v1690 = vpop.f32.mrb[0].mxu0
  %v1691 = vadd.f32 0.0, %v1690
  %v1692 = vpop.f32.mrb[0].mxu0
  %v1693 = vadd.f32 0.0, %v1692
  %1694 = vmatprep.mubr.f32.mxu0 0.0
  %1695 = vmatmul.mubr.f32.gmra.mrb[0].mxu0 %v1622
  %v1696 = vpop.f32.mrb[0].mxu0
  %v1697 = vadd.f32 0.0, %v1696
  %v1698 = vpop.f32.mrb[0].mxu0
  %v1699 = vadd.f32 0.0, %v1698
  %1700 = vdwg.mxu0
  %1701 = vmatprep.subr.mxu0 0.0
  %1702 = vmatpush1.msra.mxu0 %v1585
  %1703 = vmatprep.subr.mxu0 0.0
  %1704 = vmatpush1.msra.mxu0 %v1586
  %1705 = vmatprep.subr.mxu0 0.0
  %1706 = vmatpush1.msra.mxu0 %v1587
  %1707 = vmatprep.subr.mxu0 0.0
  %1708 = vmatpush1.msra.mxu0 %v1588
  %1709 = vmatprep.subr.mxu0 0.0
  %1710 = vmatpush1.msra.mxu0 %v1589
  %1711 = vmatprep.subr.mxu0 0.0
  %1712 = vmatpush1.msra.mxu0 %v1590
  %1713 = vmatprep.subr.mxu0 0.0
  %1714 = vmatpush1.msra.mxu0 %v1591
  %1715 = vmatprep.subr.mxu0 0.0
  %1716 = vmatpush1.msra.mxu0 %v1592
  %1717 = vmatprep.subr.mxu0 0.0
  %1718 = vmatpush1.msra.mxu0 %v1593
  %1719 = vmatprep.subr.mxu0 0.0
  %1720 = vmatpush1.msra.mxu0 %v1594
  %1721 = vmatprep.subr.mxu0 0.0
  %1722 = vmatpush1.msra.mxu0 %v1595
  %1723 = vmatprep.subr.mxu0 0.0
  %1724 = vmatpush1.msra.mxu0 %v1596
  %1725 = vmatprep.subr.mxu0 0.0
  %1726 = vmatpush1.msra.mxu0 %v1597
  %1727 = vmatprep.subr.mxu0 0.0
  %1728 = vmatpush1.msra.mxu0 %v1598
  %1729 = vmatprep.subr.mxu0 0.0
  %1730 = vmatpush1.msra.mxu0 %v1599
  %1731 = vmatprep.subr.mxu0 0.0
  %1732 = vmatpush1.msra.mxu0 %v1600
  %1733 = vmatprep.subr.mxu0 0.0
  %1734 = vmatpush1.msra.mxu0 %v1601
  %1735 = vmatprep.subr.mxu0 0.0
  %1736 = vmatpush1.msra.mxu0 %v1602
  %1737 = vmatprep.subr.mxu0 0.0
  %1738 = vmatpush1.msra.mxu0 %v1603
  %1739 = vmatprep.subr.mxu0 0.0
  %1740 = vmatpush1.msra.mxu0 %v1604
  %1741 = vmatprep.subr.mxu0 0.0
  %1742 = vmatpush1.msra.mxu0 %v1605
  %1743 = vmatprep.subr.mxu0 0.0
  %1744 = vmatpush1.msra.mxu0 %v1606
  %1745 = vmatprep.subr.mxu0 0.0
  %1746 = vmatpush1.msra.mxu0 %v1607
  %1747 = vmatprep.subr.mxu0 0.0
  %1748 = vmatpush1.msra.mxu0 %v1608
  %1749 = vmatprep.subr.mxu0 0.0
  %1750 = vmatpush1.msra.mxu0 %v1609
  %1751 = vmatprep.subr.mxu0 0.0
  %1752 = vmatpush1.msra.mxu0 %v1610
  %1753 = vmatprep.subr.mxu0 0.0
  %1754 = vmatpush1.msra.mxu0 %v1611
  %1755 = vmatprep.subr.mxu0 0.0
  %1756 = vmatpush1.msra.mxu0 %v1612
  %1757 = vmatprep.subr.mxu0 0.0
  %1758 = vmatpush1.msra.mxu0 %v1613
  %1759 = vmatprep.subr.mxu0 0.0
  %1760 = vmatpush1.msra.mxu0 %v1614
  %1761 = vmatprep.subr.mxu0 0.0
  %1762 = vmatpush1.msra.mxu0 %v1615
  %1763 = vmatprep.subr.mxu0 0.0
  %1764 = vmatpush1.msra.mxu0 %v1616
  %1765 = vmatprep.mubr.f32.mxu0 %v1693
  %1766 = vmatmul.mubr.f32.gmra.mrb[0].mxu0 %v1691
  %v1767 = vpop.f32.mrb[0].mxu0
  %v1768 = vadd.f32 0.0, %v1767
  %v1769 = vpop.f32.mrb[0].mxu0
  %1770 = vmatprep.mubr.f32.mxu0 %v1699
  %1771 = vmatmul.mubr.f32.gmra.mrb[0].mxu0 %v1697
  %v1772 = vpop.f32.mrb[0].mxu0
  %v1773 = vadd.f32 0.0, %v1772
  %v1774 = vpop.f32.mrb[0].mxu0
  %1775 = vdwg.mxu0
  %1776 = vmatprep.subr.mxu0 %v1693
  %1777 = vmatpush1.xpose.msra.mxu0 %v1691
  %1778 = vmatprep.subr.mxu0 %v1699
  %1779 = vmatpush1.xpose.msra.mxu0 %v1697
  %1780 = vmatprep.subr.mxu0 0.0
  %1781 = vmatpush1.xpose.msra.mxu0 0.0
  %1782 = vmatprep.subr.mxu0 0.0
  %1783 = vmatpush1.xpose.msra.mxu0 0.0
  %1784 = vmatprep.subr.mxu0 0.0
  %1785 = vmatpush1.xpose.msra.mxu0 0.0
  %1786 = vmatprep.subr.mxu0 0.0
  %1787 = vmatpush1.xpose.msra.mxu0 0.0
  %1788 = vmatprep.subr.mxu0 0.0
  %1789 = vmatpush1.xpose.msra.mxu0 0.0
  %1790 = vmatprep.subr.mxu0 0.0
  %1791 = vmatpush1.xpose.msra.mxu0 0.0
  %1792 = vmatprep.subr.mxu0 0.0
  %1793 = vmatpush1.xpose.msra.mxu0 0.0
  %1794 = vmatprep.subr.mxu0 0.0
  %1795 = vmatpush1.xpose.msra.mxu0 0.0
  %1796 = vmatprep.subr.mxu0 0.0
  %1797 = vmatpush1.xpose.msra.mxu0 0.0
  %1798 = vmatprep.subr.mxu0 0.0
  %1799 = vmatpush1.xpose.msra.mxu0 0.0
  %1800 = vmatprep.subr.mxu0 0.0
  %1801 = vmatpush1.xpose.msra.mxu0 0.0
  %1802 = vmatprep.subr.mxu0 0.0
  %1803 = vmatpush1.xpose.msra.mxu0 0.0
  %1804 = vmatprep.subr.mxu0 0.0
  %1805 = vmatpush1.xpose.msra.mxu0 0.0
  %1806 = vmatprep.subr.mxu0 0.0
  %1807 = vmatpush1.xpose.msra.mxu0 0.0
  %1808 = vmatprep.subr.mxu0 0.0
  %1809 = vmatpush1.xpose.msra.mxu0 0.0
  %1810 = vmatprep.subr.mxu0 0.0
  %1811 = vmatpush1.xpose.msra.mxu0 0.0
  %1812 = vmatprep.subr.mxu0 0.0
  %1813 = vmatpush1.xpose.msra.mxu0 0.0
  %1814 = vmatprep.subr.mxu0 0.0
  %1815 = vmatpush1.xpose.msra.mxu0 0.0
  %1816 = vmatprep.subr.mxu0 0.0
  %1817 = vmatpush1.xpose.msra.mxu0 0.0
  %1818 = vmatprep.subr.mxu0 0.0
  %1819 = vmatpush1.xpose.msra.mxu0 0.0
  %1820 = vmatprep.subr.mxu0 0.0
  %1821 = vmatpush1.xpose.msra.mxu0 0.0
  %1822 = vmatprep.subr.mxu0 0.0
  %1823 = vmatpush1.xpose.msra.mxu0 0.0
  %1824 = vmatprep.subr.mxu0 0.0
  %1825 = vmatpush1.xpose.msra.mxu0 0.0
  %1826 = vmatprep.subr.mxu0 0.0
  %1827 = vmatpush1.xpose.msra.mxu0 0.0
  %1828 = vmatprep.subr.mxu0 0.0
  %1829 = vmatpush1.xpose.msra.mxu0 0.0
  %1830 = vmatprep.subr.mxu0 0.0
  %1831 = vmatpush1.xpose.msra.mxu0 0.0
  %1832 = vmatprep.subr.mxu0 0.0
  %1833 = vmatpush1.xpose.msra.mxu0 0.0
  %1834 = vmatprep.subr.mxu0 0.0
  %1835 = vmatpush1.xpose.msra.mxu0 0.0
  %1836 = vmatprep.subr.mxu0 0.0
  %1837 = vmatpush1.xpose.msra.mxu0 0.0
  %1838 = vmatprep.subr.mxu0 0.0
  %1839 = vmatpush1.xpose.msra.mxu0 0.0
  %1840 = vmatprep.mubr.f32.mxu0 %v1584
  %1841 = vmatmul.mubr.f32.gmra.mrb[0].mxu0 %v1583
  %v1842 = vpop.f32.mrb[0].mxu0
  %v1843 = vadd.f32 0.0, %v1842
  %v1844 = vpop.f32.mrb[0].mxu0
  %1845 = vdwg.mxu0
  %1847 = vset.pattern.permute.xlu0 0
  %1848 = vperm.xlu0 %1847, %v1768
  %v1849 = vpop.permute.xlu0 %1848
  %1852 = vset.pattern.permute.xlu0 0
  %1853 = vperm.xlu0 %1852, %v1773
  %v1854 = vpop.permute.xlu0 %1853
  %v1856 = vlaneseq
  %v1857 = vshrl.u32 %v1856, 7
  %v1858 = vsub.s32 0, %v1857
  %v1859 = vrot.slane %v1843, %v1858
  %v1860 = vadd.f32 %v1849, %v1859
  %v1861 = vadd.f32 %v1854, %v1859
  %vm1862 = vcmp.ge.f32.partialorder %v1860, 0.0
  %vm1863 = vcmp.ge.f32.partialorder %v1861, 0.0
  %v1864 = vmul.f32 %v1860, 0.2
  %v1865 = vmul.f32 %v1861, 0.2
  %v1866 = vsel %vm1862, %v1860, %v1864
  %v1867 = vsel %vm1863, %v1861, %v1865
  %v1868 = vsel %vm63, %v1866, -1e+30
  %v1869 = vsel %vm64, %v1867, -1e+30
  %v1870 = vsel %vm361, %v1868, -inf
  %1871 = vmax.xlane.f32.xlu0 %v1870
  %v1872 = vpop.xlane.xlu0 %1871
  %v1873 = vsel %vm361, %v1869, -inf
  %1874 = vmax.xlane.f32.xlu0 %v1873
  %v1875 = vpop.xlane.xlu0 %1874
  %v1876 = vsub.f32 %v1868, %v1872
  %v1877 = vsub.f32 %v1869, %v1875
  %v1878 = vmul.f32 %v1876, 1.442695
  %v1879 = vpow.pop %v1878
  %v1880 = vmul.f32 %v1877, 1.442695
  %v1881 = vpow.pop %v1880
  %v1882 = vsel %vm361, %v1879, 0.0
  %1883 = vadd.xlane.f32.xlu0 %v1882
  %v1884 = vpop.xlane.xlu0 %1883
  %v1885 = vsel %vm361, %v1881, 0.0
  %1886 = vadd.xlane.f32.xlu0 %v1885
  %v1887 = vpop.xlane.xlu0 %1886
  %v1888 = vrcp.pop %v1884
  %v1889 = vrcp.pop %v1887
  %v1890 = vmul.f32 %v1879, %v1888
  %v1891 = vmul.f32 %v1881, %v1889
  %v1893 = vsel %vm361, %v1890, 0
  %v1896 = vsel %vm361, %v1891, 0
  %1898 = vmatprep.subr.mxu0 0.0
  %1899 = vmatpush1.msra.mxu0 %v1691
  %1900 = vmatprep.subr.mxu0 0.0
  %1901 = vmatpush1.msra.mxu0 %v1697
  %1902 = vmatprep.subr.mxu0 0.0
  %1903 = vmatpush1.msra.mxu0 0.0
  %1904 = vmatprep.subr.mxu0 0.0
  %1905 = vmatpush1.msra.mxu0 0.0
  %1906 = vmatprep.subr.mxu0 0.0
  %1907 = vmatpush1.msra.mxu0 0.0
  %1908 = vmatprep.subr.mxu0 0.0
  %1909 = vmatpush1.msra.mxu0 0.0
  %1910 = vmatprep.subr.mxu0 0.0
  %1911 = vmatpush1.msra.mxu0 0.0
  %1912 = vmatprep.subr.mxu0 0.0
  %1913 = vmatpush1.msra.mxu0 0.0
  %1914 = vmatprep.subr.mxu0 0.0
  %1915 = vmatpush1.msra.mxu0 0.0
  %1916 = vmatprep.subr.mxu0 0.0
  %1917 = vmatpush1.msra.mxu0 0.0
  %1918 = vmatprep.subr.mxu0 0.0
  %1919 = vmatpush1.msra.mxu0 0.0
  %1920 = vmatprep.subr.mxu0 0.0
  %1921 = vmatpush1.msra.mxu0 0.0
  %1922 = vmatprep.subr.mxu0 0.0
  %1923 = vmatpush1.msra.mxu0 0.0
  %1924 = vmatprep.subr.mxu0 0.0
  %1925 = vmatpush1.msra.mxu0 0.0
  %1926 = vmatprep.subr.mxu0 0.0
  %1927 = vmatpush1.msra.mxu0 0.0
  %1928 = vmatprep.subr.mxu0 0.0
  %1929 = vmatpush1.msra.mxu0 0.0
  %1930 = vmatprep.subr.mxu0 0.0
  %1931 = vmatpush1.msra.mxu0 0.0
  %1932 = vmatprep.subr.mxu0 0.0
  %1933 = vmatpush1.msra.mxu0 0.0
  %1934 = vmatprep.subr.mxu0 0.0
  %1935 = vmatpush1.msra.mxu0 0.0
  %1936 = vmatprep.subr.mxu0 0.0
  %1937 = vmatpush1.msra.mxu0 0.0
  %1938 = vmatprep.subr.mxu0 0.0
  %1939 = vmatpush1.msra.mxu0 0.0
  %1940 = vmatprep.subr.mxu0 0.0
  %1941 = vmatpush1.msra.mxu0 0.0
  %1942 = vmatprep.subr.mxu0 0.0
  %1943 = vmatpush1.msra.mxu0 0.0
  %1944 = vmatprep.subr.mxu0 0.0
  %1945 = vmatpush1.msra.mxu0 0.0
  %1946 = vmatprep.subr.mxu0 0.0
  %1947 = vmatpush1.msra.mxu0 0.0
  %1948 = vmatprep.subr.mxu0 0.0
  %1949 = vmatpush1.msra.mxu0 0.0
  %1950 = vmatprep.subr.mxu0 0.0
  %1951 = vmatpush1.msra.mxu0 0.0
  %1952 = vmatprep.subr.mxu0 0.0
  %1953 = vmatpush1.msra.mxu0 0.0
  %1954 = vmatprep.subr.mxu0 0.0
  %1955 = vmatpush1.msra.mxu0 0.0
  %1956 = vmatprep.subr.mxu0 0.0
  %1957 = vmatpush1.msra.mxu0 0.0
  %1958 = vmatprep.subr.mxu0 0.0
  %1959 = vmatpush1.msra.mxu0 0.0
  %1960 = vmatprep.subr.mxu0 0.0
  %1961 = vmatpush1.msra.mxu0 0.0
  %1962 = vmatprep.mubr.f32.mxu0 0.0
  %1963 = vmatmul.mubr.f32.gmra.mrb[0].mxu0 %v1893
  %v1964 = vpop.f32.mrb[0].mxu0
  %v1965 = vadd.f32 0.0, %v1964
  %v1966 = vpop.f32.mrb[0].mxu0
  %1967 = vmatprep.mubr.f32.mxu0 0.0
  %1968 = vmatmul.mubr.f32.gmra.mrb[0].mxu0 %v1896
  %v1969 = vpop.f32.mrb[0].mxu0
  %v1970 = vadd.f32 0.0, %v1969
  %v1971 = vpop.f32.mrb[0].mxu0
  %1972 = vdwg.mxu0
  %1973 = vset.pattern.permute.xlu0 1
  %1974 = vperm.xlu0 %1973, %v1768
  %v1975 = vpop.permute.xlu0 %1974
  %1977 = vset.pattern.permute.xlu0 1
  %1978 = vperm.xlu0 %1977, %v1773
  %v1979 = vpop.permute.xlu0 %1978
  %v1981 = vlaneseq
  %v1982 = vshrl.u32 %v1981, 7
  %v1983 = vsub.s32 1, %v1982
  %v1984 = vrot.slane %v1843, %v1983
  %v1985 = vadd.f32 %v1975, %v1984
  %v1986 = vadd.f32 %v1979, %v1984
  %vm1987 = vcmp.ge.f32.partialorder %v1985, 0.0
  %vm1988 = vcmp.ge.f32.partialorder %v1986, 0.0
  %v1989 = vmul.f32 %v1985, 0.2
  %v1990 = vmul.f32 %v1986, 0.2
  %v1991 = vsel %vm1987, %v1985, %v1989
  %v1992 = vsel %vm1988, %v1986, %v1990
  %v1993 = vsel %vm63, %v1991, -1e+30
  %v1994 = vsel %vm64, %v1992, -1e+30
  %v1995 = vsel %vm361, %v1993, -inf
  %1996 = vmax.xlane.f32.xlu0 %v1995
  %v1997 = vpop.xlane.xlu0 %1996
  %v1998 = vsel %vm361, %v1994, -inf
  %1999 = vmax.xlane.f32.xlu0 %v1998
  %v2000 = vpop.xlane.xlu0 %1999
  %v2001 = vsub.f32 %v1993, %v1997
  %v2002 = vsub.f32 %v1994, %v2000
  %v2003 = vmul.f32 %v2001, 1.442695
  %v2004 = vpow.pop %v2003
  %v2005 = vmul.f32 %v2002, 1.442695
  %v2006 = vpow.pop %v2005
  %v2007 = vsel %vm361, %v2004, 0.0
  %2008 = vadd.xlane.f32.xlu0 %v2007
  %v2009 = vpop.xlane.xlu0 %2008
  %v2010 = vsel %vm361, %v2006, 0.0
  %2011 = vadd.xlane.f32.xlu0 %v2010
  %v2012 = vpop.xlane.xlu0 %2011
  %v2013 = vrcp.pop %v2009
  %v2014 = vrcp.pop %v2012
  %v2015 = vmul.f32 %v2004, %v2013
  %v2016 = vmul.f32 %v2006, %v2014
  %2019 = vrot.lane.b32.xlu0 %v1691, 96
  %v2020 = vpop.permute.xlu0 %2019
  %2021 = vrot.lane.b32.xlu0 %v1697, 96
  %v2022 = vpop.permute.xlu0 %2021
  %v2026 = vsel %vm361, %v2015, 0
  %v2029 = vsel %vm361, %v2016, 0
  %2031 = vmatprep.subr.mxu0 0.0
  %2032 = vmatpush1.msra.mxu0 %v2020
  %2033 = vmatprep.subr.mxu0 0.0
  %2034 = vmatpush1.msra.mxu0 %v2022
  %2035 = vmatprep.subr.mxu0 0.0
  %2036 = vmatpush1.msra.mxu0 0.0
  %2037 = vmatprep.subr.mxu0 0.0
  %2038 = vmatpush1.msra.mxu0 0.0
  %2039 = vmatprep.subr.mxu0 0.0
  %2040 = vmatpush1.msra.mxu0 0.0
  %2041 = vmatprep.subr.mxu0 0.0
  %2042 = vmatpush1.msra.mxu0 0.0
  %2043 = vmatprep.subr.mxu0 0.0
  %2044 = vmatpush1.msra.mxu0 0.0
  %2045 = vmatprep.subr.mxu0 0.0
  %2046 = vmatpush1.msra.mxu0 0.0
  %2047 = vmatprep.subr.mxu0 0.0
  %2048 = vmatpush1.msra.mxu0 0.0
  %2049 = vmatprep.subr.mxu0 0.0
  %2050 = vmatpush1.msra.mxu0 0.0
  %2051 = vmatprep.subr.mxu0 0.0
  %2052 = vmatpush1.msra.mxu0 0.0
  %2053 = vmatprep.subr.mxu0 0.0
  %2054 = vmatpush1.msra.mxu0 0.0
  %2055 = vmatprep.subr.mxu0 0.0
  %2056 = vmatpush1.msra.mxu0 0.0
  %2057 = vmatprep.subr.mxu0 0.0
  %2058 = vmatpush1.msra.mxu0 0.0
  %2059 = vmatprep.subr.mxu0 0.0
  %2060 = vmatpush1.msra.mxu0 0.0
  %2061 = vmatprep.subr.mxu0 0.0
  %2062 = vmatpush1.msra.mxu0 0.0
  %2063 = vmatprep.subr.mxu0 0.0
  %2064 = vmatpush1.msra.mxu0 0.0
  %2065 = vmatprep.subr.mxu0 0.0
  %2066 = vmatpush1.msra.mxu0 0.0
  %2067 = vmatprep.subr.mxu0 0.0
  %2068 = vmatpush1.msra.mxu0 0.0
  %2069 = vmatprep.subr.mxu0 0.0
  %2070 = vmatpush1.msra.mxu0 0.0
  %2071 = vmatprep.subr.mxu0 0.0
  %2072 = vmatpush1.msra.mxu0 0.0
  %2073 = vmatprep.subr.mxu0 0.0
  %2074 = vmatpush1.msra.mxu0 0.0
  %2075 = vmatprep.subr.mxu0 0.0
  %2076 = vmatpush1.msra.mxu0 0.0
  %2077 = vmatprep.subr.mxu0 0.0
  %2078 = vmatpush1.msra.mxu0 0.0
  %2079 = vmatprep.subr.mxu0 0.0
  %2080 = vmatpush1.msra.mxu0 0.0
  %2081 = vmatprep.subr.mxu0 0.0
  %2082 = vmatpush1.msra.mxu0 0.0
  %2083 = vmatprep.subr.mxu0 0.0
  %2084 = vmatpush1.msra.mxu0 0.0
  %2085 = vmatprep.subr.mxu0 0.0
  %2086 = vmatpush1.msra.mxu0 0.0
  %2087 = vmatprep.subr.mxu0 0.0
  %2088 = vmatpush1.msra.mxu0 0.0
  %2089 = vmatprep.subr.mxu0 0.0
  %2090 = vmatpush1.msra.mxu0 0.0
  %2091 = vmatprep.subr.mxu0 0.0
  %2092 = vmatpush1.msra.mxu0 0.0
  %2093 = vmatprep.subr.mxu0 0.0
  %2094 = vmatpush1.msra.mxu0 0.0
  %2095 = vmatprep.mubr.f32.mxu0 0.0
  %2096 = vmatmul.mubr.f32.gmra.mrb[0].mxu0 %v2026
  %v2097 = vpop.f32.mrb[0].mxu0
  %v2098 = vadd.f32 0.0, %v2097
  %v2099 = vpop.f32.mrb[0].mxu0
  %2100 = vmatprep.mubr.f32.mxu0 0.0
  %2101 = vmatmul.mubr.f32.gmra.mrb[0].mxu0 %v2029
  %v2102 = vpop.f32.mrb[0].mxu0
  %v2103 = vadd.f32 0.0, %v2102
  %v2104 = vpop.f32.mrb[0].mxu0
  %2105 = vdwg.mxu0
  %2106 = vset.pattern.permute.xlu0 2
  %2107 = vperm.xlu0 %2106, %v1768
  %v2108 = vpop.permute.xlu0 %2107
  %2110 = vset.pattern.permute.xlu0 2
  %2111 = vperm.xlu0 %2110, %v1773
  %v2112 = vpop.permute.xlu0 %2111
  %v2114 = vlaneseq
  %v2115 = vshrl.u32 %v2114, 7
  %v2116 = vsub.s32 2, %v2115
  %v2117 = vrot.slane %v1843, %v2116
  %v2118 = vadd.f32 %v2108, %v2117
  %v2119 = vadd.f32 %v2112, %v2117
  %vm2120 = vcmp.ge.f32.partialorder %v2118, 0.0
  %vm2121 = vcmp.ge.f32.partialorder %v2119, 0.0
  %v2122 = vmul.f32 %v2118, 0.2
  %v2123 = vmul.f32 %v2119, 0.2
  %v2124 = vsel %vm2120, %v2118, %v2122
  %v2125 = vsel %vm2121, %v2119, %v2123
  %v2126 = vsel %vm63, %v2124, -1e+30
  %v2127 = vsel %vm64, %v2125, -1e+30
  %v2128 = vsel %vm361, %v2126, -inf
  %2129 = vmax.xlane.f32.xlu0 %v2128
  %v2130 = vpop.xlane.xlu0 %2129
  %v2131 = vsel %vm361, %v2127, -inf
  %2132 = vmax.xlane.f32.xlu0 %v2131
  %v2133 = vpop.xlane.xlu0 %2132
  %v2134 = vsub.f32 %v2126, %v2130
  %v2135 = vsub.f32 %v2127, %v2133
  %v2136 = vmul.f32 %v2134, 1.442695
  %v2137 = vpow.pop %v2136
  %v2138 = vmul.f32 %v2135, 1.442695
  %v2139 = vpow.pop %v2138
  %v2140 = vsel %vm361, %v2137, 0.0
  %2141 = vadd.xlane.f32.xlu0 %v2140
  %v2142 = vpop.xlane.xlu0 %2141
  %v2143 = vsel %vm361, %v2139, 0.0
  %2144 = vadd.xlane.f32.xlu0 %v2143
  %v2145 = vpop.xlane.xlu0 %2144
  %v2146 = vrcp.pop %v2142
  %v2147 = vrcp.pop %v2145
  %v2148 = vmul.f32 %v2137, %v2146
  %v2149 = vmul.f32 %v2139, %v2147
  %2150 = vrot.lane.b32.xlu0 %v1691, 64
  %v2151 = vpop.permute.xlu0 %2150
  %2152 = vrot.lane.b32.xlu0 %v1697, 64
  %v2153 = vpop.permute.xlu0 %2152
  %v2157 = vsel %vm361, %v2148, 0
  %v2160 = vsel %vm361, %v2149, 0
  %2162 = vmatprep.subr.mxu0 0.0
  %2163 = vmatpush1.msra.mxu0 %v2151
  %2164 = vmatprep.subr.mxu0 0.0
  %2165 = vmatpush1.msra.mxu0 %v2153
  %2166 = vmatprep.subr.mxu0 0.0
  %2167 = vmatpush1.msra.mxu0 0.0
  %2168 = vmatprep.subr.mxu0 0.0
  %2169 = vmatpush1.msra.mxu0 0.0
  %2170 = vmatprep.subr.mxu0 0.0
  %2171 = vmatpush1.msra.mxu0 0.0
  %2172 = vmatprep.subr.mxu0 0.0
  %2173 = vmatpush1.msra.mxu0 0.0
  %2174 = vmatprep.subr.mxu0 0.0
  %2175 = vmatpush1.msra.mxu0 0.0
  %2176 = vmatprep.subr.mxu0 0.0
  %2177 = vmatpush1.msra.mxu0 0.0
  %2178 = vmatprep.subr.mxu0 0.0
  %2179 = vmatpush1.msra.mxu0 0.0
  %2180 = vmatprep.subr.mxu0 0.0
  %2181 = vmatpush1.msra.mxu0 0.0
  %2182 = vmatprep.subr.mxu0 0.0
  %2183 = vmatpush1.msra.mxu0 0.0
  %2184 = vmatprep.subr.mxu0 0.0
  %2185 = vmatpush1.msra.mxu0 0.0
  %2186 = vmatprep.subr.mxu0 0.0
  %2187 = vmatpush1.msra.mxu0 0.0
  %2188 = vmatprep.subr.mxu0 0.0
  %2189 = vmatpush1.msra.mxu0 0.0
  %2190 = vmatprep.subr.mxu0 0.0
  %2191 = vmatpush1.msra.mxu0 0.0
  %2192 = vmatprep.subr.mxu0 0.0
  %2193 = vmatpush1.msra.mxu0 0.0
  %2194 = vmatprep.subr.mxu0 0.0
  %2195 = vmatpush1.msra.mxu0 0.0
  %2196 = vmatprep.subr.mxu0 0.0
  %2197 = vmatpush1.msra.mxu0 0.0
  %2198 = vmatprep.subr.mxu0 0.0
  %2199 = vmatpush1.msra.mxu0 0.0
  %2200 = vmatprep.subr.mxu0 0.0
  %2201 = vmatpush1.msra.mxu0 0.0
  %2202 = vmatprep.subr.mxu0 0.0
  %2203 = vmatpush1.msra.mxu0 0.0
  %2204 = vmatprep.subr.mxu0 0.0
  %2205 = vmatpush1.msra.mxu0 0.0
  %2206 = vmatprep.subr.mxu0 0.0
  %2207 = vmatpush1.msra.mxu0 0.0
  %2208 = vmatprep.subr.mxu0 0.0
  %2209 = vmatpush1.msra.mxu0 0.0
  %2210 = vmatprep.subr.mxu0 0.0
  %2211 = vmatpush1.msra.mxu0 0.0
  %2212 = vmatprep.subr.mxu0 0.0
  %2213 = vmatpush1.msra.mxu0 0.0
  %2214 = vmatprep.subr.mxu0 0.0
  %2215 = vmatpush1.msra.mxu0 0.0
  %2216 = vmatprep.subr.mxu0 0.0
  %2217 = vmatpush1.msra.mxu0 0.0
  %2218 = vmatprep.subr.mxu0 0.0
  %2219 = vmatpush1.msra.mxu0 0.0
  %2220 = vmatprep.subr.mxu0 0.0
  %2221 = vmatpush1.msra.mxu0 0.0
  %2222 = vmatprep.subr.mxu0 0.0
  %2223 = vmatpush1.msra.mxu0 0.0
  %2224 = vmatprep.subr.mxu0 0.0
  %2225 = vmatpush1.msra.mxu0 0.0
  %2226 = vmatprep.mubr.f32.mxu0 0.0
  %2227 = vmatmul.mubr.f32.gmra.mrb[0].mxu0 %v2157
  %v2228 = vpop.f32.mrb[0].mxu0
  %v2229 = vadd.f32 0.0, %v2228
  %v2230 = vpop.f32.mrb[0].mxu0
  %2231 = vmatprep.mubr.f32.mxu0 0.0
  %2232 = vmatmul.mubr.f32.gmra.mrb[0].mxu0 %v2160
  %v2233 = vpop.f32.mrb[0].mxu0
  %v2234 = vadd.f32 0.0, %v2233
  %v2235 = vpop.f32.mrb[0].mxu0
  %2236 = vdwg.mxu0
  %2237 = vset.pattern.permute.xlu0 3
  %2238 = vperm.xlu0 %2237, %v1768
  %v2239 = vpop.permute.xlu0 %2238
  %2241 = vset.pattern.permute.xlu0 3
  %2242 = vperm.xlu0 %2241, %v1773
  %v2243 = vpop.permute.xlu0 %2242
  %v2245 = vlaneseq
  %v2246 = vshrl.u32 %v2245, 7
  %v2247 = vsub.s32 3, %v2246
  %v2248 = vrot.slane %v1843, %v2247
  %v2249 = vadd.f32 %v2239, %v2248
  %v2250 = vadd.f32 %v2243, %v2248
  %vm2251 = vcmp.ge.f32.partialorder %v2249, 0.0
  %vm2252 = vcmp.ge.f32.partialorder %v2250, 0.0
  %v2253 = vmul.f32 %v2249, 0.2
  %v2254 = vmul.f32 %v2250, 0.2
  %v2255 = vsel %vm2251, %v2249, %v2253
  %v2256 = vsel %vm2252, %v2250, %v2254
  %v2257 = vsel %vm63, %v2255, -1e+30
  %v2258 = vsel %vm64, %v2256, -1e+30
  %v2259 = vsel %vm361, %v2257, -inf
  %2260 = vmax.xlane.f32.xlu0 %v2259
  %v2261 = vpop.xlane.xlu0 %2260
  %v2262 = vsel %vm361, %v2258, -inf
  %2263 = vmax.xlane.f32.xlu0 %v2262
  %v2264 = vpop.xlane.xlu0 %2263
  %v2265 = vsub.f32 %v2257, %v2261
  %v2266 = vsub.f32 %v2258, %v2264
  %v2267 = vmul.f32 %v2265, 1.442695
  %v2268 = vpow.pop %v2267
  %v2269 = vmul.f32 %v2266, 1.442695
  %v2270 = vpow.pop %v2269
  %v2271 = vsel %vm361, %v2268, 0.0
  %2272 = vadd.xlane.f32.xlu0 %v2271
  %v2273 = vpop.xlane.xlu0 %2272
  %v2274 = vsel %vm361, %v2270, 0.0
  %2275 = vadd.xlane.f32.xlu0 %v2274
  %v2276 = vpop.xlane.xlu0 %2275
  %v2277 = vrcp.pop %v2273
  %v2278 = vrcp.pop %v2276
  %v2279 = vmul.f32 %v2268, %v2277
  %v2280 = vmul.f32 %v2270, %v2278
  %2281 = vrot.lane.b32.xlu0 %v1691, 32
  %v2282 = vpop.permute.xlu0 %2281
  %2283 = vrot.lane.b32.xlu0 %v1697, 32
  %v2284 = vpop.permute.xlu0 %2283
  %v2288 = vsel %vm361, %v2279, 0
  %v2291 = vsel %vm361, %v2280, 0
  %2293 = vmatprep.subr.mxu0 0.0
  %2294 = vmatpush1.msra.mxu0 %v2282
  %2295 = vmatprep.subr.mxu0 0.0
  %2296 = vmatpush1.msra.mxu0 %v2284
  %2297 = vmatprep.subr.mxu0 0.0
  %2298 = vmatpush1.msra.mxu0 0.0
  %2299 = vmatprep.subr.mxu0 0.0
  %2300 = vmatpush1.msra.mxu0 0.0
  %2301 = vmatprep.subr.mxu0 0.0
  %2302 = vmatpush1.msra.mxu0 0.0
  %2303 = vmatprep.subr.mxu0 0.0
  %2304 = vmatpush1.msra.mxu0 0.0
  %2305 = vmatprep.subr.mxu0 0.0
  %2306 = vmatpush1.msra.mxu0 0.0
  %2307 = vmatprep.subr.mxu0 0.0
  %2308 = vmatpush1.msra.mxu0 0.0
  %2309 = vmatprep.subr.mxu0 0.0
  %2310 = vmatpush1.msra.mxu0 0.0
  %2311 = vmatprep.subr.mxu0 0.0
  %2312 = vmatpush1.msra.mxu0 0.0
  %2313 = vmatprep.subr.mxu0 0.0
  %2314 = vmatpush1.msra.mxu0 0.0
  %2315 = vmatprep.subr.mxu0 0.0
  %2316 = vmatpush1.msra.mxu0 0.0
  %2317 = vmatprep.subr.mxu0 0.0
  %2318 = vmatpush1.msra.mxu0 0.0
  %2319 = vmatprep.subr.mxu0 0.0
  %2320 = vmatpush1.msra.mxu0 0.0
  %2321 = vmatprep.subr.mxu0 0.0
  %2322 = vmatpush1.msra.mxu0 0.0
  %2323 = vmatprep.subr.mxu0 0.0
  %2324 = vmatpush1.msra.mxu0 0.0
  %2325 = vmatprep.subr.mxu0 0.0
  %2326 = vmatpush1.msra.mxu0 0.0
  %2327 = vmatprep.subr.mxu0 0.0
  %2328 = vmatpush1.msra.mxu0 0.0
  %2329 = vmatprep.subr.mxu0 0.0
  %2330 = vmatpush1.msra.mxu0 0.0
  %2331 = vmatprep.subr.mxu0 0.0
  %2332 = vmatpush1.msra.mxu0 0.0
  %2333 = vmatprep.subr.mxu0 0.0
  %2334 = vmatpush1.msra.mxu0 0.0
  %2335 = vmatprep.subr.mxu0 0.0
  %2336 = vmatpush1.msra.mxu0 0.0
  %2337 = vmatprep.subr.mxu0 0.0
  %2338 = vmatpush1.msra.mxu0 0.0
  %2339 = vmatprep.subr.mxu0 0.0
  %2340 = vmatpush1.msra.mxu0 0.0
  %2341 = vmatprep.subr.mxu0 0.0
  %2342 = vmatpush1.msra.mxu0 0.0
  %2343 = vmatprep.subr.mxu0 0.0
  %2344 = vmatpush1.msra.mxu0 0.0
  %2345 = vmatprep.subr.mxu0 0.0
  %2346 = vmatpush1.msra.mxu0 0.0
  %2347 = vmatprep.subr.mxu0 0.0
  %2348 = vmatpush1.msra.mxu0 0.0
  %2349 = vmatprep.subr.mxu0 0.0
  %2350 = vmatpush1.msra.mxu0 0.0
  %2351 = vmatprep.subr.mxu0 0.0
  %2352 = vmatpush1.msra.mxu0 0.0
  %2353 = vmatprep.subr.mxu0 0.0
  %2354 = vmatpush1.msra.mxu0 0.0
  %2355 = vmatprep.subr.mxu0 0.0
  %2356 = vmatpush1.msra.mxu0 0.0
  %2357 = vmatprep.mubr.f32.mxu0 0.0
  %2358 = vmatmul.mubr.f32.gmra.mrb[0].mxu0 %v2288
  %v2359 = vpop.f32.mrb[0].mxu0
  %v2360 = vadd.f32 0.0, %v2359
  %v2361 = vpop.f32.mrb[0].mxu0
  %2362 = vmatprep.mubr.f32.mxu0 0.0
  %2363 = vmatmul.mubr.f32.gmra.mrb[0].mxu0 %v2291
  %v2364 = vpop.f32.mrb[0].mxu0
  %v2365 = vadd.f32 0.0, %v2364
  %v2366 = vpop.f32.mrb[0].mxu0
  %2367 = vdwg.mxu0
  %2368 = vset.pattern.permute.xlu0 4
  %2369 = vperm.xlu0 %2368, %v1768
  %v2370 = vpop.permute.xlu0 %2369
  %2372 = vset.pattern.permute.xlu0 4
  %2373 = vperm.xlu0 %2372, %v1773
  %v2374 = vpop.permute.xlu0 %2373
  %v2376 = vlaneseq
  %v2377 = vshrl.u32 %v2376, 7
  %v2378 = vsub.s32 4, %v2377
  %v2379 = vrot.slane %v1843, %v2378
  %v2380 = vadd.f32 %v2370, %v2379
  %v2381 = vadd.f32 %v2374, %v2379
  %vm2382 = vcmp.ge.f32.partialorder %v2380, 0.0
  %vm2383 = vcmp.ge.f32.partialorder %v2381, 0.0
  %v2384 = vmul.f32 %v2380, 0.2
  %v2385 = vmul.f32 %v2381, 0.2
  %v2386 = vsel %vm2382, %v2380, %v2384
  %v2387 = vsel %vm2383, %v2381, %v2385
  %v2388 = vsel %vm63, %v2386, -1e+30
  %v2389 = vsel %vm64, %v2387, -1e+30
  %v2390 = vsel %vm361, %v2388, -inf
  %2391 = vmax.xlane.f32.xlu0 %v2390
  %v2392 = vpop.xlane.xlu0 %2391
  %v2393 = vsel %vm361, %v2389, -inf
  %2394 = vmax.xlane.f32.xlu0 %v2393
  %v2395 = vpop.xlane.xlu0 %2394
  %v2396 = vsub.f32 %v2388, %v2392
  %v2397 = vsub.f32 %v2389, %v2395
  %v2398 = vmul.f32 %v2396, 1.442695
  %v2399 = vpow.pop %v2398
  %v2400 = vmul.f32 %v2397, 1.442695
  %v2401 = vpow.pop %v2400
  %v2402 = vsel %vm361, %v2399, 0.0
  %2403 = vadd.xlane.f32.xlu0 %v2402
  %v2404 = vpop.xlane.xlu0 %2403
  %v2405 = vsel %vm361, %v2401, 0.0
  %2406 = vadd.xlane.f32.xlu0 %v2405
  %v2407 = vpop.xlane.xlu0 %2406
  %v2408 = vrcp.pop %v2404
  %v2409 = vrcp.pop %v2407
  %v2410 = vmul.f32 %v2399, %v2408
  %v2411 = vmul.f32 %v2401, %v2409
  %v2413 = vsel %vm361, %v2410, 0
  %v2416 = vsel %vm361, %v2411, 0
  %2418 = vmatprep.subr.mxu0 0.0
  %2419 = vmatpush1.msra.mxu0 %v1693
  %2420 = vmatprep.subr.mxu0 0.0
  %2421 = vmatpush1.msra.mxu0 %v1699
  %2422 = vmatprep.subr.mxu0 0.0
  %2423 = vmatpush1.msra.mxu0 0.0
  %2424 = vmatprep.subr.mxu0 0.0
  %2425 = vmatpush1.msra.mxu0 0.0
  %2426 = vmatprep.subr.mxu0 0.0
  %2427 = vmatpush1.msra.mxu0 0.0
  %2428 = vmatprep.subr.mxu0 0.0
  %2429 = vmatpush1.msra.mxu0 0.0
  %2430 = vmatprep.subr.mxu0 0.0
  %2431 = vmatpush1.msra.mxu0 0.0
  %2432 = vmatprep.subr.mxu0 0.0
  %2433 = vmatpush1.msra.mxu0 0.0
  %2434 = vmatprep.subr.mxu0 0.0
  %2435 = vmatpush1.msra.mxu0 0.0
  %2436 = vmatprep.subr.mxu0 0.0
  %2437 = vmatpush1.msra.mxu0 0.0
  %2438 = vmatprep.subr.mxu0 0.0
  %2439 = vmatpush1.msra.mxu0 0.0
  %2440 = vmatprep.subr.mxu0 0.0
  %2441 = vmatpush1.msra.mxu0 0.0
  %2442 = vmatprep.subr.mxu0 0.0
  %2443 = vmatpush1.msra.mxu0 0.0
  %2444 = vmatprep.subr.mxu0 0.0
  %2445 = vmatpush1.msra.mxu0 0.0
  %2446 = vmatprep.subr.mxu0 0.0
  %2447 = vmatpush1.msra.mxu0 0.0
  %2448 = vmatprep.subr.mxu0 0.0
  %2449 = vmatpush1.msra.mxu0 0.0
  %2450 = vmatprep.subr.mxu0 0.0
  %2451 = vmatpush1.msra.mxu0 0.0
  %2452 = vmatprep.subr.mxu0 0.0
  %2453 = vmatpush1.msra.mxu0 0.0
  %2454 = vmatprep.subr.mxu0 0.0
  %2455 = vmatpush1.msra.mxu0 0.0
  %2456 = vmatprep.subr.mxu0 0.0
  %2457 = vmatpush1.msra.mxu0 0.0
  %2458 = vmatprep.subr.mxu0 0.0
  %2459 = vmatpush1.msra.mxu0 0.0
  %2460 = vmatprep.subr.mxu0 0.0
  %2461 = vmatpush1.msra.mxu0 0.0
  %2462 = vmatprep.subr.mxu0 0.0
  %2463 = vmatpush1.msra.mxu0 0.0
  %2464 = vmatprep.subr.mxu0 0.0
  %2465 = vmatpush1.msra.mxu0 0.0
  %2466 = vmatprep.subr.mxu0 0.0
  %2467 = vmatpush1.msra.mxu0 0.0
  %2468 = vmatprep.subr.mxu0 0.0
  %2469 = vmatpush1.msra.mxu0 0.0
  %2470 = vmatprep.subr.mxu0 0.0
  %2471 = vmatpush1.msra.mxu0 0.0
  %2472 = vmatprep.subr.mxu0 0.0
  %2473 = vmatpush1.msra.mxu0 0.0
  %2474 = vmatprep.subr.mxu0 0.0
  %2475 = vmatpush1.msra.mxu0 0.0
  %2476 = vmatprep.subr.mxu0 0.0
  %2477 = vmatpush1.msra.mxu0 0.0
  %2478 = vmatprep.subr.mxu0 0.0
  %2479 = vmatpush1.msra.mxu0 0.0
  %2480 = vmatprep.subr.mxu0 0.0
  %2481 = vmatpush1.msra.mxu0 0.0
  %2482 = vmatprep.mubr.f32.mxu0 0.0
  %2483 = vmatmul.mubr.f32.gmra.mrb[0].mxu0 %v2413
  %v2484 = vpop.f32.mrb[0].mxu0
  %v2485 = vadd.f32 0.0, %v2484
  %v2486 = vpop.f32.mrb[0].mxu0
  %2487 = vmatprep.mubr.f32.mxu0 0.0
  %2488 = vmatmul.mubr.f32.gmra.mrb[0].mxu0 %v2416
  %v2489 = vpop.f32.mrb[0].mxu0
  %v2490 = vadd.f32 0.0, %v2489
  %v2491 = vpop.f32.mrb[0].mxu0
  %2492 = vdwg.mxu0
  %2493 = vset.pattern.permute.xlu0 5
  %2494 = vperm.xlu0 %2493, %v1768
  %v2495 = vpop.permute.xlu0 %2494
  %2497 = vset.pattern.permute.xlu0 5
  %2498 = vperm.xlu0 %2497, %v1773
  %v2499 = vpop.permute.xlu0 %2498
  %v2501 = vlaneseq
  %v2502 = vshrl.u32 %v2501, 7
  %v2503 = vsub.s32 5, %v2502
  %v2504 = vrot.slane %v1843, %v2503
  %v2505 = vadd.f32 %v2495, %v2504
  %v2506 = vadd.f32 %v2499, %v2504
  %vm2507 = vcmp.ge.f32.partialorder %v2505, 0.0
  %vm2508 = vcmp.ge.f32.partialorder %v2506, 0.0
  %v2509 = vmul.f32 %v2505, 0.2
  %v2510 = vmul.f32 %v2506, 0.2
  %v2511 = vsel %vm2507, %v2505, %v2509
  %v2512 = vsel %vm2508, %v2506, %v2510
  %v2513 = vsel %vm63, %v2511, -1e+30
  %v2514 = vsel %vm64, %v2512, -1e+30
  %v2515 = vsel %vm361, %v2513, -inf
  %2516 = vmax.xlane.f32.xlu0 %v2515
  %v2517 = vpop.xlane.xlu0 %2516
  %v2518 = vsel %vm361, %v2514, -inf
  %2519 = vmax.xlane.f32.xlu0 %v2518
  %v2520 = vpop.xlane.xlu0 %2519
  %v2521 = vsub.f32 %v2513, %v2517
  %v2522 = vsub.f32 %v2514, %v2520
  %v2523 = vmul.f32 %v2521, 1.442695
  %v2524 = vpow.pop %v2523
  %v2525 = vmul.f32 %v2522, 1.442695
  %v2526 = vpow.pop %v2525
  %v2527 = vsel %vm361, %v2524, 0.0
  %2528 = vadd.xlane.f32.xlu0 %v2527
  %v2529 = vpop.xlane.xlu0 %2528
  %v2530 = vsel %vm361, %v2526, 0.0
  %2531 = vadd.xlane.f32.xlu0 %v2530
  %v2532 = vpop.xlane.xlu0 %2531
  %v2533 = vrcp.pop %v2529
  %v2534 = vrcp.pop %v2532
  %v2535 = vmul.f32 %v2524, %v2533
  %v2536 = vmul.f32 %v2526, %v2534
  %2539 = vrot.lane.b32.xlu0 %v1693, 96
  %v2540 = vpop.permute.xlu0 %2539
  %2541 = vrot.lane.b32.xlu0 %v1699, 96
  %v2542 = vpop.permute.xlu0 %2541
  %v2546 = vsel %vm361, %v2535, 0
  %v2549 = vsel %vm361, %v2536, 0
  %2551 = vmatprep.subr.mxu0 0.0
  %2552 = vmatpush1.msra.mxu0 %v2540
  %2553 = vmatprep.subr.mxu0 0.0
  %2554 = vmatpush1.msra.mxu0 %v2542
  %2555 = vmatprep.subr.mxu0 0.0
  %2556 = vmatpush1.msra.mxu0 0.0
  %2557 = vmatprep.subr.mxu0 0.0
  %2558 = vmatpush1.msra.mxu0 0.0
  %2559 = vmatprep.subr.mxu0 0.0
  %2560 = vmatpush1.msra.mxu0 0.0
  %2561 = vmatprep.subr.mxu0 0.0
  %2562 = vmatpush1.msra.mxu0 0.0
  %2563 = vmatprep.subr.mxu0 0.0
  %2564 = vmatpush1.msra.mxu0 0.0
  %2565 = vmatprep.subr.mxu0 0.0
  %2566 = vmatpush1.msra.mxu0 0.0
  %2567 = vmatprep.subr.mxu0 0.0
  %2568 = vmatpush1.msra.mxu0 0.0
  %2569 = vmatprep.subr.mxu0 0.0
  %2570 = vmatpush1.msra.mxu0 0.0
  %2571 = vmatprep.subr.mxu0 0.0
  %2572 = vmatpush1.msra.mxu0 0.0
  %2573 = vmatprep.subr.mxu0 0.0
  %2574 = vmatpush1.msra.mxu0 0.0
  %2575 = vmatprep.subr.mxu0 0.0
  %2576 = vmatpush1.msra.mxu0 0.0
  %2577 = vmatprep.subr.mxu0 0.0
  %2578 = vmatpush1.msra.mxu0 0.0
  %2579 = vmatprep.subr.mxu0 0.0
  %2580 = vmatpush1.msra.mxu0 0.0
  %2581 = vmatprep.subr.mxu0 0.0
  %2582 = vmatpush1.msra.mxu0 0.0
  %2583 = vmatprep.subr.mxu0 0.0
  %2584 = vmatpush1.msra.mxu0 0.0
  %2585 = vmatprep.subr.mxu0 0.0
  %2586 = vmatpush1.msra.mxu0 0.0
  %2587 = vmatprep.subr.mxu0 0.0
  %2588 = vmatpush1.msra.mxu0 0.0
  %2589 = vmatprep.subr.mxu0 0.0
  %2590 = vmatpush1.msra.mxu0 0.0
  %2591 = vmatprep.subr.mxu0 0.0
  %2592 = vmatpush1.msra.mxu0 0.0
  %2593 = vmatprep.subr.mxu0 0.0
  %2594 = vmatpush1.msra.mxu0 0.0
  %2595 = vmatprep.subr.mxu0 0.0
  %2596 = vmatpush1.msra.mxu0 0.0
  %2597 = vmatprep.subr.mxu0 0.0
  %2598 = vmatpush1.msra.mxu0 0.0
  %2599 = vmatprep.subr.mxu0 0.0
  %2600 = vmatpush1.msra.mxu0 0.0
  %2601 = vmatprep.subr.mxu0 0.0
  %2602 = vmatpush1.msra.mxu0 0.0
  %2603 = vmatprep.subr.mxu0 0.0
  %2604 = vmatpush1.msra.mxu0 0.0
  %2605 = vmatprep.subr.mxu0 0.0
  %2606 = vmatpush1.msra.mxu0 0.0
  %2607 = vmatprep.subr.mxu0 0.0
  %2608 = vmatpush1.msra.mxu0 0.0
  %2609 = vmatprep.subr.mxu0 0.0
  %2610 = vmatpush1.msra.mxu0 0.0
  %2611 = vmatprep.subr.mxu0 0.0
  %2612 = vmatpush1.msra.mxu0 0.0
  %2613 = vmatprep.subr.mxu0 0.0
  %2614 = vmatpush1.msra.mxu0 0.0
  %2615 = vmatprep.mubr.f32.mxu0 0.0
  %2616 = vmatmul.mubr.f32.gmra.mrb[0].mxu0 %v2546
  %v2617 = vpop.f32.mrb[0].mxu0
  %v2618 = vadd.f32 0.0, %v2617
  %v2619 = vpop.f32.mrb[0].mxu0
  %2620 = vmatprep.mubr.f32.mxu0 0.0
  %2621 = vmatmul.mubr.f32.gmra.mrb[0].mxu0 %v2549
  %v2622 = vpop.f32.mrb[0].mxu0
  %v2623 = vadd.f32 0.0, %v2622
  %v2624 = vpop.f32.mrb[0].mxu0
  %2625 = vdwg.mxu0
  %2626 = vset.pattern.permute.xlu0 6
  %2627 = vperm.xlu0 %2626, %v1768
  %v2628 = vpop.permute.xlu0 %2627
  %2630 = vset.pattern.permute.xlu0 6
  %2631 = vperm.xlu0 %2630, %v1773
  %v2632 = vpop.permute.xlu0 %2631
  %v2634 = vlaneseq
  %v2635 = vshrl.u32 %v2634, 7
  %v2636 = vsub.s32 6, %v2635
  %v2637 = vrot.slane %v1843, %v2636
  %v2638 = vadd.f32 %v2628, %v2637
  %v2639 = vadd.f32 %v2632, %v2637
  %vm2640 = vcmp.ge.f32.partialorder %v2638, 0.0
  %vm2641 = vcmp.ge.f32.partialorder %v2639, 0.0
  %v2642 = vmul.f32 %v2638, 0.2
  %v2643 = vmul.f32 %v2639, 0.2
  %v2644 = vsel %vm2640, %v2638, %v2642
  %v2645 = vsel %vm2641, %v2639, %v2643
  %v2646 = vsel %vm63, %v2644, -1e+30
  %v2647 = vsel %vm64, %v2645, -1e+30
  %v2648 = vsel %vm361, %v2646, -inf
  %2649 = vmax.xlane.f32.xlu0 %v2648
  %v2650 = vpop.xlane.xlu0 %2649
  %v2651 = vsel %vm361, %v2647, -inf
  %2652 = vmax.xlane.f32.xlu0 %v2651
  %v2653 = vpop.xlane.xlu0 %2652
  %v2654 = vsub.f32 %v2646, %v2650
  %v2655 = vsub.f32 %v2647, %v2653
  %v2656 = vmul.f32 %v2654, 1.442695
  %v2657 = vpow.pop %v2656
  %v2658 = vmul.f32 %v2655, 1.442695
  %v2659 = vpow.pop %v2658
  %v2660 = vsel %vm361, %v2657, 0.0
  %2661 = vadd.xlane.f32.xlu0 %v2660
  %v2662 = vpop.xlane.xlu0 %2661
  %v2663 = vsel %vm361, %v2659, 0.0
  %2664 = vadd.xlane.f32.xlu0 %v2663
  %v2665 = vpop.xlane.xlu0 %2664
  %v2666 = vrcp.pop %v2662
  %v2667 = vrcp.pop %v2665
  %v2668 = vmul.f32 %v2657, %v2666
  %v2669 = vmul.f32 %v2659, %v2667
  %2670 = vrot.lane.b32.xlu0 %v1693, 64
  %v2671 = vpop.permute.xlu0 %2670
  %2672 = vrot.lane.b32.xlu0 %v1699, 64
  %v2673 = vpop.permute.xlu0 %2672
  %v2677 = vsel %vm361, %v2668, 0
  %v2680 = vsel %vm361, %v2669, 0
  %2682 = vmatprep.subr.mxu0 0.0
  %2683 = vmatpush1.msra.mxu0 %v2671
  %2684 = vmatprep.subr.mxu0 0.0
  %2685 = vmatpush1.msra.mxu0 %v2673
  %2686 = vmatprep.subr.mxu0 0.0
  %2687 = vmatpush1.msra.mxu0 0.0
  %2688 = vmatprep.subr.mxu0 0.0
  %2689 = vmatpush1.msra.mxu0 0.0
  %2690 = vmatprep.subr.mxu0 0.0
  %2691 = vmatpush1.msra.mxu0 0.0
  %2692 = vmatprep.subr.mxu0 0.0
  %2693 = vmatpush1.msra.mxu0 0.0
  %2694 = vmatprep.subr.mxu0 0.0
  %2695 = vmatpush1.msra.mxu0 0.0
  %2696 = vmatprep.subr.mxu0 0.0
  %2697 = vmatpush1.msra.mxu0 0.0
  %2698 = vmatprep.subr.mxu0 0.0
  %2699 = vmatpush1.msra.mxu0 0.0
  %2700 = vmatprep.subr.mxu0 0.0
  %2701 = vmatpush1.msra.mxu0 0.0
  %2702 = vmatprep.subr.mxu0 0.0
  %2703 = vmatpush1.msra.mxu0 0.0
  %2704 = vmatprep.subr.mxu0 0.0
  %2705 = vmatpush1.msra.mxu0 0.0
  %2706 = vmatprep.subr.mxu0 0.0
  %2707 = vmatpush1.msra.mxu0 0.0
  %2708 = vmatprep.subr.mxu0 0.0
  %2709 = vmatpush1.msra.mxu0 0.0
  %2710 = vmatprep.subr.mxu0 0.0
  %2711 = vmatpush1.msra.mxu0 0.0
  %2712 = vmatprep.subr.mxu0 0.0
  %2713 = vmatpush1.msra.mxu0 0.0
  %2714 = vmatprep.subr.mxu0 0.0
  %2715 = vmatpush1.msra.mxu0 0.0
  %2716 = vmatprep.subr.mxu0 0.0
  %2717 = vmatpush1.msra.mxu0 0.0
  %2718 = vmatprep.subr.mxu0 0.0
  %2719 = vmatpush1.msra.mxu0 0.0
  %2720 = vmatprep.subr.mxu0 0.0
  %2721 = vmatpush1.msra.mxu0 0.0
  %2722 = vmatprep.subr.mxu0 0.0
  %2723 = vmatpush1.msra.mxu0 0.0
  %2724 = vmatprep.subr.mxu0 0.0
  %2725 = vmatpush1.msra.mxu0 0.0
  %2726 = vmatprep.subr.mxu0 0.0
  %2727 = vmatpush1.msra.mxu0 0.0
  %2728 = vmatprep.subr.mxu0 0.0
  %2729 = vmatpush1.msra.mxu0 0.0
  %2730 = vmatprep.subr.mxu0 0.0
  %2731 = vmatpush1.msra.mxu0 0.0
  %2732 = vmatprep.subr.mxu0 0.0
  %2733 = vmatpush1.msra.mxu0 0.0
  %2734 = vmatprep.subr.mxu0 0.0
  %2735 = vmatpush1.msra.mxu0 0.0
  %2736 = vmatprep.subr.mxu0 0.0
  %2737 = vmatpush1.msra.mxu0 0.0
  %2738 = vmatprep.subr.mxu0 0.0
  %2739 = vmatpush1.msra.mxu0 0.0
  %2740 = vmatprep.subr.mxu0 0.0
  %2741 = vmatpush1.msra.mxu0 0.0
  %2742 = vmatprep.subr.mxu0 0.0
  %2743 = vmatpush1.msra.mxu0 0.0
  %2744 = vmatprep.subr.mxu0 0.0
  %2745 = vmatpush1.msra.mxu0 0.0
  %2746 = vmatprep.mubr.f32.mxu0 0.0
  %2747 = vmatmul.mubr.f32.gmra.mrb[0].mxu0 %v2677
  %v2748 = vpop.f32.mrb[0].mxu0
  %v2749 = vadd.f32 0.0, %v2748
  %v2750 = vpop.f32.mrb[0].mxu0
  %2751 = vmatprep.mubr.f32.mxu0 0.0
  %2752 = vmatmul.mubr.f32.gmra.mrb[0].mxu0 %v2680
  %v2753 = vpop.f32.mrb[0].mxu0
  %v2754 = vadd.f32 0.0, %v2753
  %v2755 = vpop.f32.mrb[0].mxu0
  %2756 = vdwg.mxu0
  %2757 = vset.pattern.permute.xlu0 7
  %2758 = vperm.xlu0 %2757, %v1768
  %v2759 = vpop.permute.xlu0 %2758
  %2761 = vset.pattern.permute.xlu0 7
  %2762 = vperm.xlu0 %2761, %v1773
  %v2763 = vpop.permute.xlu0 %2762
  %v2765 = vlaneseq
  %v2766 = vshrl.u32 %v2765, 7
  %v2767 = vsub.s32 7, %v2766
  %v2768 = vrot.slane %v1843, %v2767
  %v2769 = vadd.f32 %v2759, %v2768
  %v2770 = vadd.f32 %v2763, %v2768
  %vm2771 = vcmp.ge.f32.partialorder %v2769, 0.0
  %vm2772 = vcmp.ge.f32.partialorder %v2770, 0.0
  %v2773 = vmul.f32 %v2769, 0.2
  %v2774 = vmul.f32 %v2770, 0.2
  %v2775 = vsel %vm2771, %v2769, %v2773
  %v2776 = vsel %vm2772, %v2770, %v2774
  %v2777 = vsel %vm63, %v2775, -1e+30
  %v2778 = vsel %vm64, %v2776, -1e+30
  %v2779 = vsel %vm361, %v2777, -inf
  %2780 = vmax.xlane.f32.xlu0 %v2779
  %v2781 = vpop.xlane.xlu0 %2780
  %v2782 = vsel %vm361, %v2778, -inf
  %2783 = vmax.xlane.f32.xlu0 %v2782
  %v2784 = vpop.xlane.xlu0 %2783
  %v2785 = vsub.f32 %v2777, %v2781
  %v2786 = vsub.f32 %v2778, %v2784
  %v2787 = vmul.f32 %v2785, 1.442695
  %v2788 = vpow.pop %v2787
  %v2789 = vmul.f32 %v2786, 1.442695
  %v2790 = vpow.pop %v2789
  %v2791 = vsel %vm361, %v2788, 0.0
  %2792 = vadd.xlane.f32.xlu0 %v2791
  %v2793 = vpop.xlane.xlu0 %2792
  %v2794 = vsel %vm361, %v2790, 0.0
  %2795 = vadd.xlane.f32.xlu0 %v2794
  %v2796 = vpop.xlane.xlu0 %2795
  %v2797 = vrcp.pop %v2793
  %v2798 = vrcp.pop %v2796
  %v2799 = vmul.f32 %v2788, %v2797
  %v2800 = vmul.f32 %v2790, %v2798
  %2801 = vrot.lane.b32.xlu0 %v1693, 32
  %v2802 = vpop.permute.xlu0 %2801
  %2803 = vrot.lane.b32.xlu0 %v1699, 32
  %v2804 = vpop.permute.xlu0 %2803
  %v2808 = vsel %vm361, %v2799, 0
  %v2811 = vsel %vm361, %v2800, 0
  %2813 = vmatprep.subr.mxu0 0.0
  %2814 = vmatpush1.msra.mxu0 %v2802
  %2815 = vmatprep.subr.mxu0 0.0
  %2816 = vmatpush1.msra.mxu0 %v2804
  %2817 = vmatprep.subr.mxu0 0.0
  %2818 = vmatpush1.msra.mxu0 0.0
  %2819 = vmatprep.subr.mxu0 0.0
  %2820 = vmatpush1.msra.mxu0 0.0
  %2821 = vmatprep.subr.mxu0 0.0
  %2822 = vmatpush1.msra.mxu0 0.0
  %2823 = vmatprep.subr.mxu0 0.0
  %2824 = vmatpush1.msra.mxu0 0.0
  %2825 = vmatprep.subr.mxu0 0.0
  %2826 = vmatpush1.msra.mxu0 0.0
  %2827 = vmatprep.subr.mxu0 0.0
  %2828 = vmatpush1.msra.mxu0 0.0
  %2829 = vmatprep.subr.mxu0 0.0
  %2830 = vmatpush1.msra.mxu0 0.0
  %2831 = vmatprep.subr.mxu0 0.0
  %2832 = vmatpush1.msra.mxu0 0.0
  %2833 = vmatprep.subr.mxu0 0.0
  %2834 = vmatpush1.msra.mxu0 0.0
  %2835 = vmatprep.subr.mxu0 0.0
  %2836 = vmatpush1.msra.mxu0 0.0
  %2837 = vmatprep.subr.mxu0 0.0
  %2838 = vmatpush1.msra.mxu0 0.0
  %2839 = vmatprep.subr.mxu0 0.0
  %2840 = vmatpush1.msra.mxu0 0.0
  %2841 = vmatprep.subr.mxu0 0.0
  %2842 = vmatpush1.msra.mxu0 0.0
  %2843 = vmatprep.subr.mxu0 0.0
  %2844 = vmatpush1.msra.mxu0 0.0
  %2845 = vmatprep.subr.mxu0 0.0
  %2846 = vmatpush1.msra.mxu0 0.0
  %2847 = vmatprep.subr.mxu0 0.0
  %2848 = vmatpush1.msra.mxu0 0.0
  %2849 = vmatprep.subr.mxu0 0.0
  %2850 = vmatpush1.msra.mxu0 0.0
  %2851 = vmatprep.subr.mxu0 0.0
  %2852 = vmatpush1.msra.mxu0 0.0
  %2853 = vmatprep.subr.mxu0 0.0
  %2854 = vmatpush1.msra.mxu0 0.0
  %2855 = vmatprep.subr.mxu0 0.0
  %2856 = vmatpush1.msra.mxu0 0.0
  %2857 = vmatprep.subr.mxu0 0.0
  %2858 = vmatpush1.msra.mxu0 0.0
  %2859 = vmatprep.subr.mxu0 0.0
  %2860 = vmatpush1.msra.mxu0 0.0
  %2861 = vmatprep.subr.mxu0 0.0
  %2862 = vmatpush1.msra.mxu0 0.0
  %2863 = vmatprep.subr.mxu0 0.0
  %2864 = vmatpush1.msra.mxu0 0.0
  %2865 = vmatprep.subr.mxu0 0.0
  %2866 = vmatpush1.msra.mxu0 0.0
  %2867 = vmatprep.subr.mxu0 0.0
  %2868 = vmatpush1.msra.mxu0 0.0
  %2869 = vmatprep.subr.mxu0 0.0
  %2870 = vmatpush1.msra.mxu0 0.0
  %2871 = vmatprep.subr.mxu0 0.0
  %2872 = vmatpush1.msra.mxu0 0.0
  %2873 = vmatprep.subr.mxu0 0.0
  %2874 = vmatpush1.msra.mxu0 0.0
  %2875 = vmatprep.subr.mxu0 0.0
  %2876 = vmatpush1.msra.mxu0 0.0
  %2877 = vmatprep.mubr.f32.mxu0 0.0
  %2878 = vmatmul.mubr.f32.gmra.mrb[0].mxu0 %v2808
  %v2879 = vpop.f32.mrb[0].mxu0
  %v2880 = vadd.f32 0.0, %v2879
  %v2881 = vpop.f32.mrb[0].mxu0
  %2882 = vmatprep.mubr.f32.mxu0 0.0
  %2883 = vmatmul.mubr.f32.gmra.mrb[0].mxu0 %v2811
  %v2884 = vpop.f32.mrb[0].mxu0
  %v2885 = vadd.f32 0.0, %v2884
  %v2886 = vpop.f32.mrb[0].mxu0
  %2887 = vdwg.mxu0
  %2890 = vrot.lane.b32.xlu0 %v2098, 32
  %v2891 = vpop.permute.xlu0 %2890
  %2892 = vrot.lane.b32.xlu0 %v2103, 32
  %v2893 = vpop.permute.xlu0 %2892
  %2898 = vrot.lane.b32.xlu0 %v2229, 64
  %v2899 = vpop.permute.xlu0 %2898
  %2900 = vrot.lane.b32.xlu0 %v2234, 64
  %v2901 = vpop.permute.xlu0 %2900
  %2906 = vrot.lane.b32.xlu0 %v2360, 96
  %v2907 = vpop.permute.xlu0 %2906
  %2908 = vrot.lane.b32.xlu0 %v2365, 96
  %v2909 = vpop.permute.xlu0 %2908
  %2914 = vrot.lane.b32.xlu0 %v2618, 32
  %v2915 = vpop.permute.xlu0 %2914
  %2916 = vrot.lane.b32.xlu0 %v2623, 32
  %v2917 = vpop.permute.xlu0 %2916
  %2922 = vrot.lane.b32.xlu0 %v2749, 64
  %v2923 = vpop.permute.xlu0 %2922
  %2924 = vrot.lane.b32.xlu0 %v2754, 64
  %v2925 = vpop.permute.xlu0 %2924
  %2930 = vrot.lane.b32.xlu0 %v2880, 96
  %v2931 = vpop.permute.xlu0 %2930
  %2932 = vrot.lane.b32.xlu0 %v2885, 96
  %v2933 = vpop.permute.xlu0 %2932
  %v2936 = vsel %vm108, %v1965, %v2891
  %v2937 = vsel %vm108, %v1970, %v2893
  %v2938 = vsel %vm1430, %v2936, %v2899
  %v2939 = vsel %vm1430, %v2937, %v2901
  %v2940 = vsel %vm1433, %v2938, %v2907
  %v2941 = vsel %vm1433, %v2939, %v2909
  %v2942 = vsel %vm108, %v2485, %v2915
  %v2943 = vsel %vm108, %v2490, %v2917
  %v2944 = vsel %vm1430, %v2942, %v2923
  %v2945 = vsel %vm1430, %v2943, %v2925
  %v2946 = vsel %vm1433, %v2944, %v2931
  %v2947 = vsel %vm1433, %v2945, %v2933
  %v2949 = vlaneseq
  %v2950 = vshrl.u32 %v2949, 7
  %v2951 = vsub.s32 0, %v2950
  %v2952 = vrot.slane %v1617, %v2951
  %v2953 = vlaneseq
  %v2954 = vshrl.u32 %v2953, 7
  %v2955 = vsub.s32 1, %v2954
  %v2956 = vrot.slane %v1617, %v2955
  %v2959 = vadd.f32 %v2940, %v2952
  %v2960 = vadd.f32 %v2946, %v2956
  %v2961 = vadd.f32 %v2941, %v2952
  %v2962 = vadd.f32 %v2947, %v2956
  %v2963 = vmax.f32 %v2959, 0.0
  %v2964 = vmax.f32 %v2960, 0.0
  %v2965 = vmax.f32 %v2961, 0.0
  %v2966 = vmax.f32 %v2962, 0.0
  %v2967 = vld [vmem:[%s14] sm:$0xff]
  %v2968 = vld [vmem:[%s14 + $0x8] sm:$0xff]
  %v2969 = vld [vmem:[%s14 + $0x10] sm:$0xff]
  %v2970 = vld [vmem:[%s14 + $0x18] sm:$0xff]
  %v2971 = vld [vmem:[%s14 + $0x20] sm:$0xff]
  %v2972 = vld [vmem:[%s14 + $0x28] sm:$0xff]
  %v2973 = vld [vmem:[%s14 + $0x30] sm:$0xff]
  %v2974 = vld [vmem:[%s14 + $0x38] sm:$0xff]
  %v2975 = vld [vmem:[%s14 + $0x40] sm:$0xff]
  %v2976 = vld [vmem:[%s14 + $0x48] sm:$0xff]
  %v2977 = vld [vmem:[%s14 + $0x50] sm:$0xff]
  %v2978 = vld [vmem:[%s14 + $0x58] sm:$0xff]
  %v2979 = vld [vmem:[%s14 + $0x60] sm:$0xff]
  %v2980 = vld [vmem:[%s14 + $0x68] sm:$0xff]
  %v2981 = vld [vmem:[%s14 + $0x70] sm:$0xff]
  %v2982 = vld [vmem:[%s14 + $0x78] sm:$0xff]
  %v2983 = vld [vmem:[%s14 + $0x80] sm:$0xff]
  %v2984 = vld [vmem:[%s14 + $0x88] sm:$0xff]
  %v2985 = vld [vmem:[%s14 + $0x90] sm:$0xff]
  %v2986 = vld [vmem:[%s14 + $0x98] sm:$0xff]
  %v2987 = vld [vmem:[%s14 + $0xa0] sm:$0xff]
  %v2988 = vld [vmem:[%s14 + $0xa8] sm:$0xff]
  %v2989 = vld [vmem:[%s14 + $0xb0] sm:$0xff]
  %v2990 = vld [vmem:[%s14 + $0xb8] sm:$0xff]
  %v2991 = vld [vmem:[%s14 + $0xc0] sm:$0xff]
  %v2992 = vld [vmem:[%s14 + $0xc8] sm:$0xff]
  %v2993 = vld [vmem:[%s14 + $0xd0] sm:$0xff]
  %v2994 = vld [vmem:[%s14 + $0xd8] sm:$0xff]
  %v2995 = vld [vmem:[%s14 + $0xe0] sm:$0xff]
  %v2996 = vld [vmem:[%s14 + $0xe8] sm:$0xff]
  %v2997 = vld [vmem:[%s14 + $0xf0] sm:$0xff]
  %v2998 = vld [vmem:[%s14 + $0xf8] sm:$0xff]
  %v2999 = vld [vmem:[%s15] sm:$0x1]
  %v3001 = vlaneseq
  %v3002 = vshrl.u32 %v3001, 7
  %v3003 = vsub.s32 0, %v3002
  %v3004 = vrot.slane %v2999, %v3003
  %3006 = vmatprep.subr.mxu0 0.0
  %3007 = vmatpush1.msra.mxu0 %v2967
  %3008 = vmatprep.subr.mxu0 0.0
  %3009 = vmatpush1.msra.mxu0 %v2968
  %3010 = vmatprep.subr.mxu0 0.0
  %3011 = vmatpush1.msra.mxu0 %v2969
  %3012 = vmatprep.subr.mxu0 0.0
  %3013 = vmatpush1.msra.mxu0 %v2970
  %3014 = vmatprep.subr.mxu0 0.0
  %3015 = vmatpush1.msra.mxu0 %v2971
  %3016 = vmatprep.subr.mxu0 0.0
  %3017 = vmatpush1.msra.mxu0 %v2972
  %3018 = vmatprep.subr.mxu0 0.0
  %3019 = vmatpush1.msra.mxu0 %v2973
  %3020 = vmatprep.subr.mxu0 0.0
  %3021 = vmatpush1.msra.mxu0 %v2974
  %3022 = vmatprep.subr.mxu0 0.0
  %3023 = vmatpush1.msra.mxu0 %v2975
  %3024 = vmatprep.subr.mxu0 0.0
  %3025 = vmatpush1.msra.mxu0 %v2976
  %3026 = vmatprep.subr.mxu0 0.0
  %3027 = vmatpush1.msra.mxu0 %v2977
  %3028 = vmatprep.subr.mxu0 0.0
  %3029 = vmatpush1.msra.mxu0 %v2978
  %3030 = vmatprep.subr.mxu0 0.0
  %3031 = vmatpush1.msra.mxu0 %v2979
  %3032 = vmatprep.subr.mxu0 0.0
  %3033 = vmatpush1.msra.mxu0 %v2980
  %3034 = vmatprep.subr.mxu0 0.0
  %3035 = vmatpush1.msra.mxu0 %v2981
  %3036 = vmatprep.subr.mxu0 0.0
  %3037 = vmatpush1.msra.mxu0 %v2982
  %3038 = vmatprep.subr.mxu0 0.0
  %3039 = vmatpush1.msra.mxu0 %v2983
  %3040 = vmatprep.subr.mxu0 0.0
  %3041 = vmatpush1.msra.mxu0 %v2984
  %3042 = vmatprep.subr.mxu0 0.0
  %3043 = vmatpush1.msra.mxu0 %v2985
  %3044 = vmatprep.subr.mxu0 0.0
  %3045 = vmatpush1.msra.mxu0 %v2986
  %3046 = vmatprep.subr.mxu0 0.0
  %3047 = vmatpush1.msra.mxu0 %v2987
  %3048 = vmatprep.subr.mxu0 0.0
  %3049 = vmatpush1.msra.mxu0 %v2988
  %3050 = vmatprep.subr.mxu0 0.0
  %3051 = vmatpush1.msra.mxu0 %v2989
  %3052 = vmatprep.subr.mxu0 0.0
  %3053 = vmatpush1.msra.mxu0 %v2990
  %3054 = vmatprep.subr.mxu0 0.0
  %3055 = vmatpush1.msra.mxu0 %v2991
  %3056 = vmatprep.subr.mxu0 0.0
  %3057 = vmatpush1.msra.mxu0 %v2992
  %3058 = vmatprep.subr.mxu0 0.0
  %3059 = vmatpush1.msra.mxu0 %v2993
  %3060 = vmatprep.subr.mxu0 0.0
  %3061 = vmatpush1.msra.mxu0 %v2994
  %3062 = vmatprep.subr.mxu0 0.0
  %3063 = vmatpush1.msra.mxu0 %v2995
  %3064 = vmatprep.subr.mxu0 0.0
  %3065 = vmatpush1.msra.mxu0 %v2996
  %3066 = vmatprep.subr.mxu0 0.0
  %3067 = vmatpush1.msra.mxu0 %v2997
  %3068 = vmatprep.subr.mxu0 0.0
  %3069 = vmatpush1.msra.mxu0 %v2998
  %3070 = vmatprep.mubr.f32.mxu0 %v2964
  %3071 = vmatmul.mubr.f32.gmra.mrb[0].mxu0 %v2963
  %v3072 = vpop.f32.mrb[0].mxu0
  %v3073 = vadd.f32 %v3004, %v3072
  %v3074 = vpop.f32.mrb[0].mxu0
  %3075 = vmatprep.mubr.f32.mxu0 %v2966
  %3076 = vmatmul.mubr.f32.gmra.mrb[0].mxu0 %v2965
  %v3077 = vpop.f32.mrb[0].mxu0
  %v3078 = vadd.f32 %v3004, %v3077
  %v3079 = vpop.f32.mrb[0].mxu0
  %3080 = vdwg.mxu0
  %v3081 = vld [vmem:[%s2] sm:$0xff]
  %v3082 = vld [vmem:[%s2 + $0x8] sm:$0xff]
  %v3084 = vsel %vm361, %v3081, 0
  %v3087 = vsel %vm361, %v3082, 0
  %3089 = vmatprep.subr.mxu0 0.0
  %3090 = vmatpush1.msra.mxu0 %v3073
  %3091 = vmatprep.subr.mxu0 0.0
  %3092 = vmatpush1.msra.mxu0 %v3078
  %3093 = vmatprep.subr.mxu0 0.0
  %3094 = vmatpush1.msra.mxu0 0.0
  %3095 = vmatprep.subr.mxu0 0.0
  %3096 = vmatpush1.msra.mxu0 0.0
  %3097 = vmatprep.subr.mxu0 0.0
  %3098 = vmatpush1.msra.mxu0 0.0
  %3099 = vmatprep.subr.mxu0 0.0
  %3100 = vmatpush1.msra.mxu0 0.0
  %3101 = vmatprep.subr.mxu0 0.0
  %3102 = vmatpush1.msra.mxu0 0.0
  %3103 = vmatprep.subr.mxu0 0.0
  %3104 = vmatpush1.msra.mxu0 0.0
  %3105 = vmatprep.subr.mxu0 0.0
  %3106 = vmatpush1.msra.mxu0 0.0
  %3107 = vmatprep.subr.mxu0 0.0
  %3108 = vmatpush1.msra.mxu0 0.0
  %3109 = vmatprep.subr.mxu0 0.0
  %3110 = vmatpush1.msra.mxu0 0.0
  %3111 = vmatprep.subr.mxu0 0.0
  %3112 = vmatpush1.msra.mxu0 0.0
  %3113 = vmatprep.subr.mxu0 0.0
  %3114 = vmatpush1.msra.mxu0 0.0
  %3115 = vmatprep.subr.mxu0 0.0
  %3116 = vmatpush1.msra.mxu0 0.0
  %3117 = vmatprep.subr.mxu0 0.0
  %3118 = vmatpush1.msra.mxu0 0.0
  %3119 = vmatprep.subr.mxu0 0.0
  %3120 = vmatpush1.msra.mxu0 0.0
  %3121 = vmatprep.subr.mxu0 0.0
  %3122 = vmatpush1.msra.mxu0 0.0
  %3123 = vmatprep.subr.mxu0 0.0
  %3124 = vmatpush1.msra.mxu0 0.0
  %3125 = vmatprep.subr.mxu0 0.0
  %3126 = vmatpush1.msra.mxu0 0.0
  %3127 = vmatprep.subr.mxu0 0.0
  %3128 = vmatpush1.msra.mxu0 0.0
  %3129 = vmatprep.subr.mxu0 0.0
  %3130 = vmatpush1.msra.mxu0 0.0
  %3131 = vmatprep.subr.mxu0 0.0
  %3132 = vmatpush1.msra.mxu0 0.0
  %3133 = vmatprep.subr.mxu0 0.0
  %3134 = vmatpush1.msra.mxu0 0.0
  %3135 = vmatprep.subr.mxu0 0.0
  %3136 = vmatpush1.msra.mxu0 0.0
  %3137 = vmatprep.subr.mxu0 0.0
  %3138 = vmatpush1.msra.mxu0 0.0
  %3139 = vmatprep.subr.mxu0 0.0
  %3140 = vmatpush1.msra.mxu0 0.0
  %3141 = vmatprep.subr.mxu0 0.0
  %3142 = vmatpush1.msra.mxu0 0.0
  %3143 = vmatprep.subr.mxu0 0.0
  %3144 = vmatpush1.msra.mxu0 0.0
  %3145 = vmatprep.subr.mxu0 0.0
  %3146 = vmatpush1.msra.mxu0 0.0
  %3147 = vmatprep.subr.mxu0 0.0
  %3148 = vmatpush1.msra.mxu0 0.0
  %3149 = vmatprep.subr.mxu0 0.0
  %3150 = vmatpush1.msra.mxu0 0.0
  %3151 = vmatprep.subr.mxu0 0.0
  %3152 = vmatpush1.msra.mxu0 0.0
  %3153 = vmatprep.mubr.f32.mxu0 0.0
  %3154 = vmatmul.mubr.f32.gmra.mrb[0].mxu0 %v3084
  %v3155 = vpop.f32.mrb[0].mxu0
  %v3156 = vadd.f32 0.0, %v3155
  %v3157 = vpop.f32.mrb[0].mxu0
  %3158 = vmatprep.mubr.f32.mxu0 0.0
  %3159 = vmatmul.mubr.f32.gmra.mrb[0].mxu0 %v3087
  %v3160 = vpop.f32.mrb[0].mxu0
  %v3161 = vadd.f32 0.0, %v3160
  %v3162 = vpop.f32.mrb[0].mxu0
  %3163 = vdwg.mxu0
  %v3164 = vld [vmem:[%s3] sm:$0xff]
  %3166 = vrot.lane.b32.xlu0 %v3164, 8
  %v3167 = vpop.permute.xlu0 %3166
  %vm3169 = vcmask 64512
  %v3170 = vsel %vm3169, %v3156, %v3167
  %v3171 = vld [vmem:[%s16] sm:$0xff]
  %v3172 = vld [vmem:[%s16 + $0x8] sm:$0xff]
  %v3173 = vld [vmem:[%s17] sm:$0x1]
  %v3175 = vlaneseq
  %v3176 = vshrl.u32 %v3175, 7
  %v3177 = vsub.s32 0, %v3176
  %v3178 = vrot.slane %v3173, %v3177
  %v3181 = vsel %vm361, %v3170, 0
  %3183 = vmatprep.subr.mxu0 0.0
  %3184 = vmatpush1.msra.mxu0 %v3171
  %3185 = vmatprep.subr.mxu0 0.0
  %3186 = vmatpush1.msra.mxu0 %v3172
  %3187 = vmatprep.subr.mxu0 0.0
  %3188 = vmatpush1.msra.mxu0 0.0
  %3189 = vmatprep.subr.mxu0 0.0
  %3190 = vmatpush1.msra.mxu0 0.0
  %3191 = vmatprep.subr.mxu0 0.0
  %3192 = vmatpush1.msra.mxu0 0.0
  %3193 = vmatprep.subr.mxu0 0.0
  %3194 = vmatpush1.msra.mxu0 0.0
  %3195 = vmatprep.subr.mxu0 0.0
  %3196 = vmatpush1.msra.mxu0 0.0
  %3197 = vmatprep.subr.mxu0 0.0
  %3198 = vmatpush1.msra.mxu0 0.0
  %3199 = vmatprep.subr.mxu0 0.0
  %3200 = vmatpush1.msra.mxu0 0.0
  %3201 = vmatprep.subr.mxu0 0.0
  %3202 = vmatpush1.msra.mxu0 0.0
  %3203 = vmatprep.subr.mxu0 0.0
  %3204 = vmatpush1.msra.mxu0 0.0
  %3205 = vmatprep.subr.mxu0 0.0
  %3206 = vmatpush1.msra.mxu0 0.0
  %3207 = vmatprep.subr.mxu0 0.0
  %3208 = vmatpush1.msra.mxu0 0.0
  %3209 = vmatprep.subr.mxu0 0.0
  %3210 = vmatpush1.msra.mxu0 0.0
  %3211 = vmatprep.subr.mxu0 0.0
  %3212 = vmatpush1.msra.mxu0 0.0
  %3213 = vmatprep.subr.mxu0 0.0
  %3214 = vmatpush1.msra.mxu0 0.0
  %3215 = vmatprep.subr.mxu0 0.0
  %3216 = vmatpush1.msra.mxu0 0.0
  %3217 = vmatprep.subr.mxu0 0.0
  %3218 = vmatpush1.msra.mxu0 0.0
  %3219 = vmatprep.subr.mxu0 0.0
  %3220 = vmatpush1.msra.mxu0 0.0
  %3221 = vmatprep.subr.mxu0 0.0
  %3222 = vmatpush1.msra.mxu0 0.0
  %3223 = vmatprep.subr.mxu0 0.0
  %3224 = vmatpush1.msra.mxu0 0.0
  %3225 = vmatprep.subr.mxu0 0.0
  %3226 = vmatpush1.msra.mxu0 0.0
  %3227 = vmatprep.subr.mxu0 0.0
  %3228 = vmatpush1.msra.mxu0 0.0
  %3229 = vmatprep.subr.mxu0 0.0
  %3230 = vmatpush1.msra.mxu0 0.0
  %3231 = vmatprep.subr.mxu0 0.0
  %3232 = vmatpush1.msra.mxu0 0.0
  %3233 = vmatprep.subr.mxu0 0.0
  %3234 = vmatpush1.msra.mxu0 0.0
  %3235 = vmatprep.subr.mxu0 0.0
  %3236 = vmatpush1.msra.mxu0 0.0
  %3237 = vmatprep.subr.mxu0 0.0
  %3238 = vmatpush1.msra.mxu0 0.0
  %3239 = vmatprep.subr.mxu0 0.0
  %3240 = vmatpush1.msra.mxu0 0.0
  %3241 = vmatprep.subr.mxu0 0.0
  %3242 = vmatpush1.msra.mxu0 0.0
  %3243 = vmatprep.subr.mxu0 0.0
  %3244 = vmatpush1.msra.mxu0 0.0
  %3245 = vmatprep.subr.mxu0 0.0
  %3246 = vmatpush1.msra.mxu0 0.0
  %3247 = vmatprep.mubr.f32.mxu0 0.0
  %3248 = vmatmul.mubr.f32.gmra.mrb[0].mxu0 %v3181
  %v3249 = vpop.f32.mrb[0].mxu0
  %v3250 = vadd.f32 %v3178, %v3249
  %v3251 = vpop.f32.mrb[0].mxu0
  %3252 = vdwg.mxu0
  %v3253 = vmul.f32 %v3250, %v3161
  %v3254 = vsel %vm3169, %v3253, 0.0
  %3255 = vadd.xlane.f32.xlu0 %v3254
  %v3256 = vpop.xlane.xlu0 %3255
  %v3257 = vmul.f32 %v3256, 0.5
  %v3258 = vtanh.pop %v3257
  %v3259 = vadd.f32 %v3258, 1.0
  %v3260 = vmul.f32 %v3259, 0.5
  %vm3261 = vcmask 7168
  %3262 = vst.msk [vmem:[%s18] sm:$0xff] %vm3261, %v3260
  // Predicated region
  $region74: #{model_forward.1} parent=0 // pred_check
    _
  $region75: #{model_forward.1} parent=0 // pred_check_branch
    %3264 = sbr.rel (0) target = $region77
  $region76: #{model_forward.1} parent=0 // pred_region
    _
  $region77: #{model_forward.1} parent=0 // pred_fallthru
    _
  // Predicated region
  $region78: #{model_forward.1} parent=0 // pred_check
    _
  $region79: #{model_forward.1} parent=0 // pred_check_branch
    %3266 = sbr.rel (0) target = $region81
  $region80: #{model_forward.1} parent=0 // pred_region
    _
  $region81: #{model_forward.1} parent=0 // pred_fallthru
    _

</llo_original>
